<compile_context>
chip_gen: v7x
topology: tpu7x:2x2x1
jax: 0.10.0
libtpu: 0.0.40
codegen_flags: <defaults>
</compile_context>

<pallas_src>
import functools

import jax
import jax.numpy as jnp
from jax.experimental import pallas as pl
from jax.experimental.pallas import tpu as pltpu


def _aspp_kernel(x_ref, w0_ref, wd_ref, b_ref, m_ref, o_ref, acc_ref, xpad_ref, *,
                 rates, out_ch, hw_pad, width, pad):
    """One (batch, channel-tile) grid step of ASPP.

    x_ref   : (1, c_tile, HWp)            input slab (lane-dense, HWp % 128 == 0)
    w0_ref  : (out_ch, c_tile)            folded 1x1 weights
    wd_ref  : (S-1, 9, out_ch, c_tile)    folded 3x3 weights, tap index = kh*3+kw
    b_ref   : (S*out_ch, 1)  f32          folded biases
    m_ref   : (8*(S-1), 1, HWp) f32       precomputed tap-validity masks (non-center taps)
    o_ref   : (1, S*out_ch, HWp)          output slab
    acc_ref : (S*out_ch, HWp) f32         accumulator across channel tiles
    xpad_ref: (c_tile, HWp + 2*pad)       shift buffer; pad regions zeroed at k==0
    """
    k = pl.program_id(1)
    last_k = k == pl.num_programs(1) - 1
    c_tile = x_ref.shape[1]

    @pl.when(k == 0)
    def _init():
        # Bias folded into the accumulator init (no epilogue add), and shift-buffer pads
        # zeroed so post-matmul masking never sees stale-VMEM NaN/Inf garbage.
        acc_ref[...] = jnp.broadcast_to(b_ref[...], acc_ref.shape)
        zeros = jnp.zeros((c_tile, pad), xpad_ref.dtype)
        xpad_ref[:, :pad] = zeros
        xpad_ref[:, pad + hw_pad:] = zeros

    x = x_ref[0]                            # (c_tile, HWp), compute dtype
    xpad_ref[:, pad:pad + hw_pad] = x       # aligned vst: pad and HWp are 128-multiples

    # Stage 0: 1x1 conv == channel matmul (f32 accumulate on the MXU).
    acc_ref[0:out_ch, :] += jnp.dot(w0_ref[...], x, preferred_element_type=jnp.float32)

    @pl.when(last_k)
    def _emit_stage0():
        o_ref[0, 0:out_ch, :] = jnp.maximum(acc_ref[0:out_ch, :], 0.0).astype(o_ref.dtype)

    m_idx = 0
    for s_idx, rate in enumerate(rates):
        # Center tap: no shift, no mask.
        part = jnp.dot(wd_ref[s_idx, 4, :, :], x, preferred_element_type=jnp.float32)
        for kh in range(3):
            for kw in range(3):
                if kh == 1 and kw == 1:
                    continue
                shift = (kh - 1) * rate * width + (kw - 1) * rate    # static python int
                xt = xpad_ref[:, pad + shift: pad + shift + hw_pad]
                tap = jnp.dot(wd_ref[s_idx, kh * 3 + kw, :, :], xt,
                              preferred_element_type=jnp.float32)
                # Lane masks commute through the channel contraction -> mask the
                # (out_ch, HWp) tap (fewer elems than (c_tile, HWp) in the production
                # regime) with one precomputed 0/1 multiply instead of
                # 4 compares + 3 ands + select per tap.
                part = part + tap * m_ref[m_idx]
                m_idx += 1
        off = (s_idx + 1) * out_ch
        acc_ref[off:off + out_ch, :] += part

        @pl.when(last_k)
        def _emit_stage(off=off):
            o_ref[0, off:off + out_ch, :] = jnp.maximum(
                acc_ref[off:off + out_ch, :], 0.0).astype(o_ref.dtype)


def _fold_bn(w, gamma, beta, mean, var, eps):
    """Fold inference-mode BatchNorm2d into the (bias-free) conv weights."""
    scale = gamma / jnp.sqrt(var + eps)                       # (out_ch,)
    return w * scale[:, None, None, None], beta - mean * scale


def _ceil_to(v, m):
    return -(-v // m) * m


def _pick_c_tile(c_in):
    # Full channels when small; otherwise a {512, 256, 128} divisor.  384 is skipped: a
    # ragged contraction wastes half of every second pass on the 256-wide v6e/v7x MXU.
    if c_in <= 512:
        return c_in
    for t in (512, 256, 128):
        if c_in % t == 0:
            return t
    return c_in


@functools.partial(jax.jit,
                   static_argnames=("rates", "bn_eps", "c_tile", "compute_dtype"))
def aspp_forward(x, stage_params, rates, bn_eps=1e-5, c_tile=None, compute_dtype=None):
    """x: (N, C_in, H, W). stage_params: list of (conv_w, gamma, beta, mean, var);
    stage 0 conv_w is (out_ch, C_in, 1, 1), stages 1.. are (out_ch, C_in, 3, 3)."""
    rates = tuple(rates)
    assert len(rates) >= 1 and len(stage_params) == len(rates) + 1
    n, c_in, height, width = x.shape
    hw = height * width
    hw_pad = _ceil_to(hw, 128)
    out_ch = stage_params[0][0].shape[0]
    n_stages = len(stage_params)
    n_taps = 8 * len(rates)
    compute_dtype = jnp.dtype(x.dtype if compute_dtype is None else compute_dtype)
    out_dtype = x.dtype

    # Fold eval-mode BN into weights/biases (f32 math); weights cast to compute dtype,
    # biases stay f32 (they seed the f32 accumulator).
    w0f, b0 = _fold_bn(*stage_params[0], eps=bn_eps)
    w0_2d = w0f.reshape(out_ch, c_in).astype(compute_dtype)
    wd_list, b_list = [], [b0]
    for (w, g, b, m, v) in stage_params[1:]:
        wf, bf = _fold_bn(w, g, b, m, v, eps=bn_eps)          # (out_ch, c_in, 3, 3)
        wd_list.append(jnp.transpose(wf, (2, 3, 0, 1)).reshape(9, out_ch, c_in))
        b_list.append(bf)
    wd_all = jnp.stack(wd_list, axis=0).astype(compute_dtype)  # (S-1, 9, out_ch, c_in)
    b_all = jnp.concatenate(b_list, 0).reshape(n_stages * out_ch, 1).astype(jnp.float32)

    # Precomputed tap-validity masks (hoists iota / integer division / compare chains out
    # of the kernel; constant-folded by XLA since they depend only on static shapes).
    pos = jnp.arange(hw_pad, dtype=jnp.int32)
    row, col = pos // width, pos % width
    masks = []
    for rate in rates:
        for kh in range(3):
            for kw in range(3):
                if kh == 1 and kw == 1:
                    continue
                dy, dx = (kh - 1) * rate, (kw - 1) * rate
                masks.append((row + dy >= 0) & (row + dy < height) &
                             (col + dx >= 0) & (col + dx < width) & (pos < hw))
    m_all = jnp.stack(masks, 0).astype(jnp.float32).reshape(n_taps, 1, hw_pad)

    # Lane-dense input slab: collapse spatial dims, pad HW to a multiple of 128.
    x2d = x.reshape(n, c_in, hw).astype(compute_dtype)
    if hw_pad != hw:
        x2d = jnp.pad(x2d, ((0, 0), (0, 0), (0, hw_pad - hw)))

    if c_tile is None:
        c_tile = _pick_c_tile(c_in)
    assert c_in % c_tile == 0
    k_tiles = c_in // c_tile
    # NOTE: the weight/bias/mask index_maps are constant when k_tiles == 1, so those
    # blocks are DMA'd once and stay resident for the whole grid (no per-batch
    # re-streaming).  TODO(synk): for k_tiles > 1, block several batch images per grid
    # step to amortize the per-batch weight re-streaming.

    max_shift = max(r * (width + 1) for r in rates)   # max |dy*W + dx| over all taps
    pad = _ceil_to(max_shift, 128)                    # 128-aligned staging offset

    # Derive the VMEM budget from the actual block/scratch footprint (double-buffered
    # inputs/outputs + persistent scratch), capped by the device's VMEM capacity.
    comp_sz = compute_dtype.itemsize
    out_sz = jnp.dtype(out_dtype).itemsize
    vmem_need = (
        2 * _ceil_to(c_tile, 8) * hw_pad * comp_sz                                   # x
        + 2 * _ceil_to(out_ch, 8) * _ceil_to(c_tile, 128) * comp_sz                  # w0
        + 2 * (n_stages - 1) * 9 * _ceil_to(out_ch, 8) * _ceil_to(c_tile, 128) * comp_sz
        + 2 * _ceil_to(n_stages * out_ch, 8) * 128 * 4                               # bias
        + 2 * n_taps * 8 * hw_pad * 4                                                # masks
        + 2 * _ceil_to(n_stages * out_ch, 8) * hw_pad * out_sz                       # out
        + _ceil_to(n_stages * out_ch, 8) * hw_pad * 4                                # acc
        + _ceil_to(c_tile, 8) * (hw_pad + 2 * pad) * comp_sz                         # xpad
    )
    try:
        vmem_cap = int(getattr(pltpu.get_tpu_info(), "vmem_capacity_bytes", 0)) or (64 << 20)
    except Exception:
        vmem_cap = 64 << 20
    vmem_limit = int(min(max(vmem_need * 5 // 4 + (2 << 20), 16 << 20),
                         vmem_cap - (4 << 20)))
    if vmem_need > vmem_limit:
        raise ValueError(
            f"ASPP blocks need ~{vmem_need >> 20} MiB VMEM (> {vmem_limit >> 20} MiB). "
            "TODO(synk): enable spatial (HW) / stage tiling for production shapes.")

    kernel = functools.partial(_aspp_kernel, rates=rates, out_ch=out_ch,
                               hw_pad=hw_pad, width=width, pad=pad)

    out2d = pl.pallas_call(
        kernel,
        out_shape=jax.ShapeDtypeStruct((n, n_stages * out_ch, hw_pad), out_dtype),
        grid_spec=pltpu.PrefetchScalarGridSpec(
            num_scalar_prefetch=0,
            grid=(n, k_tiles),
            in_specs=[
                pl.BlockSpec((1, c_tile, hw_pad), lambda i, k: (i, k, 0)),
                pl.BlockSpec((out_ch, c_tile), lambda i, k: (0, k)),
                pl.BlockSpec((n_stages - 1, 9, out_ch, c_tile),
                             lambda i, k: (0, 0, 0, k)),
                pl.BlockSpec((n_stages * out_ch, 1), lambda i, k: (0, 0)),
                pl.BlockSpec((n_taps, 1, hw_pad), lambda i, k: (0, 0, 0)),
            ],
            out_specs=pl.BlockSpec((1, n_stages * out_ch, hw_pad),
                                   lambda i, k: (i, 0, 0)),
            scratch_shapes=[
                pltpu.VMEM((n_stages * out_ch, hw_pad), jnp.float32),   # accumulator
                pltpu.VMEM((c_tile, hw_pad + 2 * pad), compute_dtype),  # shift buffer
            ],
        ),
        compiler_params=pltpu.CompilerParams(
            # Batch axis is megacore-"parallel".  TODO(synk): for N == 1 on v7x (2 TCs),
            # make a spatial-tile grid axis the parallel dimension instead.
            dimension_semantics=("parallel", "arbitrary"),
            vmem_limit_bytes=vmem_limit,
        ),
    )(x2d, w0_2d, wd_all, b_all, m_all)

    if hw_pad != hw:
        out2d = out2d[:, :, :hw]
    return out2d.reshape(n, n_stages * out_ch, height, width)


if __name__ == "__main__":
    N, C_IN, OUT_CH, H, W = 2, 4, 8, 16, 16
    RATES = (1, 2, 3)
    EPS = 1e-5

    key = jax.random.PRNGKey(0)
    kx, key = jax.random.split(key)
    x = jax.random.normal(kx, (N, C_IN, H, W), dtype=jnp.float32)

    stage_params = []
    for i in range(len(RATES) + 1):
        ks = jax.random.split(jax.random.fold_in(key, i), 5)
        ksize = 1 if i == 0 else 3
        w = jax.random.normal(ks[0], (OUT_CH, C_IN, ksize, ksize), jnp.float32) * 0.1
        gamma = jax.random.uniform(ks[1], (OUT_CH,), jnp.float32, 0.5, 1.5)
        beta = jax.random.normal(ks[2], (OUT_CH,), jnp.float32) * 0.1
        mean = jax.random.normal(ks[3], (OUT_CH,), jnp.float32) * 0.1
        var = jax.random.uniform(ks[4], (OUT_CH,), jnp.float32, 0.5, 1.5)
        stage_params.append((w, gamma, beta, mean, var))

    out = aspp_forward(x, stage_params, rates=RATES, bn_eps=EPS)
    out = jax.block_until_ready(out)

    # Pure-JAX reference: conv -> BN(eval) -> ReLU per stage, concat on channels.
    refs = []
    for i, (w, g, b, m, v) in enumerate(stage_params):
        if i == 0:
            p_, d_ = 0, 1
        else:
            p_ = d_ = RATES[i - 1]
        y = jax.lax.conv_general_dilated(
            x, w, (1, 1), [(p_, p_), (p_, p_)],
            rhs_dilation=(d_, d_),
            dimension_numbers=("NCHW", "OIHW", "NCHW"),
            precision=jax.lax.Precision.HIGHEST)
        y = ((y - m[None, :, None, None]) / jnp.sqrt(v + EPS)[None, :, None, None]
             * g[None, :, None, None] + b[None, :, None, None])
        refs.append(jnp.maximum(y, 0.0))
    ref = jnp.concatenate(refs, axis=1)

    assert out.shape == (N, (len(RATES) + 1) * OUT_CH, H, W)
    err = float(jnp.max(jnp.abs(out - ref)))
    assert jnp.allclose(out, ref, atol=1e-4, rtol=1e-4), err

    # bf16 compute path (perf-review item): loose tolerance vs the f32 reference.
    out_bf16 = aspp_forward(x, stage_params, rates=RATES, bn_eps=EPS,
                            compute_dtype=jnp.bfloat16)
    out_bf16 = jax.block_until_ready(out_bf16).astype(jnp.float32)
    bf16_err = float(jnp.max(jnp.abs(out_bf16 - ref)))
    assert bf16_err <= 0.08 * (1.0 + float(jnp.max(jnp.abs(ref)))), bf16_err

    print("KERNEL_OK")
</pallas_src>

<mosaic_0001>
module attributes {stable_mosaic.version = 11 : i64} {
  func.func @_aspp_kernel(%arg0: i32, %arg1: i32, %arg2: memref<1x4x256xf32, #tpu.memory_space<vmem>>, %arg3: memref<8x4xf32, #tpu.memory_space<vmem>>, %arg4: memref<3x9x8x4xf32, #tpu.memory_space<vmem>>, %arg5: memref<32x1xf32, #tpu.memory_space<vmem>>, %arg6: memref<24x1x256xf32, #tpu.memory_space<vmem>>, %arg7: memref<1x32x256xf32, #tpu.memory_space<vmem>>, %arg8: memref<32x256xf32, #tpu.memory_space<vmem>>, %arg9: memref<4x512xf32, #tpu.memory_space<vmem>>) attributes {dimension_semantics = [#tpu.dimension_semantics<parallel>, #tpu.dimension_semantics<arbitrary>], iteration_bounds = array<i64: 2, 1>, scalar_prefetch = 0 : i64, scratch_operands = 2 : i64, tpu.core_type = #tpu.core_type<tc>, window_params = [{transform_indices = @transform_0, window_bounds = array<i64: 1, 4, 256>}, {transform_indices = @transform_1, window_bounds = array<i64: 8, 4>}, {transform_indices = @transform_2, window_bounds = array<i64: 3, 9, 8, 4>}, {pipeline_mode = #tpu.pipeline_mode<synchronous>, transform_indices = @transform_3, window_bounds = array<i64: 32, 1>}, {pipeline_mode = #tpu.pipeline_mode<synchronous>, transform_indices = @transform_4, window_bounds = array<i64: 24, 1, 256>}, {transform_indices = @transform_5, window_bounds = array<i64: 1, 32, 256>}]} {
    %c0_i32 = arith.constant 0 : i32
    %0 = arith.cmpi eq, %arg1, %c0_i32 : i32
    %c0_i32_0 = arith.constant 0 : i32
    %1 = arith.cmpi eq, %arg1, %c0_i32_0 : i32
    %2 = arith.extui %1 : i1 to i32
    %c0_i32_1 = arith.constant 0 : i32
    %3 = arith.cmpi ne, %2, %c0_i32_1 : i32
    scf.if %3 {
      %c0_234 = arith.constant 0 : index
      %c0_235 = arith.constant 0 : index
      %254 = vector.load %arg5[%c0_234, %c0_235] : memref<32x1xf32, #tpu.memory_space<vmem>>, vector<32x1xf32>
      %255 = vector.shape_cast %254 : vector<32x1xf32> to vector<32x1xf32>
      %256 = vector.broadcast %255 : vector<32x1xf32> to vector<32x256xf32>
      %c0_236 = arith.constant 0 : index
      %c0_237 = arith.constant 0 : index
      %257 = vector.load %arg8[%c0_236, %c0_237] : memref<32x256xf32, #tpu.memory_space<vmem>>, vector<32x256xf32>
      tpu.vector_store %arg8[%c0_236, %c0_237], %256 {strides = array<i32>} : memref<32x256xf32, #tpu.memory_space<vmem>>, vector<32x256xf32>,
      %cst_238 = arith.constant 0.000000e+00 : f32
      %258 = vector.broadcast %cst_238 : f32 to vector<4x128xf32>
      %c0_239 = arith.constant 0 : index
      %c0_240 = arith.constant 0 : index
      %259 = vector.load %arg9[%c0_239, %c0_240] : memref<4x512xf32, #tpu.memory_space<vmem>>, vector<4x128xf32>
      tpu.vector_store %arg9[%c0_239, %c0_240], %258 {strides = array<i32>} : memref<4x512xf32, #tpu.memory_space<vmem>>, vector<4x128xf32>,
      %c0_241 = arith.constant 0 : index
      %c384 = arith.constant 384 : index
      %260 = vector.load %arg9[%c0_241, %c384] : memref<4x512xf32, #tpu.memory_space<vmem>>, vector<4x128xf32>
      tpu.vector_store %arg9[%c0_241, %c384], %258 {strides = array<i32>} : memref<4x512xf32, #tpu.memory_space<vmem>>, vector<4x128xf32>,
    } else {
    }
    %c0 = arith.constant 0 : index
    %c0_2 = arith.constant 0 : index
    %c0_3 = arith.constant 0 : index
    %4 = vector.load %arg2[%c0, %c0_2, %c0_3] : memref<1x4x256xf32, #tpu.memory_space<vmem>>, vector<1x4x256xf32>
    %5 = vector.shape_cast %4 : vector<1x4x256xf32> to vector<4x256xf32>
    %c0_4 = arith.constant 0 : index
    %c128 = arith.constant 128 : index
    %6 = vector.load %arg9[%c0_4, %c128] : memref<4x512xf32, #tpu.memory_space<vmem>>, vector<4x256xf32>
    tpu.vector_store %arg9[%c0_4, %c128], %5 {strides = array<i32>} : memref<4x512xf32, #tpu.memory_space<vmem>>, vector<4x256xf32>,
    %c0_5 = arith.constant 0 : index
    %c0_6 = arith.constant 0 : index
    %7 = vector.load %arg8[%c0_5, %c0_6] : memref<32x256xf32, #tpu.memory_space<vmem>>, vector<8x256xf32>
    %c0_7 = arith.constant 0 : index
    %c0_8 = arith.constant 0 : index
    %8 = vector.load %arg3[%c0_7, %c0_8] : memref<8x4xf32, #tpu.memory_space<vmem>>, vector<8x4xf32>
    %cst = arith.constant dense<0.000000e+00> : vector<8x256xf32>
    %9 = tpu.matmul %8, %5, %cst {dimension_numbers = #tpu.dot_dimension_numbers<[1], [0], [0], [1], [0, 0, 1, 1], [], []>} : vector<8x4xf32>, vector<4x256xf32>, vector<8x256xf32> -> vector<8x256xf32>
    %10 = arith.addf %7, %9 : vector<8x256xf32>
    %c0_9 = arith.constant 0 : index
    %c0_10 = arith.constant 0 : index
    %11 = vector.load %arg8[%c0_9, %c0_10] : memref<32x256xf32, #tpu.memory_space<vmem>>, vector<8x256xf32>
    tpu.vector_store %arg8[%c0_9, %c0_10], %10 {strides = array<i32>} : memref<32x256xf32, #tpu.memory_space<vmem>>, vector<8x256xf32>,
    %12 = arith.extui %0 : i1 to i32
    %c0_i32_11 = arith.constant 0 : i32
    %13 = arith.cmpi ne, %12, %c0_i32_11 : i32
    scf.if %13 {
      %c0_234 = arith.constant 0 : index
      %c0_235 = arith.constant 0 : index
      %254 = vector.load %arg8[%c0_234, %c0_235] : memref<32x256xf32, #tpu.memory_space<vmem>>, vector<8x256xf32>
      %cst_236 = arith.constant 0.000000e+00 : f32
      %255 = vector.broadcast %cst_236 : f32 to vector<8x256xf32>
      %256 = arith.maximumf %254, %255 : vector<8x256xf32>
      %c0_237 = arith.constant 0 : index
      %c0_238 = arith.constant 0 : index
      %c0_239 = arith.constant 0 : index
      %257 = vector.load %arg7[%c0_237, %c0_238, %c0_239] : memref<1x32x256xf32, #tpu.memory_space<vmem>>, vector<1x8x256xf32>
      %258 = vector.shape_cast %257 : vector<1x8x256xf32> to vector<8x256xf32>
      %259 = vector.shape_cast %256 : vector<8x256xf32> to vector<1x8x256xf32>
      tpu.vector_store %arg7[%c0_237, %c0_238, %c0_239], %259 {strides = array<i32>} : memref<1x32x256xf32, #tpu.memory_space<vmem>>, vector<1x8x256xf32>,
    } else {
    }
    %c0_12 = arith.constant 0 : index
    %c4 = arith.constant 4 : index
    %c0_13 = arith.constant 0 : index
    %c0_14 = arith.constant 0 : index
    %14 = vector.load %arg4[%c0_12, %c4, %c0_13, %c0_14] : memref<3x9x8x4xf32, #tpu.memory_space<vmem>>, vector<1x1x8x4xf32>
    %15 = vector.shape_cast %14 : vector<1x1x8x4xf32> to vector<8x4xf32>
    %cst_15 = arith.constant dense<0.000000e+00> : vector<8x256xf32>
    %16 = tpu.matmul %15, %5, %cst_15 {dimension_numbers = #tpu.dot_dimension_numbers<[1], [0], [0], [1], [0, 0, 1, 1], [], []>} : vector<8x4xf32>, vector<4x256xf32>, vector<8x256xf32> -> vector<8x256xf32>
    %c0_16 = arith.constant 0 : index
    %c111 = arith.constant 111 : index
    %17 = vector.load %arg9[%c0_16, %c111] : memref<4x512xf32, #tpu.memory_space<vmem>>, vector<4x256xf32>
    %c0_17 = arith.constant 0 : index
    %c0_18 = arith.constant 0 : index
    %c0_19 = arith.constant 0 : index
    %c0_20 = arith.constant 0 : index
    %18 = vector.load %arg4[%c0_17, %c0_18, %c0_19, %c0_20] : memref<3x9x8x4xf32, #tpu.memory_space<vmem>>, vector<1x1x8x4xf32>
    %19 = vector.shape_cast %18 : vector<1x1x8x4xf32> to vector<8x4xf32>
    %cst_21 = arith.constant dense<0.000000e+00> : vector<8x256xf32>
    %20 = tpu.matmul %19, %17, %cst_21 {dimension_numbers = #tpu.dot_dimension_numbers<[1], [0], [0], [1], [0, 0, 1, 1], [], []>} : vector<8x4xf32>, vector<4x256xf32>, vector<8x256xf32> -> vector<8x256xf32>
    %c0_22 = arith.constant 0 : index
    %c0_23 = arith.constant 0 : index
    %c0_24 = arith.constant 0 : index
    %21 = vector.load %arg6[%c0_22, %c0_23, %c0_24] : memref<24x1x256xf32, #tpu.memory_space<vmem>>, vector<1x1x256xf32>
    %22 = vector.shape_cast %21 : vector<1x1x256xf32> to vector<1x256xf32>
    %23 = vector.broadcast %22 : vector<1x256xf32> to vector<8x256xf32>
    %24 = arith.mulf %20, %23 : vector<8x256xf32>
    %25 = arith.addf %16, %24 : vector<8x256xf32>
    %c0_25 = arith.constant 0 : index
    %c112 = arith.constant 112 : index
    %26 = vector.load %arg9[%c0_25, %c112] : memref<4x512xf32, #tpu.memory_space<vmem>>, vector<4x256xf32>
    %c0_26 = arith.constant 0 : index
    %c1 = arith.constant 1 : index
    %c0_27 = arith.constant 0 : index
    %c0_28 = arith.constant 0 : index
    %27 = vector.load %arg4[%c0_26, %c1, %c0_27, %c0_28] : memref<3x9x8x4xf32, #tpu.memory_space<vmem>>, vector<1x1x8x4xf32>
    %28 = vector.shape_cast %27 : vector<1x1x8x4xf32> to vector<8x4xf32>
    %cst_29 = arith.constant dense<0.000000e+00> : vector<8x256xf32>
    %29 = tpu.matmul %28, %26, %cst_29 {dimension_numbers = #tpu.dot_dimension_numbers<[1], [0], [0], [1], [0, 0, 1, 1], [], []>} : vector<8x4xf32>, vector<4x256xf32>, vector<8x256xf32> -> vector<8x256xf32>
    %c1_30 = arith.constant 1 : index
    %c0_31 = arith.constant 0 : index
    %c0_32 = arith.constant 0 : index
    %30 = vector.load %arg6[%c1_30, %c0_31, %c0_32] : memref<24x1x256xf32, #tpu.memory_space<vmem>>, vector<1x1x256xf32>
    %31 = vector.shape_cast %30 : vector<1x1x256xf32> to vector<1x256xf32>
    %32 = vector.broadcast %31 : vector<1x256xf32> to vector<8x256xf32>
    %33 = arith.mulf %29, %32 : vector<8x256xf32>
    %34 = arith.addf %25, %33 : vector<8x256xf32>
    %c0_33 = arith.constant 0 : index
    %c113 = arith.constant 113 : index
    %35 = vector.load %arg9[%c0_33, %c113] : memref<4x512xf32, #tpu.memory_space<vmem>>, vector<4x256xf32>
    %c0_34 = arith.constant 0 : index
    %c2 = arith.constant 2 : index
    %c0_35 = arith.constant 0 : index
    %c0_36 = arith.constant 0 : index
    %36 = vector.load %arg4[%c0_34, %c2, %c0_35, %c0_36] : memref<3x9x8x4xf32, #tpu.memory_space<vmem>>, vector<1x1x8x4xf32>
    %37 = vector.shape_cast %36 : vector<1x1x8x4xf32> to vector<8x4xf32>
    %cst_37 = arith.constant dense<0.000000e+00> : vector<8x256xf32>
    %38 = tpu.matmul %37, %35, %cst_37 {dimension_numbers = #tpu.dot_dimension_numbers<[1], [0], [0], [1], [0, 0, 1, 1], [], []>} : vector<8x4xf32>, vector<4x256xf32>, vector<8x256xf32> -> vector<8x256xf32>
    %c2_38 = arith.constant 2 : index
    %c0_39 = arith.constant 0 : index
    %c0_40 = arith.constant 0 : index
    %39 = vector.load %arg6[%c2_38, %c0_39, %c0_40] : memref<24x1x256xf32, #tpu.memory_space<vmem>>, vector<1x1x256xf32>
    %40 = vector.shape_cast %39 : vector<1x1x256xf32> to vector<1x256xf32>
    %41 = vector.broadcast %40 : vector<1x256xf32> to vector<8x256xf32>
    %42 = arith.mulf %38, %41 : vector<8x256xf32>
    %43 = arith.addf %34, %42 : vector<8x256xf32>
    %c0_41 = arith.constant 0 : index
    %c127 = arith.constant 127 : index
    %44 = vector.load %arg9[%c0_41, %c127] : memref<4x512xf32, #tpu.memory_space<vmem>>, vector<4x256xf32>
    %c0_42 = arith.constant 0 : index
    %c3 = arith.constant 3 : index
    %c0_43 = arith.constant 0 : index
    %c0_44 = arith.constant 0 : index
    %45 = vector.load %arg4[%c0_42, %c3, %c0_43, %c0_44] : memref<3x9x8x4xf32, #tpu.memory_space<vmem>>, vector<1x1x8x4xf32>
    %46 = vector.shape_cast %45 : vector<1x1x8x4xf32> to vector<8x4xf32>
    %cst_45 = arith.constant dense<0.000000e+00> : vector<8x256xf32>
    %47 = tpu.matmul %46, %44, %cst_45 {dimension_numbers = #tpu.dot_dimension_numbers<[1], [0], [0], [1], [0, 0, 1, 1], [], []>} : vector<8x4xf32>, vector<4x256xf32>, vector<8x256xf32> -> vector<8x256xf32>
    %c3_46 = arith.constant 3 : index
    %c0_47 = arith.constant 0 : index
    %c0_48 = arith.constant 0 : index
    %48 = vector.load %arg6[%c3_46, %c0_47, %c0_48] : memref<24x1x256xf32, #tpu.memory_space<vmem>>, vector<1x1x256xf32>
    %49 = vector.shape_cast %48 : vector<1x1x256xf32> to vector<1x256xf32>
    %50 = vector.broadcast %49 : vector<1x256xf32> to vector<8x256xf32>
    %51 = arith.mulf %47, %50 : vector<8x256xf32>
    %52 = arith.addf %43, %51 : vector<8x256xf32>
    %c0_49 = arith.constant 0 : index
    %c129 = arith.constant 129 : index
    %53 = vector.load %arg9[%c0_49, %c129] : memref<4x512xf32, #tpu.memory_space<vmem>>, vector<4x256xf32>
    %c0_50 = arith.constant 0 : index
    %c5 = arith.constant 5 : index
    %c0_51 = arith.constant 0 : index
    %c0_52 = arith.constant 0 : index
    %54 = vector.load %arg4[%c0_50, %c5, %c0_51, %c0_52] : memref<3x9x8x4xf32, #tpu.memory_space<vmem>>, vector<1x1x8x4xf32>
    %55 = vector.shape_cast %54 : vector<1x1x8x4xf32> to vector<8x4xf32>
    %cst_53 = arith.constant dense<0.000000e+00> : vector<8x256xf32>
    %56 = tpu.matmul %55, %53, %cst_53 {dimension_numbers = #tpu.dot_dimension_numbers<[1], [0], [0], [1], [0, 0, 1, 1], [], []>} : vector<8x4xf32>, vector<4x256xf32>, vector<8x256xf32> -> vector<8x256xf32>
    %c4_54 = arith.constant 4 : index
    %c0_55 = arith.constant 0 : index
    %c0_56 = arith.constant 0 : index
    %57 = vector.load %arg6[%c4_54, %c0_55, %c0_56] : memref<24x1x256xf32, #tpu.memory_space<vmem>>, vector<1x1x256xf32>
    %58 = vector.shape_cast %57 : vector<1x1x256xf32> to vector<1x256xf32>
    %59 = vector.broadcast %58 : vector<1x256xf32> to vector<8x256xf32>
    %60 = arith.mulf %56, %59 : vector<8x256xf32>
    %61 = arith.addf %52, %60 : vector<8x256xf32>
    %c0_57 = arith.constant 0 : index
    %c143 = arith.constant 143 : index
    %62 = vector.load %arg9[%c0_57, %c143] : memref<4x512xf32, #tpu.memory_space<vmem>>, vector<4x256xf32>
    %c0_58 = arith.constant 0 : index
    %c6 = arith.constant 6 : index
    %c0_59 = arith.constant 0 : index
    %c0_60 = arith.constant 0 : index
    %63 = vector.load %arg4[%c0_58, %c6, %c0_59, %c0_60] : memref<3x9x8x4xf32, #tpu.memory_space<vmem>>, vector<1x1x8x4xf32>
    %64 = vector.shape_cast %63 : vector<1x1x8x4xf32> to vector<8x4xf32>
    %cst_61 = arith.constant dense<0.000000e+00> : vector<8x256xf32>
    %65 = tpu.matmul %64, %62, %cst_61 {dimension_numbers = #tpu.dot_dimension_numbers<[1], [0], [0], [1], [0, 0, 1, 1], [], []>} : vector<8x4xf32>, vector<4x256xf32>, vector<8x256xf32> -> vector<8x256xf32>
    %c5_62 = arith.constant 5 : index
    %c0_63 = arith.constant 0 : index
    %c0_64 = arith.constant 0 : index
    %66 = vector.load %arg6[%c5_62, %c0_63, %c0_64] : memref<24x1x256xf32, #tpu.memory_space<vmem>>, vector<1x1x256xf32>
    %67 = vector.shape_cast %66 : vector<1x1x256xf32> to vector<1x256xf32>
    %68 = vector.broadcast %67 : vector<1x256xf32> to vector<8x256xf32>
    %69 = arith.mulf %65, %68 : vector<8x256xf32>
    %70 = arith.addf %61, %69 : vector<8x256xf32>
    %c0_65 = arith.constant 0 : index
    %c144 = arith.constant 144 : index
    %71 = vector.load %arg9[%c0_65, %c144] : memref<4x512xf32, #tpu.memory_space<vmem>>, vector<4x256xf32>
    %c0_66 = arith.constant 0 : index
    %c7 = arith.constant 7 : index
    %c0_67 = arith.constant 0 : index
    %c0_68 = arith.constant 0 : index
    %72 = vector.load %arg4[%c0_66, %c7, %c0_67, %c0_68] : memref<3x9x8x4xf32, #tpu.memory_space<vmem>>, vector<1x1x8x4xf32>
    %73 = vector.shape_cast %72 : vector<1x1x8x4xf32> to vector<8x4xf32>
    %cst_69 = arith.constant dense<0.000000e+00> : vector<8x256xf32>
    %74 = tpu.matmul %73, %71, %cst_69 {dimension_numbers = #tpu.dot_dimension_numbers<[1], [0], [0], [1], [0, 0, 1, 1], [], []>} : vector<8x4xf32>, vector<4x256xf32>, vector<8x256xf32> -> vector<8x256xf32>
    %c6_70 = arith.constant 6 : index
    %c0_71 = arith.constant 0 : index
    %c0_72 = arith.constant 0 : index
    %75 = vector.load %arg6[%c6_70, %c0_71, %c0_72] : memref<24x1x256xf32, #tpu.memory_space<vmem>>, vector<1x1x256xf32>
    %76 = vector.shape_cast %75 : vector<1x1x256xf32> to vector<1x256xf32>
    %77 = vector.broadcast %76 : vector<1x256xf32> to vector<8x256xf32>
    %78 = arith.mulf %74, %77 : vector<8x256xf32>
    %79 = arith.addf %70, %78 : vector<8x256xf32>
    %c0_73 = arith.constant 0 : index
    %c145 = arith.constant 145 : index
    %80 = vector.load %arg9[%c0_73, %c145] : memref<4x512xf32, #tpu.memory_space<vmem>>, vector<4x256xf32>
    %c0_74 = arith.constant 0 : index
    %c8 = arith.constant 8 : index
    %c0_75 = arith.constant 0 : index
    %c0_76 = arith.constant 0 : index
    %81 = vector.load %arg4[%c0_74, %c8, %c0_75, %c0_76] : memref<3x9x8x4xf32, #tpu.memory_space<vmem>>, vector<1x1x8x4xf32>
    %82 = vector.shape_cast %81 : vector<1x1x8x4xf32> to vector<8x4xf32>
    %cst_77 = arith.constant dense<0.000000e+00> : vector<8x256xf32>
    %83 = tpu.matmul %82, %80, %cst_77 {dimension_numbers = #tpu.dot_dimension_numbers<[1], [0], [0], [1], [0, 0, 1, 1], [], []>} : vector<8x4xf32>, vector<4x256xf32>, vector<8x256xf32> -> vector<8x256xf32>
    %c7_78 = arith.constant 7 : index
    %c0_79 = arith.constant 0 : index
    %c0_80 = arith.constant 0 : index
    %84 = vector.load %arg6[%c7_78, %c0_79, %c0_80] : memref<24x1x256xf32, #tpu.memory_space<vmem>>, vector<1x1x256xf32>
    %85 = vector.shape_cast %84 : vector<1x1x256xf32> to vector<1x256xf32>
    %86 = vector.broadcast %85 : vector<1x256xf32> to vector<8x256xf32>
    %87 = arith.mulf %83, %86 : vector<8x256xf32>
    %88 = arith.addf %79, %87 : vector<8x256xf32>
    %c8_81 = arith.constant 8 : index
    %c0_82 = arith.constant 0 : index
    %89 = vector.load %arg8[%c8_81, %c0_82] : memref<32x256xf32, #tpu.memory_space<vmem>>, vector<8x256xf32>
    %90 = arith.addf %89, %88 : vector<8x256xf32>
    %c8_83 = arith.constant 8 : index
    %c0_84 = arith.constant 0 : index
    %91 = vector.load %arg8[%c8_83, %c0_84] : memref<32x256xf32, #tpu.memory_space<vmem>>, vector<8x256xf32>
    tpu.vector_store %arg8[%c8_83, %c0_84], %90 {strides = array<i32>} : memref<32x256xf32, #tpu.memory_space<vmem>>, vector<8x256xf32>,
    %92 = arith.extui %0 : i1 to i32
    %c0_i32_85 = arith.constant 0 : i32
    %93 = arith.cmpi ne, %92, %c0_i32_85 : i32
    scf.if %93 {
      %c8_234 = arith.constant 8 : index
      %c0_235 = arith.constant 0 : index
      %254 = vector.load %arg8[%c8_234, %c0_235] : memref<32x256xf32, #tpu.memory_space<vmem>>, vector<8x256xf32>
      %cst_236 = arith.constant 0.000000e+00 : f32
      %255 = vector.broadcast %cst_236 : f32 to vector<8x256xf32>
      %256 = arith.maximumf %254, %255 : vector<8x256xf32>
      %c0_237 = arith.constant 0 : index
      %c8_238 = arith.constant 8 : index
      %c0_239 = arith.constant 0 : index
      %257 = vector.load %arg7[%c0_237, %c8_238, %c0_239] : memref<1x32x256xf32, #tpu.memory_space<vmem>>, vector<1x8x256xf32>
      %258 = vector.shape_cast %257 : vector<1x8x256xf32> to vector<8x256xf32>
      %259 = vector.shape_cast %256 : vector<8x256xf32> to vector<1x8x256xf32>
      tpu.vector_store %arg7[%c0_237, %c8_238, %c0_239], %259 {strides = array<i32>} : memref<1x32x256xf32, #tpu.memory_space<vmem>>, vector<1x8x256xf32>,
    } else {
    }
    %c1_86 = arith.constant 1 : index
    %c4_87 = arith.constant 4 : index
    %c0_88 = arith.constant 0 : index
    %c0_89 = arith.constant 0 : index
    %94 = vector.load %arg4[%c1_86, %c4_87, %c0_88, %c0_89] : memref<3x9x8x4xf32, #tpu.memory_space<vmem>>, vector<1x1x8x4xf32>
    %95 = vector.shape_cast %94 : vector<1x1x8x4xf32> to vector<8x4xf32>
    %cst_90 = arith.constant dense<0.000000e+00> : vector<8x256xf32>
    %96 = tpu.matmul %95, %5, %cst_90 {dimension_numbers = #tpu.dot_dimension_numbers<[1], [0], [0], [1], [0, 0, 1, 1], [], []>} : vector<8x4xf32>, vector<4x256xf32>, vector<8x256xf32> -> vector<8x256xf32>
    %c0_91 = arith.constant 0 : index
    %c94 = arith.constant 94 : index
    %97 = vector.load %arg9[%c0_91, %c94] : memref<4x512xf32, #tpu.memory_space<vmem>>, vector<4x256xf32>
    %c1_92 = arith.constant 1 : index
    %c0_93 = arith.constant 0 : index
    %c0_94 = arith.constant 0 : index
    %c0_95 = arith.constant 0 : index
    %98 = vector.load %arg4[%c1_92, %c0_93, %c0_94, %c0_95] : memref<3x9x8x4xf32, #tpu.memory_space<vmem>>, vector<1x1x8x4xf32>
    %99 = vector.shape_cast %98 : vector<1x1x8x4xf32> to vector<8x4xf32>
    %cst_96 = arith.constant dense<0.000000e+00> : vector<8x256xf32>
    %100 = tpu.matmul %99, %97, %cst_96 {dimension_numbers = #tpu.dot_dimension_numbers<[1], [0], [0], [1], [0, 0, 1, 1], [], []>} : vector<8x4xf32>, vector<4x256xf32>, vector<8x256xf32> -> vector<8x256xf32>
    %c8_97 = arith.constant 8 : index
    %c0_98 = arith.constant 0 : index
    %c0_99 = arith.constant 0 : index
    %101 = vector.load %arg6[%c8_97, %c0_98, %c0_99] : memref<24x1x256xf32, #tpu.memory_space<vmem>>, vector<1x1x256xf32>
    %102 = vector.shape_cast %101 : vector<1x1x256xf32> to vector<1x256xf32>
    %103 = vector.broadcast %102 : vector<1x256xf32> to vector<8x256xf32>
    %104 = arith.mulf %100, %103 : vector<8x256xf32>
    %105 = arith.addf %96, %104 : vector<8x256xf32>
    %c0_100 = arith.constant 0 : index
    %c96 = arith.constant 96 : index
    %106 = vector.load %arg9[%c0_100, %c96] : memref<4x512xf32, #tpu.memory_space<vmem>>, vector<4x256xf32>
    %c1_101 = arith.constant 1 : index
    %c1_102 = arith.constant 1 : index
    %c0_103 = arith.constant 0 : index
    %c0_104 = arith.constant 0 : index
    %107 = vector.load %arg4[%c1_101, %c1_102, %c0_103, %c0_104] : memref<3x9x8x4xf32, #tpu.memory_space<vmem>>, vector<1x1x8x4xf32>
    %108 = vector.shape_cast %107 : vector<1x1x8x4xf32> to vector<8x4xf32>
    %cst_105 = arith.constant dense<0.000000e+00> : vector<8x256xf32>
    %109 = tpu.matmul %108, %106, %cst_105 {dimension_numbers = #tpu.dot_dimension_numbers<[1], [0], [0], [1], [0, 0, 1, 1], [], []>} : vector<8x4xf32>, vector<4x256xf32>, vector<8x256xf32> -> vector<8x256xf32>
    %c9 = arith.constant 9 : index
    %c0_106 = arith.constant 0 : index
    %c0_107 = arith.constant 0 : index
    %110 = vector.load %arg6[%c9, %c0_106, %c0_107] : memref<24x1x256xf32, #tpu.memory_space<vmem>>, vector<1x1x256xf32>
    %111 = vector.shape_cast %110 : vector<1x1x256xf32> to vector<1x256xf32>
    %112 = vector.broadcast %111 : vector<1x256xf32> to vector<8x256xf32>
    %113 = arith.mulf %109, %112 : vector<8x256xf32>
    %114 = arith.addf %105, %113 : vector<8x256xf32>
    %c0_108 = arith.constant 0 : index
    %c98 = arith.constant 98 : index
    %115 = vector.load %arg9[%c0_108, %c98] : memref<4x512xf32, #tpu.memory_space<vmem>>, vector<4x256xf32>
    %c1_109 = arith.constant 1 : index
    %c2_110 = arith.constant 2 : index
    %c0_111 = arith.constant 0 : index
    %c0_112 = arith.constant 0 : index
    %116 = vector.load %arg4[%c1_109, %c2_110, %c0_111, %c0_112] : memref<3x9x8x4xf32, #tpu.memory_space<vmem>>, vector<1x1x8x4xf32>
    %117 = vector.shape_cast %116 : vector<1x1x8x4xf32> to vector<8x4xf32>
    %cst_113 = arith.constant dense<0.000000e+00> : vector<8x256xf32>
    %118 = tpu.matmul %117, %115, %cst_113 {dimension_numbers = #tpu.dot_dimension_numbers<[1], [0], [0], [1], [0, 0, 1, 1], [], []>} : vector<8x4xf32>, vector<4x256xf32>, vector<8x256xf32> -> vector<8x256xf32>
    %c10 = arith.constant 10 : index
    %c0_114 = arith.constant 0 : index
    %c0_115 = arith.constant 0 : index
    %119 = vector.load %arg6[%c10, %c0_114, %c0_115] : memref<24x1x256xf32, #tpu.memory_space<vmem>>, vector<1x1x256xf32>
    %120 = vector.shape_cast %119 : vector<1x1x256xf32> to vector<1x256xf32>
    %121 = vector.broadcast %120 : vector<1x256xf32> to vector<8x256xf32>
    %122 = arith.mulf %118, %121 : vector<8x256xf32>
    %123 = arith.addf %114, %122 : vector<8x256xf32>
    %c0_116 = arith.constant 0 : index
    %c126 = arith.constant 126 : index
    %124 = vector.load %arg9[%c0_116, %c126] : memref<4x512xf32, #tpu.memory_space<vmem>>, vector<4x256xf32>
    %c1_117 = arith.constant 1 : index
    %c3_118 = arith.constant 3 : index
    %c0_119 = arith.constant 0 : index
    %c0_120 = arith.constant 0 : index
    %125 = vector.load %arg4[%c1_117, %c3_118, %c0_119, %c0_120] : memref<3x9x8x4xf32, #tpu.memory_space<vmem>>, vector<1x1x8x4xf32>
    %126 = vector.shape_cast %125 : vector<1x1x8x4xf32> to vector<8x4xf32>
    %cst_121 = arith.constant dense<0.000000e+00> : vector<8x256xf32>
    %127 = tpu.matmul %126, %124, %cst_121 {dimension_numbers = #tpu.dot_dimension_numbers<[1], [0], [0], [1], [0, 0, 1, 1], [], []>} : vector<8x4xf32>, vector<4x256xf32>, vector<8x256xf32> -> vector<8x256xf32>
    %c11 = arith.constant 11 : index
    %c0_122 = arith.constant 0 : index
    %c0_123 = arith.constant 0 : index
    %128 = vector.load %arg6[%c11, %c0_122, %c0_123] : memref<24x1x256xf32, #tpu.memory_space<vmem>>, vector<1x1x256xf32>
    %129 = vector.shape_cast %128 : vector<1x1x256xf32> to vector<1x256xf32>
    %130 = vector.broadcast %129 : vector<1x256xf32> to vector<8x256xf32>
    %131 = arith.mulf %127, %130 : vector<8x256xf32>
    %132 = arith.addf %123, %131 : vector<8x256xf32>
    %c0_124 = arith.constant 0 : index
    %c130 = arith.constant 130 : index
    %133 = vector.load %arg9[%c0_124, %c130] : memref<4x512xf32, #tpu.memory_space<vmem>>, vector<4x256xf32>
    %c1_125 = arith.constant 1 : index
    %c5_126 = arith.constant 5 : index
    %c0_127 = arith.constant 0 : index
    %c0_128 = arith.constant 0 : index
    %134 = vector.load %arg4[%c1_125, %c5_126, %c0_127, %c0_128] : memref<3x9x8x4xf32, #tpu.memory_space<vmem>>, vector<1x1x8x4xf32>
    %135 = vector.shape_cast %134 : vector<1x1x8x4xf32> to vector<8x4xf32>
    %cst_129 = arith.constant dense<0.000000e+00> : vector<8x256xf32>
    %136 = tpu.matmul %135, %133, %cst_129 {dimension_numbers = #tpu.dot_dimension_numbers<[1], [0], [0], [1], [0, 0, 1, 1], [], []>} : vector<8x4xf32>, vector<4x256xf32>, vector<8x256xf32> -> vector<8x256xf32>
    %c12 = arith.constant 12 : index
    %c0_130 = arith.constant 0 : index
    %c0_131 = arith.constant 0 : index
    %137 = vector.load %arg6[%c12, %c0_130, %c0_131] : memref<24x1x256xf32, #tpu.memory_space<vmem>>, vector<1x1x256xf32>
    %138 = vector.shape_cast %137 : vector<1x1x256xf32> to vector<1x256xf32>
    %139 = vector.broadcast %138 : vector<1x256xf32> to vector<8x256xf32>
    %140 = arith.mulf %136, %139 : vector<8x256xf32>
    %141 = arith.addf %132, %140 : vector<8x256xf32>
    %c0_132 = arith.constant 0 : index
    %c158 = arith.constant 158 : index
    %142 = vector.load %arg9[%c0_132, %c158] : memref<4x512xf32, #tpu.memory_space<vmem>>, vector<4x256xf32>
    %c1_133 = arith.constant 1 : index
    %c6_134 = arith.constant 6 : index
    %c0_135 = arith.constant 0 : index
    %c0_136 = arith.constant 0 : index
    %143 = vector.load %arg4[%c1_133, %c6_134, %c0_135, %c0_136] : memref<3x9x8x4xf32, #tpu.memory_space<vmem>>, vector<1x1x8x4xf32>
    %144 = vector.shape_cast %143 : vector<1x1x8x4xf32> to vector<8x4xf32>
    %cst_137 = arith.constant dense<0.000000e+00> : vector<8x256xf32>
    %145 = tpu.matmul %144, %142, %cst_137 {dimension_numbers = #tpu.dot_dimension_numbers<[1], [0], [0], [1], [0, 0, 1, 1], [], []>} : vector<8x4xf32>, vector<4x256xf32>, vector<8x256xf32> -> vector<8x256xf32>
    %c13 = arith.constant 13 : index
    %c0_138 = arith.constant 0 : index
    %c0_139 = arith.constant 0 : index
    %146 = vector.load %arg6[%c13, %c0_138, %c0_139] : memref<24x1x256xf32, #tpu.memory_space<vmem>>, vector<1x1x256xf32>
    %147 = vector.shape_cast %146 : vector<1x1x256xf32> to vector<1x256xf32>
    %148 = vector.broadcast %147 : vector<1x256xf32> to vector<8x256xf32>
    %149 = arith.mulf %145, %148 : vector<8x256xf32>
    %150 = arith.addf %141, %149 : vector<8x256xf32>
    %c0_140 = arith.constant 0 : index
    %c160 = arith.constant 160 : index
    %151 = vector.load %arg9[%c0_140, %c160] : memref<4x512xf32, #tpu.memory_space<vmem>>, vector<4x256xf32>
    %c1_141 = arith.constant 1 : index
    %c7_142 = arith.constant 7 : index
    %c0_143 = arith.constant 0 : index
    %c0_144 = arith.constant 0 : index
    %152 = vector.load %arg4[%c1_141, %c7_142, %c0_143, %c0_144] : memref<3x9x8x4xf32, #tpu.memory_space<vmem>>, vector<1x1x8x4xf32>
    %153 = vector.shape_cast %152 : vector<1x1x8x4xf32> to vector<8x4xf32>
    %cst_145 = arith.constant dense<0.000000e+00> : vector<8x256xf32>
    %154 = tpu.matmul %153, %151, %cst_145 {dimension_numbers = #tpu.dot_dimension_numbers<[1], [0], [0], [1], [0, 0, 1, 1], [], []>} : vector<8x4xf32>, vector<4x256xf32>, vector<8x256xf32> -> vector<8x256xf32>
    %c14 = arith.constant 14 : index
    %c0_146 = arith.constant 0 : index
    %c0_147 = arith.constant 0 : index
    %155 = vector.load %arg6[%c14, %c0_146, %c0_147] : memref<24x1x256xf32, #tpu.memory_space<vmem>>, vector<1x1x256xf32>
    %156 = vector.shape_cast %155 : vector<1x1x256xf32> to vector<1x256xf32>
    %157 = vector.broadcast %156 : vector<1x256xf32> to vector<8x256xf32>
    %158 = arith.mulf %154, %157 : vector<8x256xf32>
    %159 = arith.addf %150, %158 : vector<8x256xf32>
    %c0_148 = arith.constant 0 : index
    %c162 = arith.constant 162 : index
    %160 = vector.load %arg9[%c0_148, %c162] : memref<4x512xf32, #tpu.memory_space<vmem>>, vector<4x256xf32>
    %c1_149 = arith.constant 1 : index
    %c8_150 = arith.constant 8 : index
    %c0_151 = arith.constant 0 : index
    %c0_152 = arith.constant 0 : index
    %161 = vector.load %arg4[%c1_149, %c8_150, %c0_151, %c0_152] : memref<3x9x8x4xf32, #tpu.memory_space<vmem>>, vector<1x1x8x4xf32>
    %162 = vector.shape_cast %161 : vector<1x1x8x4xf32> to vector<8x4xf32>
    %cst_153 = arith.constant dense<0.000000e+00> : vector<8x256xf32>
    %163 = tpu.matmul %162, %160, %cst_153 {dimension_numbers = #tpu.dot_dimension_numbers<[1], [0], [0], [1], [0, 0, 1, 1], [], []>} : vector<8x4xf32>, vector<4x256xf32>, vector<8x256xf32> -> vector<8x256xf32>
    %c15 = arith.constant 15 : index
    %c0_154 = arith.constant 0 : index
    %c0_155 = arith.constant 0 : index
    %164 = vector.load %arg6[%c15, %c0_154, %c0_155] : memref<24x1x256xf32, #tpu.memory_space<vmem>>, vector<1x1x256xf32>
    %165 = vector.shape_cast %164 : vector<1x1x256xf32> to vector<1x256xf32>
    %166 = vector.broadcast %165 : vector<1x256xf32> to vector<8x256xf32>
    %167 = arith.mulf %163, %166 : vector<8x256xf32>
    %168 = arith.addf %159, %167 : vector<8x256xf32>
    %c16 = arith.constant 16 : index
    %c0_156 = arith.constant 0 : index
    %169 = vector.load %arg8[%c16, %c0_156] : memref<32x256xf32, #tpu.memory_space<vmem>>, vector<8x256xf32>
    %170 = arith.addf %169, %168 : vector<8x256xf32>
    %c16_157 = arith.constant 16 : index
    %c0_158 = arith.constant 0 : index
    %171 = vector.load %arg8[%c16_157, %c0_158] : memref<32x256xf32, #tpu.memory_space<vmem>>, vector<8x256xf32>
    tpu.vector_store %arg8[%c16_157, %c0_158], %170 {strides = array<i32>} : memref<32x256xf32, #tpu.memory_space<vmem>>, vector<8x256xf32>,
    %172 = arith.extui %0 : i1 to i32
    %c0_i32_159 = arith.constant 0 : i32
    %173 = arith.cmpi ne, %172, %c0_i32_159 : i32
    scf.if %173 {
      %c16_234 = arith.constant 16 : index
      %c0_235 = arith.constant 0 : index
      %254 = vector.load %arg8[%c16_234, %c0_235] : memref<32x256xf32, #tpu.memory_space<vmem>>, vector<8x256xf32>
      %cst_236 = arith.constant 0.000000e+00 : f32
      %255 = vector.broadcast %cst_236 : f32 to vector<8x256xf32>
      %256 = arith.maximumf %254, %255 : vector<8x256xf32>
      %c0_237 = arith.constant 0 : index
      %c16_238 = arith.constant 16 : index
      %c0_239 = arith.constant 0 : index
      %257 = vector.load %arg7[%c0_237, %c16_238, %c0_239] : memref<1x32x256xf32, #tpu.memory_space<vmem>>, vector<1x8x256xf32>
      %258 = vector.shape_cast %257 : vector<1x8x256xf32> to vector<8x256xf32>
      %259 = vector.shape_cast %256 : vector<8x256xf32> to vector<1x8x256xf32>
      tpu.vector_store %arg7[%c0_237, %c16_238, %c0_239], %259 {strides = array<i32>} : memref<1x32x256xf32, #tpu.memory_space<vmem>>, vector<1x8x256xf32>,
    } else {
    }
    %c2_160 = arith.constant 2 : index
    %c4_161 = arith.constant 4 : index
    %c0_162 = arith.constant 0 : index
    %c0_163 = arith.constant 0 : index
    %174 = vector.load %arg4[%c2_160, %c4_161, %c0_162, %c0_163] : memref<3x9x8x4xf32, #tpu.memory_space<vmem>>, vector<1x1x8x4xf32>
    %175 = vector.shape_cast %174 : vector<1x1x8x4xf32> to vector<8x4xf32>
    %cst_164 = arith.constant dense<0.000000e+00> : vector<8x256xf32>
    %176 = tpu.matmul %175, %5, %cst_164 {dimension_numbers = #tpu.dot_dimension_numbers<[1], [0], [0], [1], [0, 0, 1, 1], [], []>} : vector<8x4xf32>, vector<4x256xf32>, vector<8x256xf32> -> vector<8x256xf32>
    %c0_165 = arith.constant 0 : index
    %c77 = arith.constant 77 : index
    %177 = vector.load %arg9[%c0_165, %c77] : memref<4x512xf32, #tpu.memory_space<vmem>>, vector<4x256xf32>
    %c2_166 = arith.constant 2 : index
    %c0_167 = arith.constant 0 : index
    %c0_168 = arith.constant 0 : index
    %c0_169 = arith.constant 0 : index
    %178 = vector.load %arg4[%c2_166, %c0_167, %c0_168, %c0_169] : memref<3x9x8x4xf32, #tpu.memory_space<vmem>>, vector<1x1x8x4xf32>
    %179 = vector.shape_cast %178 : vector<1x1x8x4xf32> to vector<8x4xf32>
    %cst_170 = arith.constant dense<0.000000e+00> : vector<8x256xf32>
    %180 = tpu.matmul %179, %177, %cst_170 {dimension_numbers = #tpu.dot_dimension_numbers<[1], [0], [0], [1], [0, 0, 1, 1], [], []>} : vector<8x4xf32>, vector<4x256xf32>, vector<8x256xf32> -> vector<8x256xf32>
    %c16_171 = arith.constant 16 : index
    %c0_172 = arith.constant 0 : index
    %c0_173 = arith.constant 0 : index
    %181 = vector.load %arg6[%c16_171, %c0_172, %c0_173] : memref<24x1x256xf32, #tpu.memory_space<vmem>>, vector<1x1x256xf32>
    %182 = vector.shape_cast %181 : vector<1x1x256xf32> to vector<1x256xf32>
    %183 = vector.broadcast %182 : vector<1x256xf32> to vector<8x256xf32>
    %184 = arith.mulf %180, %183 : vector<8x256xf32>
    %185 = arith.addf %176, %184 : vector<8x256xf32>
    %c0_174 = arith.constant 0 : index
    %c80 = arith.constant 80 : index
    %186 = vector.load %arg9[%c0_174, %c80] : memref<4x512xf32, #tpu.memory_space<vmem>>, vector<4x256xf32>
    %c2_175 = arith.constant 2 : index
    %c1_176 = arith.constant 1 : index
    %c0_177 = arith.constant 0 : index
    %c0_178 = arith.constant 0 : index
    %187 = vector.load %arg4[%c2_175, %c1_176, %c0_177, %c0_178] : memref<3x9x8x4xf32, #tpu.memory_space<vmem>>, vector<1x1x8x4xf32>
    %188 = vector.shape_cast %187 : vector<1x1x8x4xf32> to vector<8x4xf32>
    %cst_179 = arith.constant dense<0.000000e+00> : vector<8x256xf32>
    %189 = tpu.matmul %188, %186, %cst_179 {dimension_numbers = #tpu.dot_dimension_numbers<[1], [0], [0], [1], [0, 0, 1, 1], [], []>} : vector<8x4xf32>, vector<4x256xf32>, vector<8x256xf32> -> vector<8x256xf32>
    %c17 = arith.constant 17 : index
    %c0_180 = arith.constant 0 : index
    %c0_181 = arith.constant 0 : index
    %190 = vector.load %arg6[%c17, %c0_180, %c0_181] : memref<24x1x256xf32, #tpu.memory_space<vmem>>, vector<1x1x256xf32>
    %191 = vector.shape_cast %190 : vector<1x1x256xf32> to vector<1x256xf32>
    %192 = vector.broadcast %191 : vector<1x256xf32> to vector<8x256xf32>
    %193 = arith.mulf %189, %192 : vector<8x256xf32>
    %194 = arith.addf %185, %193 : vector<8x256xf32>
    %c0_182 = arith.constant 0 : index
    %c83 = arith.constant 83 : index
    %195 = vector.load %arg9[%c0_182, %c83] : memref<4x512xf32, #tpu.memory_space<vmem>>, vector<4x256xf32>
    %c2_183 = arith.constant 2 : index
    %c2_184 = arith.constant 2 : index
    %c0_185 = arith.constant 0 : index
    %c0_186 = arith.constant 0 : index
    %196 = vector.load %arg4[%c2_183, %c2_184, %c0_185, %c0_186] : memref<3x9x8x4xf32, #tpu.memory_space<vmem>>, vector<1x1x8x4xf32>
    %197 = vector.shape_cast %196 : vector<1x1x8x4xf32> to vector<8x4xf32>
    %cst_187 = arith.constant dense<0.000000e+00> : vector<8x256xf32>
    %198 = tpu.matmul %197, %195, %cst_187 {dimension_numbers = #tpu.dot_dimension_numbers<[1], [0], [0], [1], [0, 0, 1, 1], [], []>} : vector<8x4xf32>, vector<4x256xf32>, vector<8x256xf32> -> vector<8x256xf32>
    %c18 = arith.constant 18 : index
    %c0_188 = arith.constant 0 : index
    %c0_189 = arith.constant 0 : index
    %199 = vector.load %arg6[%c18, %c0_188, %c0_189] : memref<24x1x256xf32, #tpu.memory_space<vmem>>, vector<1x1x256xf32>
    %200 = vector.shape_cast %199 : vector<1x1x256xf32> to vector<1x256xf32>
    %201 = vector.broadcast %200 : vector<1x256xf32> to vector<8x256xf32>
    %202 = arith.mulf %198, %201 : vector<8x256xf32>
    %203 = arith.addf %194, %202 : vector<8x256xf32>
    %c0_190 = arith.constant 0 : index
    %c125 = arith.constant 125 : index
    %204 = vector.load %arg9[%c0_190, %c125] : memref<4x512xf32, #tpu.memory_space<vmem>>, vector<4x256xf32>
    %c2_191 = arith.constant 2 : index
    %c3_192 = arith.constant 3 : index
    %c0_193 = arith.constant 0 : index
    %c0_194 = arith.constant 0 : index
    %205 = vector.load %arg4[%c2_191, %c3_192, %c0_193, %c0_194] : memref<3x9x8x4xf32, #tpu.memory_space<vmem>>, vector<1x1x8x4xf32>
    %206 = vector.shape_cast %205 : vector<1x1x8x4xf32> to vector<8x4xf32>
    %cst_195 = arith.constant dense<0.000000e+00> : vector<8x256xf32>
    %207 = tpu.matmul %206, %204, %cst_195 {dimension_numbers = #tpu.dot_dimension_numbers<[1], [0], [0], [1], [0, 0, 1, 1], [], []>} : vector<8x4xf32>, vector<4x256xf32>, vector<8x256xf32> -> vector<8x256xf32>
    %c19 = arith.constant 19 : index
    %c0_196 = arith.constant 0 : index
    %c0_197 = arith.constant 0 : index
    %208 = vector.load %arg6[%c19, %c0_196, %c0_197] : memref<24x1x256xf32, #tpu.memory_space<vmem>>, vector<1x1x256xf32>
    %209 = vector.shape_cast %208 : vector<1x1x256xf32> to vector<1x256xf32>
    %210 = vector.broadcast %209 : vector<1x256xf32> to vector<8x256xf32>
    %211 = arith.mulf %207, %210 : vector<8x256xf32>
    %212 = arith.addf %203, %211 : vector<8x256xf32>
    %c0_198 = arith.constant 0 : index
    %c131 = arith.constant 131 : index
    %213 = vector.load %arg9[%c0_198, %c131] : memref<4x512xf32, #tpu.memory_space<vmem>>, vector<4x256xf32>
    %c2_199 = arith.constant 2 : index
    %c5_200 = arith.constant 5 : index
    %c0_201 = arith.constant 0 : index
    %c0_202 = arith.constant 0 : index
    %214 = vector.load %arg4[%c2_199, %c5_200, %c0_201, %c0_202] : memref<3x9x8x4xf32, #tpu.memory_space<vmem>>, vector<1x1x8x4xf32>
    %215 = vector.shape_cast %214 : vector<1x1x8x4xf32> to vector<8x4xf32>
    %cst_203 = arith.constant dense<0.000000e+00> : vector<8x256xf32>
    %216 = tpu.matmul %215, %213, %cst_203 {dimension_numbers = #tpu.dot_dimension_numbers<[1], [0], [0], [1], [0, 0, 1, 1], [], []>} : vector<8x4xf32>, vector<4x256xf32>, vector<8x256xf32> -> vector<8x256xf32>
    %c20 = arith.constant 20 : index
    %c0_204 = arith.constant 0 : index
    %c0_205 = arith.constant 0 : index
    %217 = vector.load %arg6[%c20, %c0_204, %c0_205] : memref<24x1x256xf32, #tpu.memory_space<vmem>>, vector<1x1x256xf32>
    %218 = vector.shape_cast %217 : vector<1x1x256xf32> to vector<1x256xf32>
    %219 = vector.broadcast %218 : vector<1x256xf32> to vector<8x256xf32>
    %220 = arith.mulf %216, %219 : vector<8x256xf32>
    %221 = arith.addf %212, %220 : vector<8x256xf32>
    %c0_206 = arith.constant 0 : index
    %c173 = arith.constant 173 : index
    %222 = vector.load %arg9[%c0_206, %c173] : memref<4x512xf32, #tpu.memory_space<vmem>>, vector<4x256xf32>
    %c2_207 = arith.constant 2 : index
    %c6_208 = arith.constant 6 : index
    %c0_209 = arith.constant 0 : index
    %c0_210 = arith.constant 0 : index
    %223 = vector.load %arg4[%c2_207, %c6_208, %c0_209, %c0_210] : memref<3x9x8x4xf32, #tpu.memory_space<vmem>>, vector<1x1x8x4xf32>
    %224 = vector.shape_cast %223 : vector<1x1x8x4xf32> to vector<8x4xf32>
    %cst_211 = arith.constant dense<0.000000e+00> : vector<8x256xf32>
    %225 = tpu.matmul %224, %222, %cst_211 {dimension_numbers = #tpu.dot_dimension_numbers<[1], [0], [0], [1], [0, 0, 1, 1], [], []>} : vector<8x4xf32>, vector<4x256xf32>, vector<8x256xf32> -> vector<8x256xf32>
    %c21 = arith.constant 21 : index
    %c0_212 = arith.constant 0 : index
    %c0_213 = arith.constant 0 : index
    %226 = vector.load %arg6[%c21, %c0_212, %c0_213] : memref<24x1x256xf32, #tpu.memory_space<vmem>>, vector<1x1x256xf32>
    %227 = vector.shape_cast %226 : vector<1x1x256xf32> to vector<1x256xf32>
    %228 = vector.broadcast %227 : vector<1x256xf32> to vector<8x256xf32>
    %229 = arith.mulf %225, %228 : vector<8x256xf32>
    %230 = arith.addf %221, %229 : vector<8x256xf32>
    %c0_214 = arith.constant 0 : index
    %c176 = arith.constant 176 : index
    %231 = vector.load %arg9[%c0_214, %c176] : memref<4x512xf32, #tpu.memory_space<vmem>>, vector<4x256xf32>
    %c2_215 = arith.constant 2 : index
    %c7_216 = arith.constant 7 : index
    %c0_217 = arith.constant 0 : index
    %c0_218 = arith.constant 0 : index
    %232 = vector.load %arg4[%c2_215, %c7_216, %c0_217, %c0_218] : memref<3x9x8x4xf32, #tpu.memory_space<vmem>>, vector<1x1x8x4xf32>
    %233 = vector.shape_cast %232 : vector<1x1x8x4xf32> to vector<8x4xf32>
    %cst_219 = arith.constant dense<0.000000e+00> : vector<8x256xf32>
    %234 = tpu.matmul %233, %231, %cst_219 {dimension_numbers = #tpu.dot_dimension_numbers<[1], [0], [0], [1], [0, 0, 1, 1], [], []>} : vector<8x4xf32>, vector<4x256xf32>, vector<8x256xf32> -> vector<8x256xf32>
    %c22 = arith.constant 22 : index
    %c0_220 = arith.constant 0 : index
    %c0_221 = arith.constant 0 : index
    %235 = vector.load %arg6[%c22, %c0_220, %c0_221] : memref<24x1x256xf32, #tpu.memory_space<vmem>>, vector<1x1x256xf32>
    %236 = vector.shape_cast %235 : vector<1x1x256xf32> to vector<1x256xf32>
    %237 = vector.broadcast %236 : vector<1x256xf32> to vector<8x256xf32>
    %238 = arith.mulf %234, %237 : vector<8x256xf32>
    %239 = arith.addf %230, %238 : vector<8x256xf32>
    %c0_222 = arith.constant 0 : index
    %c179 = arith.constant 179 : index
    %240 = vector.load %arg9[%c0_222, %c179] : memref<4x512xf32, #tpu.memory_space<vmem>>, vector<4x256xf32>
    %c2_223 = arith.constant 2 : index
    %c8_224 = arith.constant 8 : index
    %c0_225 = arith.constant 0 : index
    %c0_226 = arith.constant 0 : index
    %241 = vector.load %arg4[%c2_223, %c8_224, %c0_225, %c0_226] : memref<3x9x8x4xf32, #tpu.memory_space<vmem>>, vector<1x1x8x4xf32>
    %242 = vector.shape_cast %241 : vector<1x1x8x4xf32> to vector<8x4xf32>
    %cst_227 = arith.constant dense<0.000000e+00> : vector<8x256xf32>
    %243 = tpu.matmul %242, %240, %cst_227 {dimension_numbers = #tpu.dot_dimension_numbers<[1], [0], [0], [1], [0, 0, 1, 1], [], []>} : vector<8x4xf32>, vector<4x256xf32>, vector<8x256xf32> -> vector<8x256xf32>
    %c23 = arith.constant 23 : index
    %c0_228 = arith.constant 0 : index
    %c0_229 = arith.constant 0 : index
    %244 = vector.load %arg6[%c23, %c0_228, %c0_229] : memref<24x1x256xf32, #tpu.memory_space<vmem>>, vector<1x1x256xf32>
    %245 = vector.shape_cast %244 : vector<1x1x256xf32> to vector<1x256xf32>
    %246 = vector.broadcast %245 : vector<1x256xf32> to vector<8x256xf32>
    %247 = arith.mulf %243, %246 : vector<8x256xf32>
    %248 = arith.addf %239, %247 : vector<8x256xf32>
    %c24 = arith.constant 24 : index
    %c0_230 = arith.constant 0 : index
    %249 = vector.load %arg8[%c24, %c0_230] : memref<32x256xf32, #tpu.memory_space<vmem>>, vector<8x256xf32>
    %250 = arith.addf %249, %248 : vector<8x256xf32>
    %c24_231 = arith.constant 24 : index
    %c0_232 = arith.constant 0 : index
    %251 = vector.load %arg8[%c24_231, %c0_232] : memref<32x256xf32, #tpu.memory_space<vmem>>, vector<8x256xf32>
    tpu.vector_store %arg8[%c24_231, %c0_232], %250 {strides = array<i32>} : memref<32x256xf32, #tpu.memory_space<vmem>>, vector<8x256xf32>,
    %252 = arith.extui %0 : i1 to i32
    %c0_i32_233 = arith.constant 0 : i32
    %253 = arith.cmpi ne, %252, %c0_i32_233 : i32
    scf.if %253 {
      %c24_234 = arith.constant 24 : index
      %c0_235 = arith.constant 0 : index
      %254 = vector.load %arg8[%c24_234, %c0_235] : memref<32x256xf32, #tpu.memory_space<vmem>>, vector<8x256xf32>
      %cst_236 = arith.constant 0.000000e+00 : f32
      %255 = vector.broadcast %cst_236 : f32 to vector<8x256xf32>
      %256 = arith.maximumf %254, %255 : vector<8x256xf32>
      %c0_237 = arith.constant 0 : index
      %c24_238 = arith.constant 24 : index
      %c0_239 = arith.constant 0 : index
      %257 = vector.load %arg7[%c0_237, %c24_238, %c0_239] : memref<1x32x256xf32, #tpu.memory_space<vmem>>, vector<1x8x256xf32>
      %258 = vector.shape_cast %257 : vector<1x8x256xf32> to vector<8x256xf32>
      %259 = vector.shape_cast %256 : vector<8x256xf32> to vector<1x8x256xf32>
      tpu.vector_store %arg7[%c0_237, %c24_238, %c0_239], %259 {strides = array<i32>} : memref<1x32x256xf32, #tpu.memory_space<vmem>>, vector<1x8x256xf32>,
    } else {
    }
    return
  }
  func.func @transform_0(%arg0: i32, %arg1: i32) -> (i32, i32, i32) {
    %c0_i32 = arith.constant 0 : i32
    %c0_i32_0 = arith.constant 0 : i32
    return %arg0, %arg1, %c0_i32 : i32, i32, i32
  }
  func.func @transform_1(%arg0: i32, %arg1: i32) -> (i32, i32) {
    %c0_i32 = arith.constant 0 : i32
    %c0_i32_0 = arith.constant 0 : i32
    return %c0_i32, %arg1 : i32, i32
  }
  func.func @transform_2(%arg0: i32, %arg1: i32) -> (i32, i32, i32, i32) {
    %c0_i32 = arith.constant 0 : i32
    %c0_i32_0 = arith.constant 0 : i32
    %c0_i32_1 = arith.constant 0 : i32
    %c0_i32_2 = arith.constant 0 : i32
    return %c0_i32, %c0_i32_0, %c0_i32_1, %arg1 : i32, i32, i32, i32
  }
  func.func @transform_3(%arg0: i32, %arg1: i32) -> (i32, i32) {
    %c0_i32 = arith.constant 0 : i32
    %c0_i32_0 = arith.constant 0 : i32
    %c0_i32_1 = arith.constant 0 : i32
    return %c0_i32, %c0_i32_0 : i32, i32
  }
  func.func @transform_4(%arg0: i32, %arg1: i32) -> (i32, i32, i32) {
    %c0_i32 = arith.constant 0 : i32
    %c0_i32_0 = arith.constant 0 : i32
    %c0_i32_1 = arith.constant 0 : i32
    %c0_i32_2 = arith.constant 0 : i32
    return %c0_i32, %c0_i32_0, %c0_i32_1 : i32, i32, i32
  }
  func.func @transform_5(%arg0: i32, %arg1: i32) -> (i32, i32, i32) {
    %c0_i32 = arith.constant 0 : i32
    %c0_i32_0 = arith.constant 0 : i32
    %c0_i32_1 = arith.constant 0 : i32
    return %arg0, %c0_i32, %c0_i32_0 : i32, i32, i32
  }
}

</mosaic_0001>

<llo_original>
// kernel: aspp_forward.1
$region0: #{aspp_forward.1}
  #allocation0 [shape = 'u32[]', space=smem, size = 0x4, offset = 0x4, fixed_abs, tag = 'smem constant byte address 0x4 - core index']
  #allocation1 [shape = 'u32[144,128]{1,0:T(1,128)}', space=vmem, size = 0x12000, scoped, tag = 'internal scratch']
  #allocation2 [shape = 'f32[32,256]{1,0:T(8,128)}', space=vmem, size = 0x8000, scoped, tag = 'scratch operand']
  #allocation3 [shape = 'f32[4,512]{1,0:T(4,128)}', space=vmem, size = 0x2000, scoped, tag = 'scratch operand']
  %s0 = inlined_call_operand.vmem [shape: f32[2,4,256], index: 0, kind: input, shape index: {}]
  %s1 = inlined_call_operand.vmem [shape: f32[8,4], index: 1, kind: input, shape index: {}]
  %s2 = inlined_call_operand.vmem [shape: f32[3,9,8,4], index: 2, kind: input, shape index: {}]
  %s3 = inlined_call_operand.vmem [shape: f32[32,1], index: 3, kind: input, shape index: {}]
  %s4 = inlined_call_operand.vmem [shape: f32[24,1,256], index: 4, kind: input, shape index: {}]
  %s5 = inlined_call_operand.vmem [shape: f32[2,32,256], index: 5, kind: output, shape index: {}]
  %s6 = sld [smem:[#allocation0]]
  $region73: #{aspp_forward.1} parent=0
    _
  %s8 = ssub.s32 1, %s6
  %s9 = scalar_select 0, %s8, %s6
  loop: start=0, step=1, limit=4
  $region2: #{aspp_forward.1} parent=0 // loop_pre_header
    _
  $region3: #{aspp_forward.1} parent=0 // loop_header
    %s11 = sphi 0, %s15
    %p12 = scmp.ge.s32.totalorder %s11, 4
    %s18 = sphi 0, %s30
    %s19 = sphi 0, %s26
    %s20 = sphi 0, %s18
    %s21 = sphi 0, %s19
    %s22 = sphi 0, %s20
    %s23 = sphi 0, %s21
    %s35 = sphi 0, %s37
    %s38 = sphi 0, %s35
    %s39 = sphi 0, %s38
    %s55 = sphi 0, %s39
    %s61 = sphi 0, %s63
    %s64 = sphi 0, %s61
    %s65 = sphi 0, %s64
    %s81 = sphi 0, %s65
    %s87 = sphi 0, %s89
    %s90 = sphi 0, %s87
    %s91 = sphi 0, %s90
    %s107 = sphi 0, %s91
    %s111 = sphi 0, %s111
    %s113 = sphi 0, %s111
    %s114 = sphi 0, %s113
    %s128 = sphi 0, %s114
    %s132 = sphi 0, %s132
    %s134 = sphi 0, %s132
    %s135 = sphi 0, %s134
    %s149 = sphi 0, %s135
    %s155 = sphi 0, %s157
    %s158 = sphi 0, %s155
    %s159 = sphi 0, %s158
    %s175 = sphi 0, %s159
  $region4: #{aspp_forward.1} parent=0 // loop_header_branch
    %14 = sbr.rel (%p12) target = $region8
  $region5: #{aspp_forward.1} parent=0 // loop_body
    %s16 = ssub.s32 %s11, 1
    %s17 = ssub.s32 %s11, 2
    %s24 = sadd.s32 1, %s19
    %p25 = scmp.ge.s32.totalorder %s24, 1
    %s26 = scalar_select %p25, 0, %s24
    %s27 = sadd.s32 1, %s18
    %s28 = scalar_select %p25, %s27, %s18
    %p29 = scmp.ge.s32.totalorder %s28, 2
    %s30 = scalar_select %p29, 0, %s28
    %s31 = ssub.s32 %s18, %s30
    %s32 = ssub.s32 %s19, %s26
    %s33 = sor.u32 %s31, %s32
    %p34 = scmp.eq.s32.totalorder %s33, 0
    %s36 = sadd.s32 %s35, 1
    %s37 = scalar_select %p34, %s35, %s36
    %p40 = pneg %p34
    %p41 = scmp.eq.s32.totalorder %s11, 1
    %p42 = por %p40, %p41
    %p43 = scmp.ne.s32.totalorder %s35, %s38
    %p44 = scmp.eq.s32.totalorder %s11, 0
    %p45 = por %p43, %p44
    %p46 = scmp.ne.s32.totalorder %s35, %s38
    %p47 = scmp.eq.s32.totalorder %s16, 1
    %p48 = por %p46, %p47
    %p49 = scmp.ne.s32.totalorder %s38, %s39
    %p50 = scmp.eq.s32.totalorder %s16, 0
    %p51 = por %p49, %p50
    %p52 = scmp.ne.s32.totalorder %s38, %s39
    %p53 = scmp.eq.s32.totalorder %s17, 1
    %p54 = por %p52, %p53
    %p56 = scmp.ne.s32.totalorder %s39, %s55
    %p57 = scmp.eq.s32.totalorder %s17, 0
    %p58 = por %p56, %p57
    %s59 = ssub.s32 %s19, %s26
    %p60 = scmp.eq.s32.totalorder %s59, 0
    %s62 = sadd.s32 %s61, 1
    %s63 = scalar_select %p60, %s61, %s62
    %p66 = pneg %p60
    %p67 = scmp.eq.s32.totalorder %s11, 1
    %p68 = por %p66, %p67
    %p69 = scmp.ne.s32.totalorder %s61, %s64
    %p70 = scmp.eq.s32.totalorder %s11, 0
    %p71 = por %p69, %p70
    %p72 = scmp.ne.s32.totalorder %s61, %s64
    %p73 = scmp.eq.s32.totalorder %s16, 1
    %p74 = por %p72, %p73
    %p75 = scmp.ne.s32.totalorder %s64, %s65
    %p76 = scmp.eq.s32.totalorder %s16, 0
    %p77 = por %p75, %p76
    %p78 = scmp.ne.s32.totalorder %s64, %s65
    %p79 = scmp.eq.s32.totalorder %s17, 1
    %p80 = por %p78, %p79
    %p82 = scmp.ne.s32.totalorder %s65, %s81
    %p83 = scmp.eq.s32.totalorder %s17, 0
    %p84 = por %p82, %p83
    %s85 = ssub.s32 %s19, %s26
    %p86 = scmp.eq.s32.totalorder %s85, 0
    %s88 = sadd.s32 %s87, 1
    %s89 = scalar_select %p86, %s87, %s88
    %p92 = pneg %p86
    %p93 = scmp.eq.s32.totalorder %s11, 1
    %p94 = por %p92, %p93
    %p95 = scmp.ne.s32.totalorder %s87, %s90
    %p96 = scmp.eq.s32.totalorder %s11, 0
    %p97 = por %p95, %p96
    %p98 = scmp.ne.s32.totalorder %s87, %s90
    %p99 = scmp.eq.s32.totalorder %s16, 1
    %p100 = por %p98, %p99
    %p101 = scmp.ne.s32.totalorder %s90, %s91
    %p102 = scmp.eq.s32.totalorder %s16, 0
    %p103 = por %p101, %p102
    %p104 = scmp.ne.s32.totalorder %s90, %s91
    %p105 = scmp.eq.s32.totalorder %s17, 1
    %p106 = por %p104, %p105
    %p108 = scmp.ne.s32.totalorder %s91, %s107
    %p109 = scmp.eq.s32.totalorder %s17, 0
    %p110 = por %p108, %p109
    %s112 = sadd.s32 %s111, 1
    %p115 = scmp.eq.s32.totalorder %s11, 1
    %p116 = scmp.ne.s32.totalorder %s111, %s113
    %p117 = scmp.eq.s32.totalorder %s11, 0
    %p118 = por %p116, %p117
    %p119 = scmp.ne.s32.totalorder %s111, %s113
    %p120 = scmp.eq.s32.totalorder %s16, 1
    %p121 = por %p119, %p120
    %p122 = scmp.ne.s32.totalorder %s113, %s114
    %p123 = scmp.eq.s32.totalorder %s16, 0
    %p124 = por %p122, %p123
    %p125 = scmp.ne.s32.totalorder %s113, %s114
    %p126 = scmp.eq.s32.totalorder %s17, 1
    %p127 = por %p125, %p126
    %p129 = scmp.ne.s32.totalorder %s114, %s128
    %p130 = scmp.eq.s32.totalorder %s17, 0
    %p131 = por %p129, %p130
    %s133 = sadd.s32 %s132, 1
    %p136 = scmp.eq.s32.totalorder %s11, 1
    %p137 = scmp.ne.s32.totalorder %s132, %s134
    %p138 = scmp.eq.s32.totalorder %s11, 0
    %p139 = por %p137, %p138
    %p140 = scmp.ne.s32.totalorder %s132, %s134
    %p141 = scmp.eq.s32.totalorder %s16, 1
    %p142 = por %p140, %p141
    %p143 = scmp.ne.s32.totalorder %s134, %s135
    %p144 = scmp.eq.s32.totalorder %s16, 0
    %p145 = por %p143, %p144
    %p146 = scmp.ne.s32.totalorder %s134, %s135
    %p147 = scmp.eq.s32.totalorder %s17, 1
    %p148 = por %p146, %p147
    %p150 = scmp.ne.s32.totalorder %s135, %s149
    %p151 = scmp.eq.s32.totalorder %s17, 0
    %p152 = por %p150, %p151
    %s153 = ssub.s32 %s18, %s30
    %p154 = scmp.eq.s32.totalorder %s153, 0
    %s156 = sadd.s32 %s155, 1
    %s157 = scalar_select %p154, %s155, %s156
    %p160 = pneg %p154
    %p161 = scmp.eq.s32.totalorder %s11, 1
    %p162 = por %p160, %p161
    %p163 = scmp.ne.s32.totalorder %s155, %s158
    %p164 = scmp.eq.s32.totalorder %s11, 0
    %p165 = por %p163, %p164
    %p166 = scmp.ne.s32.totalorder %s155, %s158
    %p167 = scmp.eq.s32.totalorder %s16, 1
    %p168 = por %p166, %p167
    %p169 = scmp.ne.s32.totalorder %s158, %s159
    %p170 = scmp.eq.s32.totalorder %s16, 0
    %p171 = por %p169, %p170
    %p172 = scmp.ne.s32.totalorder %s158, %s159
    %p173 = scmp.eq.s32.totalorder %s17, 1
    %p174 = por %p172, %p173
    %p176 = scmp.ne.s32.totalorder %s159, %s175
    %p177 = scmp.eq.s32.totalorder %s17, 0
    %p178 = por %p176, %p177
    %p179 = scmp.le.s32.totalorder 1, %s11
    %p180 = scmp.lt.s32.totalorder %s11, 3
    %p181 = pnand %p179, %p180
    %p182 = pneg %p181
    // Predicated region
    $region9: #{aspp_forward.1} parent=5 // pred_check
      _
    $region10: #{aspp_forward.1} parent=5 // pred_check_branch
      %184 = sbr.rel (%p181) target = $region12
    $region11: #{aspp_forward.1} parent=5 // pred_region
      %s185 = ssub.s32 %s11, 1
      // Predicated region
      $region13: #{aspp_forward.1} parent=11 // pred_check
        %p186 = pneg %p77
      $region14: #{aspp_forward.1} parent=11 // pred_check_branch
        %188 = sbr.rel (%p186) target = $region16
      $region15: #{aspp_forward.1} parent=11 // pred_region
        %p189 = scmp.lt.s32.totalorder %s21, 0
        %s190 = scalar_select %p189, %s21, 0
        %s191 = smul.addr %s190, 8
        %s192 = scalar_lea.vmem %s1, %s191
      $region16: #{aspp_forward.1} parent=11 // pred_fallthru
        _
      // Predicated region
      $region17: #{aspp_forward.1} parent=11 // pred_check
        %p193 = pneg %p103
      $region18: #{aspp_forward.1} parent=11 // pred_check_branch
        %195 = sbr.rel (%p193) target = $region20
      $region19: #{aspp_forward.1} parent=11 // pred_region
        %p196 = scmp.lt.s32.totalorder %s21, 0
        %s197 = scalar_select %p196, %s21, 0
        %s198 = smul.addr %s197, 8
        %s199 = scalar_lea.vmem %s2, %s198
      $region20: #{aspp_forward.1} parent=11 // pred_fallthru
        _
      // Predicated region
      $region21: #{aspp_forward.1} parent=11 // pred_check
        %p200 = pneg %p124
      $region22: #{aspp_forward.1} parent=11 // pred_check_branch
        %202 = sbr.rel (%p200) target = $region24
      $region23: #{aspp_forward.1} parent=11 // pred_region
        _
      $region24: #{aspp_forward.1} parent=11 // pred_fallthru
        _
      // Predicated region
      $region25: #{aspp_forward.1} parent=11 // pred_check
        %p203 = pneg %p145
      $region26: #{aspp_forward.1} parent=11 // pred_check_branch
        %205 = sbr.rel (%p203) target = $region28
      $region27: #{aspp_forward.1} parent=11 // pred_region
        _
      $region28: #{aspp_forward.1} parent=11 // pred_fallthru
        _
    $region12: #{aspp_forward.1} parent=5 // pred_fallthru
      _
    %p206 = scmp.lt.s32.totalorder %s11, 2
    // Predicated region
    $region29: #{aspp_forward.1} parent=5 // pred_check
      %p207 = pneg %p206
    $region30: #{aspp_forward.1} parent=5 // pred_check_branch
      %209 = sbr.rel (%p207) target = $region32
    $region31: #{aspp_forward.1} parent=5 // pred_region
      // Predicated region
      $region33: #{aspp_forward.1} parent=31 // pred_check
        %p210 = pneg %p45
      $region34: #{aspp_forward.1} parent=31 // pred_check_branch
        %212 = sbr.rel (%p210) target = $region36
      $region35: #{aspp_forward.1} parent=31 // pred_region
        %p213 = scmp.lt.s32.totalorder %s18, 1
        %s214 = scalar_select %p213, %s18, 1
        %p215 = scmp.lt.s32.totalorder %s19, 0
        %s216 = scalar_select %p215, %s19, 0
        %s217 = smul.addr %s216, 2
        %s218 = smul.addr %s214, 2
        %s219 = sadd.s32 %s217, %s218
        %s220 = smul.addr %s219, 4
        %s221 = scalar_lea.vmem %s0, %s220
      $region36: #{aspp_forward.1} parent=31 // pred_fallthru
        _
    $region32: #{aspp_forward.1} parent=5 // pred_fallthru
      _
    %p222 = scmp.le.s32.totalorder 1, %s11
    %p223 = scmp.lt.s32.totalorder %s11, 3
    %p224 = pnand %p222, %p223
    %p225 = pneg %p224
    // Predicated region
    $region37: #{aspp_forward.1} parent=5 // pred_check
      _
    $region38: #{aspp_forward.1} parent=5 // pred_check_branch
      %227 = sbr.rel (%p224) target = $region40
    $region39: #{aspp_forward.1} parent=5 // pred_region
      %s228 = ssub.s32 %s11, 1
      %p229 = scmp.lt.s32.totalorder %s20, 1
      %s230 = scalar_select %p229, %s20, 1
      %p231 = scmp.lt.s32.totalorder %s21, 0
      %s232 = scalar_select %p231, %s21, 0
      %s233 = smul.addr %s232, 2
      %s234 = smul.addr %s230, 2
      %s235 = sadd.s32 %s233, %s234
      %s236 = smul.addr %s235, 4
      %s237 = scalar_lea.vmem %s0, %s236
      %p238 = pneg %p51
      %p239 = pneg %p48
      %p240 = scmp.lt.s32.totalorder %s21, 0
      %s241 = scalar_select %p240, %s21, 0
      %s242 = smul.addr %s241, 8
      %s243 = scalar_lea.vmem %s1, %s242
      %p244 = pneg %p77
      %p245 = pneg %p74
      %p246 = scmp.lt.s32.totalorder %s21, 0
      %s247 = scalar_select %p246, %s21, 0
      %s248 = smul.addr %s247, 8
      %s249 = scalar_lea.vmem %s2, %s248
      %p250 = pneg %p103
      %p251 = pneg %p100
      %p252 = pneg %p124
      %p253 = pneg %p121
      %p254 = pneg %p145
      %p255 = pneg %p142
      %p256 = pneg %p171
      %p257 = pneg %p168
      %p258 = scmp.lt.s32.totalorder %s20, 1
      %s259 = scalar_select %p258, %s20, 1
      %s260 = smul.addr %s259, 8
      %s261 = smul.addr %s260, 8
      %s262 = scalar_lea.vmem %s5, %s261
      %p263 = scmp.lt.s32.totalorder %s20, 1
      %s264 = scalar_select %p263, %s20, 1
      %p265 = scmp.lt.s32.totalorder %s21, 0
      %s266 = scalar_select %p265, %s21, 0
      %s267 = smul.addr %s266, 2
      %s268 = smul.addr %s264, 2
      %s269 = sadd.s32 %s267, %s268
      %s270 = smul.addr %s269, 4
      %s271 = scalar_lea.vmem %s0, %s270
      %p272 = scmp.lt.s32.totalorder %s21, 0
      %s273 = scalar_select %p272, %s21, 0
      %s274 = smul.addr %s273, 8
      %s275 = scalar_lea.vmem %s1, %s274
      %p276 = scmp.lt.s32.totalorder %s21, 0
      %s277 = scalar_select %p276, %s21, 0
      %s278 = smul.addr %s277, 8
      %s279 = scalar_lea.vmem %s2, %s278
      %p280 = scmp.lt.s32.totalorder %s20, 1
      %s281 = scalar_select %p280, %s20, 1
      %s282 = smul.addr %s281, 8
      %s283 = smul.addr %s282, 8
      %s284 = scalar_lea.vmem %s5, %s283
      %p285 = scmp.eq.s32.totalorder %s21, 0
      // Predicated region
      $region41: #{aspp_forward.1} parent=39 // pred_check
        %p286 = pneg %p285
      $region42: #{aspp_forward.1} parent=39 // pred_check_branch
        %288 = sbr.rel (%p286) target = $region44
      $region43: #{aspp_forward.1} parent=39 // pred_region
        %v289 = vld [vmem:[%s3] sm:$0xff]
        %v290 = vld [vmem:[%s3 + $0x8] sm:$0xff]
        %v291 = vld [vmem:[%s3 + $0x10] sm:$0xff]
        %v292 = vld [vmem:[%s3 + $0x18] sm:$0xff]
        %294 = vset.pattern.permute.xlu0 0
        %295 = vperm.xlu0 %294, %v289
        %v296 = vpop.permute.xlu0 %295
        %299 = vset.pattern.permute.xlu0 0
        %300 = vperm.xlu0 %299, %v290
        %v301 = vpop.permute.xlu0 %300
        %304 = vset.pattern.permute.xlu0 0
        %305 = vperm.xlu0 %304, %v291
        %v306 = vpop.permute.xlu0 %305
        %309 = vset.pattern.permute.xlu0 0
        %310 = vperm.xlu0 %309, %v292
        %v311 = vpop.permute.xlu0 %310
        %313 = vst [vmem:[#allocation2] sm:$0xff] %v296
        %314 = vst [vmem:[#allocation2 + $0x8] sm:$0xff] %v296
        %315 = vst [vmem:[#allocation2 + $0x10] sm:$0xff] %v301
        %316 = vst [vmem:[#allocation2 + $0x18] sm:$0xff] %v301
        %317 = vst [vmem:[#allocation2 + $0x20] sm:$0xff] %v306
        %318 = vst [vmem:[#allocation2 + $0x28] sm:$0xff] %v306
        %319 = vst [vmem:[#allocation2 + $0x30] sm:$0xff] %v311
        %320 = vst [vmem:[#allocation2 + $0x38] sm:$0xff] %v311
        %321 = vst [vmem:[#allocation3] sm:$0xf] 0.0
        %322 = vst [vmem:[#allocation3 + $0xc] sm:$0xf] 0.0
      $region44: #{aspp_forward.1} parent=39 // pred_fallthru
        _
      %v323 = vld [vmem:[%s271] sm:$0xff]
      %324 = vst [vmem:[#allocation3 + $0x4] sm:$0xff] %v323
      %v325 = vld [vmem:[#allocation2] sm:$0xff]
      %v326 = vld [vmem:[#allocation2 + $0x8] sm:$0xff]
      %v327 = vld [vmem:[%s275] sm:$0xff]
      %v329 = vcombine.high %v323, %v323
      %vm330 = vcmask 31744
      %v332 = vsel %vm330, %v327, 0
      %vm334 = vcmask 1043456
      %v335 = vsel %vm334, %v323, 0
      %v337 = vsel %vm334, %v329, 0
      %339 = vmatprep.subr.mxu0 %v337
      %340 = vmatpush1.msra.mxu0 %v335
      %341 = vmatprep.subr.mxu0 0.0
      %342 = vmatpush1.msra.mxu0 0.0
      %343 = vmatprep.subr.mxu0 0.0
      %344 = vmatpush1.msra.mxu0 0.0
      %345 = vmatprep.subr.mxu0 0.0
      %346 = vmatpush1.msra.mxu0 0.0
      %347 = vmatprep.subr.mxu0 0.0
      %348 = vmatpush1.msra.mxu0 0.0
      %349 = vmatprep.subr.mxu0 0.0
      %350 = vmatpush1.msra.mxu0 0.0
      %351 = vmatprep.subr.mxu0 0.0
      %352 = vmatpush1.msra.mxu0 0.0
      %353 = vmatprep.subr.mxu0 0.0
      %354 = vmatpush1.msra.mxu0 0.0
      %355 = vmatprep.subr.mxu0 0.0
      %356 = vmatpush1.msra.mxu0 0.0
      %357 = vmatprep.subr.mxu0 0.0
      %358 = vmatpush1.msra.mxu0 0.0
      %359 = vmatprep.subr.mxu0 0.0
      %360 = vmatpush1.msra.mxu0 0.0
      %361 = vmatprep.subr.mxu0 0.0
      %362 = vmatpush1.msra.mxu0 0.0
      %363 = vmatprep.subr.mxu0 0.0
      %364 = vmatpush1.msra.mxu0 0.0
      %365 = vmatprep.subr.mxu0 0.0
      %366 = vmatpush1.msra.mxu0 0.0
      %367 = vmatprep.subr.mxu0 0.0
      %368 = vmatpush1.msra.mxu0 0.0
      %369 = vmatprep.subr.mxu0 0.0
      %370 = vmatpush1.msra.mxu0 0.0
      %371 = vmatprep.subr.mxu0 0.0
      %372 = vmatpush1.msra.mxu0 0.0
      %373 = vmatprep.subr.mxu0 0.0
      %374 = vmatpush1.msra.mxu0 0.0
      %375 = vmatprep.subr.mxu0 0.0
      %376 = vmatpush1.msra.mxu0 0.0
      %377 = vmatprep.subr.mxu0 0.0
      %378 = vmatpush1.msra.mxu0 0.0
      %379 = vmatprep.subr.mxu0 0.0
      %380 = vmatpush1.msra.mxu0 0.0
      %381 = vmatprep.subr.mxu0 0.0
      %382 = vmatpush1.msra.mxu0 0.0
      %383 = vmatprep.subr.mxu0 0.0
      %384 = vmatpush1.msra.mxu0 0.0
      %385 = vmatprep.subr.mxu0 0.0
      %386 = vmatpush1.msra.mxu0 0.0
      %387 = vmatprep.subr.mxu0 0.0
      %388 = vmatpush1.msra.mxu0 0.0
      %389 = vmatprep.subr.mxu0 0.0
      %390 = vmatpush1.msra.mxu0 0.0
      %391 = vmatprep.subr.mxu0 0.0
      %392 = vmatpush1.msra.mxu0 0.0
      %393 = vmatprep.subr.mxu0 0.0
      %394 = vmatpush1.msra.mxu0 0.0
      %395 = vmatprep.subr.mxu0 0.0
      %396 = vmatpush1.msra.mxu0 0.0
      %397 = vmatprep.subr.mxu0 0.0
      %398 = vmatpush1.msra.mxu0 0.0
      %399 = vmatprep.subr.mxu0 0.0
      %400 = vmatpush1.msra.mxu0 0.0
      %401 = vmatprep.subr.mxu0 0.0
      %402 = vmatpush1.msra.mxu0 0.0
      %403 = vmatprep.mubr.f32.mxu0 0.0
      %404 = vmatmul.mubr.f32.gmra.mrb[0].mxu0 %v332
      %v405 = vpop.f32.mrb[0].mxu0
      %v406 = vadd.f32 0.0, %v405
      %v407 = vpop.f32.mrb[0].mxu0
      %v408 = vadd.f32 0.0, %v407
      %409 = vdwg.mxu0
      %v410 = vadd.f32 %v325, %v406
      %v411 = vadd.f32 %v326, %v408
      %412 = vst [vmem:[#allocation2] sm:$0xff] %v410
      %413 = vst [vmem:[#allocation2 + $0x8] sm:$0xff] %v411
      // Predicated region
      $region45: #{aspp_forward.1} parent=39 // pred_check
        %p414 = pneg %p285
      $region46: #{aspp_forward.1} parent=39 // pred_check_branch
        %416 = sbr.rel (%p414) target = $region48
      $region47: #{aspp_forward.1} parent=39 // pred_region
        %v417 = vld [vmem:[#allocation2] sm:$0xff]
        %v418 = vld [vmem:[#allocation2 + $0x8] sm:$0xff]
        %v419 = vmax.f32 %v417, 0.0
        %v420 = vmax.f32 %v418, 0.0
        %421 = vst [vmem:[%s284] sm:$0xff] %v419
        %422 = vst [vmem:[%s284 + $0x8] sm:$0xff] %v420
      $region48: #{aspp_forward.1} parent=39 // pred_fallthru
        _
      %s423 = scalar_lea.vmem %s279, 32
      %v424 = vld [vmem:[%s423] sm:$0xff]
      %v425 = vld [vmem:[#allocation3] sm:$0xff]
      %v426 = vld [vmem:[#allocation3 + $0x8] sm:$0xf]
      %v427 = vld [vmem:[%s279] sm:$0xff]
      %v430 = vcombine.high %v425, %v425
      %431 = vrot.lane.b32.xlu0 %v425, 17
      %v432 = vpop.permute.xlu0 %431
      %433 = vrot.lane.b32.xlu0 %v430, 17
      %v434 = vpop.permute.xlu0 %433
      %435 = vrot.lane.b32.xlu0 %v426, 17
      %v436 = vpop.permute.xlu0 %435
      %vm437 = vcmask 138240
      %v438 = vsel %vm437, %v432, %v434
      %v439 = vsel %vm437, %v434, %v436
      %v441 = vsel %vm330, %v427, 0
      %v443 = vsel %vm334, %v438, 0
      %v445 = vsel %vm334, %v439, 0
      %447 = vmatprep.subr.mxu0 %v445
      %448 = vmatpush1.msra.mxu0 %v443
      %449 = vmatprep.subr.mxu0 0.0
      %450 = vmatpush1.msra.mxu0 0.0
      %451 = vmatprep.subr.mxu0 0.0
      %452 = vmatpush1.msra.mxu0 0.0
      %453 = vmatprep.subr.mxu0 0.0
      %454 = vmatpush1.msra.mxu0 0.0
      %455 = vmatprep.subr.mxu0 0.0
      %456 = vmatpush1.msra.mxu0 0.0
      %457 = vmatprep.subr.mxu0 0.0
      %458 = vmatpush1.msra.mxu0 0.0
      %459 = vmatprep.subr.mxu0 0.0
      %460 = vmatpush1.msra.mxu0 0.0
      %461 = vmatprep.subr.mxu0 0.0
      %462 = vmatpush1.msra.mxu0 0.0
      %463 = vmatprep.subr.mxu0 0.0
      %464 = vmatpush1.msra.mxu0 0.0
      %465 = vmatprep.subr.mxu0 0.0
      %466 = vmatpush1.msra.mxu0 0.0
      %467 = vmatprep.subr.mxu0 0.0
      %468 = vmatpush1.msra.mxu0 0.0
      %469 = vmatprep.subr.mxu0 0.0
      %470 = vmatpush1.msra.mxu0 0.0
      %471 = vmatprep.subr.mxu0 0.0
      %472 = vmatpush1.msra.mxu0 0.0
      %473 = vmatprep.subr.mxu0 0.0
      %474 = vmatpush1.msra.mxu0 0.0
      %475 = vmatprep.subr.mxu0 0.0
      %476 = vmatpush1.msra.mxu0 0.0
      %477 = vmatprep.subr.mxu0 0.0
      %478 = vmatpush1.msra.mxu0 0.0
      %479 = vmatprep.subr.mxu0 0.0
      %480 = vmatpush1.msra.mxu0 0.0
      %481 = vmatprep.subr.mxu0 0.0
      %482 = vmatpush1.msra.mxu0 0.0
      %483 = vmatprep.subr.mxu0 0.0
      %484 = vmatpush1.msra.mxu0 0.0
      %485 = vmatprep.subr.mxu0 0.0
      %486 = vmatpush1.msra.mxu0 0.0
      %487 = vmatprep.subr.mxu0 0.0
      %488 = vmatpush1.msra.mxu0 0.0
      %489 = vmatprep.subr.mxu0 0.0
      %490 = vmatpush1.msra.mxu0 0.0
      %491 = vmatprep.subr.mxu0 0.0
      %492 = vmatpush1.msra.mxu0 0.0
      %493 = vmatprep.subr.mxu0 0.0
      %494 = vmatpush1.msra.mxu0 0.0
      %495 = vmatprep.subr.mxu0 0.0
      %496 = vmatpush1.msra.mxu0 0.0
      %497 = vmatprep.subr.mxu0 0.0
      %498 = vmatpush1.msra.mxu0 0.0
      %499 = vmatprep.subr.mxu0 0.0
      %500 = vmatpush1.msra.mxu0 0.0
      %501 = vmatprep.subr.mxu0 0.0
      %502 = vmatpush1.msra.mxu0 0.0
      %503 = vmatprep.subr.mxu0 0.0
      %504 = vmatpush1.msra.mxu0 0.0
      %505 = vmatprep.subr.mxu0 0.0
      %506 = vmatpush1.msra.mxu0 0.0
      %507 = vmatprep.subr.mxu0 0.0
      %508 = vmatpush1.msra.mxu0 0.0
      %509 = vmatprep.subr.mxu0 0.0
      %510 = vmatpush1.msra.mxu0 0.0
      %511 = vmatprep.mubr.f32.mxu0 0.0
      %512 = vmatmul.mubr.f32.gmra.mrb[0].mxu0 %v441
      %v513 = vpop.f32.mrb[0].mxu0
      %v514 = vadd.f32 0.0, %v513
      %v515 = vpop.f32.mrb[0].mxu0
      %v516 = vadd.f32 0.0, %v515
      %517 = vdwg.mxu0
      %v518 = vld [vmem:[%s4] sm:$0x3]
      %v520 = vlaneseq
      %v521 = vshrl.u32 %v520, 7
      %v522 = vsub.s32 0, %v521
      %v523 = vrot.slane %v518, %v522
      %v524 = vlaneseq
      %v525 = vshrl.u32 %v524, 7
      %v526 = vsub.s32 1, %v525
      %v527 = vrot.slane %v518, %v526
      %v530 = vmul.f32 %v514, %v523
      %v531 = vmul.f32 %v516, %v527
      %v533 = vsel %vm330, %v424, 0
      %535 = vmatprep.subr.mxu0 %v337
      %536 = vmatpush1.msra.mxu0 %v335
      %537 = vmatprep.subr.mxu0 0.0
      %538 = vmatpush1.msra.mxu0 0.0
      %539 = vmatprep.subr.mxu0 0.0
      %540 = vmatpush1.msra.mxu0 0.0
      %541 = vmatprep.subr.mxu0 0.0
      %542 = vmatpush1.msra.mxu0 0.0
      %543 = vmatprep.subr.mxu0 0.0
      %544 = vmatpush1.msra.mxu0 0.0
      %545 = vmatprep.subr.mxu0 0.0
      %546 = vmatpush1.msra.mxu0 0.0
      %547 = vmatprep.subr.mxu0 0.0
      %548 = vmatpush1.msra.mxu0 0.0
      %549 = vmatprep.subr.mxu0 0.0
      %550 = vmatpush1.msra.mxu0 0.0
      %551 = vmatprep.subr.mxu0 0.0
      %552 = vmatpush1.msra.mxu0 0.0
      %553 = vmatprep.subr.mxu0 0.0
      %554 = vmatpush1.msra.mxu0 0.0
      %555 = vmatprep.subr.mxu0 0.0
      %556 = vmatpush1.msra.mxu0 0.0
      %557 = vmatprep.subr.mxu0 0.0
      %558 = vmatpush1.msra.mxu0 0.0
      %559 = vmatprep.subr.mxu0 0.0
      %560 = vmatpush1.msra.mxu0 0.0
      %561 = vmatprep.subr.mxu0 0.0
      %562 = vmatpush1.msra.mxu0 0.0
      %563 = vmatprep.subr.mxu0 0.0
      %564 = vmatpush1.msra.mxu0 0.0
      %565 = vmatprep.subr.mxu0 0.0
      %566 = vmatpush1.msra.mxu0 0.0
      %567 = vmatprep.subr.mxu0 0.0
      %568 = vmatpush1.msra.mxu0 0.0
      %569 = vmatprep.subr.mxu0 0.0
      %570 = vmatpush1.msra.mxu0 0.0
      %571 = vmatprep.subr.mxu0 0.0
      %572 = vmatpush1.msra.mxu0 0.0
      %573 = vmatprep.subr.mxu0 0.0
      %574 = vmatpush1.msra.mxu0 0.0
      %575 = vmatprep.subr.mxu0 0.0
      %576 = vmatpush1.msra.mxu0 0.0
      %577 = vmatprep.subr.mxu0 0.0
      %578 = vmatpush1.msra.mxu0 0.0
      %579 = vmatprep.subr.mxu0 0.0
      %580 = vmatpush1.msra.mxu0 0.0
      %581 = vmatprep.subr.mxu0 0.0
      %582 = vmatpush1.msra.mxu0 0.0
      %583 = vmatprep.subr.mxu0 0.0
      %584 = vmatpush1.msra.mxu0 0.0
      %585 = vmatprep.subr.mxu0 0.0
      %586 = vmatpush1.msra.mxu0 0.0
      %587 = vmatprep.subr.mxu0 0.0
      %588 = vmatpush1.msra.mxu0 0.0
      %589 = vmatprep.subr.mxu0 0.0
      %590 = vmatpush1.msra.mxu0 0.0
      %591 = vmatprep.subr.mxu0 0.0
      %592 = vmatpush1.msra.mxu0 0.0
      %593 = vmatprep.subr.mxu0 0.0
      %594 = vmatpush1.msra.mxu0 0.0
      %595 = vmatprep.subr.mxu0 0.0
      %596 = vmatpush1.msra.mxu0 0.0
      %597 = vmatprep.subr.mxu0 0.0
      %598 = vmatpush1.msra.mxu0 0.0
      %599 = vmatprep.mubr.f32.mxu0 0.0
      %600 = vmatmul.mubr.f32.gmra.mrb[0].mxu0 %v533
      %v601 = vpop.f32.mrb[0].mxu0
      %v602 = vadd.f32 %v530, %v601
      %v603 = vpop.f32.mrb[0].mxu0
      %v604 = vadd.f32 %v531, %v603
      %605 = vdwg.mxu0
      %v606 = vld [vmem:[#allocation3] sm:$0xff]
      %v607 = vld [vmem:[#allocation3 + $0x8] sm:$0xf]
      %s608 = scalar_lea.vmem %s279, 8
      %v609 = vld [vmem:[%s608] sm:$0xff]
      %v612 = vcombine.high %v606, %v606
      %613 = vrot.lane.b32.xlu0 %v606, 16
      %v614 = vpop.permute.xlu0 %613
      %615 = vrot.lane.b32.xlu0 %v612, 16
      %v616 = vpop.permute.xlu0 %615
      %617 = vrot.lane.b32.xlu0 %v607, 16
      %v618 = vpop.permute.xlu0 %617
      %vm619 = vcmask 130048
      %v620 = vsel %vm619, %v614, %v616
      %v621 = vsel %vm619, %v616, %v618
      %v623 = vsel %vm330, %v609, 0
      %v625 = vsel %vm334, %v620, 0
      %v627 = vsel %vm334, %v621, 0
      %629 = vmatprep.subr.mxu0 %v627
      %630 = vmatpush1.msra.mxu0 %v625
      %631 = vmatprep.subr.mxu0 0.0
      %632 = vmatpush1.msra.mxu0 0.0
      %633 = vmatprep.subr.mxu0 0.0
      %634 = vmatpush1.msra.mxu0 0.0
      %635 = vmatprep.subr.mxu0 0.0
      %636 = vmatpush1.msra.mxu0 0.0
      %637 = vmatprep.subr.mxu0 0.0
      %638 = vmatpush1.msra.mxu0 0.0
      %639 = vmatprep.subr.mxu0 0.0
      %640 = vmatpush1.msra.mxu0 0.0
      %641 = vmatprep.subr.mxu0 0.0
      %642 = vmatpush1.msra.mxu0 0.0
      %643 = vmatprep.subr.mxu0 0.0
      %644 = vmatpush1.msra.mxu0 0.0
      %645 = vmatprep.subr.mxu0 0.0
      %646 = vmatpush1.msra.mxu0 0.0
      %647 = vmatprep.subr.mxu0 0.0
      %648 = vmatpush1.msra.mxu0 0.0
      %649 = vmatprep.subr.mxu0 0.0
      %650 = vmatpush1.msra.mxu0 0.0
      %651 = vmatprep.subr.mxu0 0.0
      %652 = vmatpush1.msra.mxu0 0.0
      %653 = vmatprep.subr.mxu0 0.0
      %654 = vmatpush1.msra.mxu0 0.0
      %655 = vmatprep.subr.mxu0 0.0
      %656 = vmatpush1.msra.mxu0 0.0
      %657 = vmatprep.subr.mxu0 0.0
      %658 = vmatpush1.msra.mxu0 0.0
      %659 = vmatprep.subr.mxu0 0.0
      %660 = vmatpush1.msra.mxu0 0.0
      %661 = vmatprep.subr.mxu0 0.0
      %662 = vmatpush1.msra.mxu0 0.0
      %663 = vmatprep.subr.mxu0 0.0
      %664 = vmatpush1.msra.mxu0 0.0
      %665 = vmatprep.subr.mxu0 0.0
      %666 = vmatpush1.msra.mxu0 0.0
      %667 = vmatprep.subr.mxu0 0.0
      %668 = vmatpush1.msra.mxu0 0.0
      %669 = vmatprep.subr.mxu0 0.0
      %670 = vmatpush1.msra.mxu0 0.0
      %671 = vmatprep.subr.mxu0 0.0
      %672 = vmatpush1.msra.mxu0 0.0
      %673 = vmatprep.subr.mxu0 0.0
      %674 = vmatpush1.msra.mxu0 0.0
      %675 = vmatprep.subr.mxu0 0.0
      %676 = vmatpush1.msra.mxu0 0.0
      %677 = vmatprep.subr.mxu0 0.0
      %678 = vmatpush1.msra.mxu0 0.0
      %679 = vmatprep.subr.mxu0 0.0
      %680 = vmatpush1.msra.mxu0 0.0
      %681 = vmatprep.subr.mxu0 0.0
      %682 = vmatpush1.msra.mxu0 0.0
      %683 = vmatprep.subr.mxu0 0.0
      %684 = vmatpush1.msra.mxu0 0.0
      %685 = vmatprep.subr.mxu0 0.0
      %686 = vmatpush1.msra.mxu0 0.0
      %687 = vmatprep.subr.mxu0 0.0
      %688 = vmatpush1.msra.mxu0 0.0
      %689 = vmatprep.subr.mxu0 0.0
      %690 = vmatpush1.msra.mxu0 0.0
      %691 = vmatprep.subr.mxu0 0.0
      %692 = vmatpush1.msra.mxu0 0.0
      %693 = vmatprep.mubr.f32.mxu0 0.0
      %694 = vmatmul.mubr.f32.gmra.mrb[0].mxu0 %v623
      %v695 = vpop.f32.mrb[0].mxu0
      %v696 = vadd.f32 0.0, %v695
      %v697 = vpop.f32.mrb[0].mxu0
      %v698 = vadd.f32 0.0, %v697
      %699 = vdwg.mxu0
      %s700 = scalar_lea.vmem %s4, 2
      %v701 = vld [vmem:[%s700] sm:$0x3]
      %v703 = vlaneseq
      %v704 = vshrl.u32 %v703, 7
      %v705 = vsub.s32 0, %v704
      %v706 = vrot.slane %v701, %v705
      %v707 = vlaneseq
      %v708 = vshrl.u32 %v707, 7
      %v709 = vsub.s32 1, %v708
      %v710 = vrot.slane %v701, %v709
      %v713 = vmul.f32 %v696, %v706
      %v714 = vmul.f32 %v698, %v710
      %v715 = vadd.f32 %v602, %v713
      %v716 = vadd.f32 %v604, %v714
      %v717 = vld [vmem:[#allocation3] sm:$0xff]
      %v718 = vld [vmem:[#allocation3 + $0x8] sm:$0xf]
      %s719 = scalar_lea.vmem %s279, 16
      %v720 = vld [vmem:[%s719] sm:$0xff]
      %v723 = vcombine.high %v717, %v717
      %724 = vrot.lane.b32.xlu0 %v717, 15
      %v725 = vpop.permute.xlu0 %724
      %726 = vrot.lane.b32.xlu0 %v723, 15
      %v727 = vpop.permute.xlu0 %726
      %728 = vrot.lane.b32.xlu0 %v718, 15
      %v729 = vpop.permute.xlu0 %728
      %vm730 = vcmask 121856
      %v731 = vsel %vm730, %v725, %v727
      %v732 = vsel %vm730, %v727, %v729
      %v734 = vsel %vm330, %v720, 0
      %v736 = vsel %vm334, %v731, 0
      %v738 = vsel %vm334, %v732, 0
      %740 = vmatprep.subr.mxu0 %v738
      %741 = vmatpush1.msra.mxu0 %v736
      %742 = vmatprep.subr.mxu0 0.0
      %743 = vmatpush1.msra.mxu0 0.0
      %744 = vmatprep.subr.mxu0 0.0
      %745 = vmatpush1.msra.mxu0 0.0
      %746 = vmatprep.subr.mxu0 0.0
      %747 = vmatpush1.msra.mxu0 0.0
      %748 = vmatprep.subr.mxu0 0.0
      %749 = vmatpush1.msra.mxu0 0.0
      %750 = vmatprep.subr.mxu0 0.0
      %751 = vmatpush1.msra.mxu0 0.0
      %752 = vmatprep.subr.mxu0 0.0
      %753 = vmatpush1.msra.mxu0 0.0
      %754 = vmatprep.subr.mxu0 0.0
      %755 = vmatpush1.msra.mxu0 0.0
      %756 = vmatprep.subr.mxu0 0.0
      %757 = vmatpush1.msra.mxu0 0.0
      %758 = vmatprep.subr.mxu0 0.0
      %759 = vmatpush1.msra.mxu0 0.0
      %760 = vmatprep.subr.mxu0 0.0
      %761 = vmatpush1.msra.mxu0 0.0
      %762 = vmatprep.subr.mxu0 0.0
      %763 = vmatpush1.msra.mxu0 0.0
      %764 = vmatprep.subr.mxu0 0.0
      %765 = vmatpush1.msra.mxu0 0.0
      %766 = vmatprep.subr.mxu0 0.0
      %767 = vmatpush1.msra.mxu0 0.0
      %768 = vmatprep.subr.mxu0 0.0
      %769 = vmatpush1.msra.mxu0 0.0
      %770 = vmatprep.subr.mxu0 0.0
      %771 = vmatpush1.msra.mxu0 0.0
      %772 = vmatprep.subr.mxu0 0.0
      %773 = vmatpush1.msra.mxu0 0.0
      %774 = vmatprep.subr.mxu0 0.0
      %775 = vmatpush1.msra.mxu0 0.0
      %776 = vmatprep.subr.mxu0 0.0
      %777 = vmatpush1.msra.mxu0 0.0
      %778 = vmatprep.subr.mxu0 0.0
      %779 = vmatpush1.msra.mxu0 0.0
      %780 = vmatprep.subr.mxu0 0.0
      %781 = vmatpush1.msra.mxu0 0.0
      %782 = vmatprep.subr.mxu0 0.0
      %783 = vmatpush1.msra.mxu0 0.0
      %784 = vmatprep.subr.mxu0 0.0
      %785 = vmatpush1.msra.mxu0 0.0
      %786 = vmatprep.subr.mxu0 0.0
      %787 = vmatpush1.msra.mxu0 0.0
      %788 = vmatprep.subr.mxu0 0.0
      %789 = vmatpush1.msra.mxu0 0.0
      %790 = vmatprep.subr.mxu0 0.0
      %791 = vmatpush1.msra.mxu0 0.0
      %792 = vmatprep.subr.mxu0 0.0
      %793 = vmatpush1.msra.mxu0 0.0
      %794 = vmatprep.subr.mxu0 0.0
      %795 = vmatpush1.msra.mxu0 0.0
      %796 = vmatprep.subr.mxu0 0.0
      %797 = vmatpush1.msra.mxu0 0.0
      %798 = vmatprep.subr.mxu0 0.0
      %799 = vmatpush1.msra.mxu0 0.0
      %800 = vmatprep.subr.mxu0 0.0
      %801 = vmatpush1.msra.mxu0 0.0
      %802 = vmatprep.subr.mxu0 0.0
      %803 = vmatpush1.msra.mxu0 0.0
      %804 = vmatprep.mubr.f32.mxu0 0.0
      %805 = vmatmul.mubr.f32.gmra.mrb[0].mxu0 %v734
      %v806 = vpop.f32.mrb[0].mxu0
      %v807 = vadd.f32 0.0, %v806
      %v808 = vpop.f32.mrb[0].mxu0
      %v809 = vadd.f32 0.0, %v808
      %810 = vdwg.mxu0
      %s811 = scalar_lea.vmem %s4, 4
      %v812 = vld [vmem:[%s811] sm:$0x3]
      %v814 = vlaneseq
      %v815 = vshrl.u32 %v814, 7
      %v816 = vsub.s32 0, %v815
      %v817 = vrot.slane %v812, %v816
      %v818 = vlaneseq
      %v819 = vshrl.u32 %v818, 7
      %v820 = vsub.s32 1, %v819
      %v821 = vrot.slane %v812, %v820
      %v824 = vmul.f32 %v807, %v817
      %v825 = vmul.f32 %v809, %v821
      %v826 = vadd.f32 %v715, %v824
      %v827 = vadd.f32 %v716, %v825
      %v828 = vld [vmem:[#allocation3] sm:$0xff]
      %v829 = vld [vmem:[#allocation3 + $0x8] sm:$0xf]
      %s830 = scalar_lea.vmem %s279, 24
      %v831 = vld [vmem:[%s830] sm:$0xff]
      %v834 = vcombine.high %v828, %v828
      %835 = vrot.lane.b32.xlu0 %v828, 1
      %v836 = vpop.permute.xlu0 %835
      %837 = vrot.lane.b32.xlu0 %v834, 1
      %v838 = vpop.permute.xlu0 %837
      %839 = vrot.lane.b32.xlu0 %v829, 1
      %v840 = vpop.permute.xlu0 %839
      %vm841 = vcmask 7168
      %v842 = vsel %vm841, %v836, %v838
      %v843 = vsel %vm841, %v838, %v840
      %v845 = vsel %vm330, %v831, 0
      %v847 = vsel %vm334, %v842, 0
      %v849 = vsel %vm334, %v843, 0
      %851 = vmatprep.subr.mxu0 %v849
      %852 = vmatpush1.msra.mxu0 %v847
      %853 = vmatprep.subr.mxu0 0.0
      %854 = vmatpush1.msra.mxu0 0.0
      %855 = vmatprep.subr.mxu0 0.0
      %856 = vmatpush1.msra.mxu0 0.0
      %857 = vmatprep.subr.mxu0 0.0
      %858 = vmatpush1.msra.mxu0 0.0
      %859 = vmatprep.subr.mxu0 0.0
      %860 = vmatpush1.msra.mxu0 0.0
      %861 = vmatprep.subr.mxu0 0.0
      %862 = vmatpush1.msra.mxu0 0.0
      %863 = vmatprep.subr.mxu0 0.0
      %864 = vmatpush1.msra.mxu0 0.0
      %865 = vmatprep.subr.mxu0 0.0
      %866 = vmatpush1.msra.mxu0 0.0
      %867 = vmatprep.subr.mxu0 0.0
      %868 = vmatpush1.msra.mxu0 0.0
      %869 = vmatprep.subr.mxu0 0.0
      %870 = vmatpush1.msra.mxu0 0.0
      %871 = vmatprep.subr.mxu0 0.0
      %872 = vmatpush1.msra.mxu0 0.0
      %873 = vmatprep.subr.mxu0 0.0
      %874 = vmatpush1.msra.mxu0 0.0
      %875 = vmatprep.subr.mxu0 0.0
      %876 = vmatpush1.msra.mxu0 0.0
      %877 = vmatprep.subr.mxu0 0.0
      %878 = vmatpush1.msra.mxu0 0.0
      %879 = vmatprep.subr.mxu0 0.0
      %880 = vmatpush1.msra.mxu0 0.0
      %881 = vmatprep.subr.mxu0 0.0
      %882 = vmatpush1.msra.mxu0 0.0
      %883 = vmatprep.subr.mxu0 0.0
      %884 = vmatpush1.msra.mxu0 0.0
      %885 = vmatprep.subr.mxu0 0.0
      %886 = vmatpush1.msra.mxu0 0.0
      %887 = vmatprep.subr.mxu0 0.0
      %888 = vmatpush1.msra.mxu0 0.0
      %889 = vmatprep.subr.mxu0 0.0
      %890 = vmatpush1.msra.mxu0 0.0
      %891 = vmatprep.subr.mxu0 0.0
      %892 = vmatpush1.msra.mxu0 0.0
      %893 = vmatprep.subr.mxu0 0.0
      %894 = vmatpush1.msra.mxu0 0.0
      %895 = vmatprep.subr.mxu0 0.0
      %896 = vmatpush1.msra.mxu0 0.0
      %897 = vmatprep.subr.mxu0 0.0
      %898 = vmatpush1.msra.mxu0 0.0
      %899 = vmatprep.subr.mxu0 0.0
      %900 = vmatpush1.msra.mxu0 0.0
      %901 = vmatprep.subr.mxu0 0.0
      %902 = vmatpush1.msra.mxu0 0.0
      %903 = vmatprep.subr.mxu0 0.0
      %904 = vmatpush1.msra.mxu0 0.0
      %905 = vmatprep.subr.mxu0 0.0
      %906 = vmatpush1.msra.mxu0 0.0
      %907 = vmatprep.subr.mxu0 0.0
      %908 = vmatpush1.msra.mxu0 0.0
      %909 = vmatprep.subr.mxu0 0.0
      %910 = vmatpush1.msra.mxu0 0.0
      %911 = vmatprep.subr.mxu0 0.0
      %912 = vmatpush1.msra.mxu0 0.0
      %913 = vmatprep.subr.mxu0 0.0
      %914 = vmatpush1.msra.mxu0 0.0
      %915 = vmatprep.mubr.f32.mxu0 0.0
      %916 = vmatmul.mubr.f32.gmra.mrb[0].mxu0 %v845
      %v917 = vpop.f32.mrb[0].mxu0
      %v918 = vadd.f32 0.0, %v917
      %v919 = vpop.f32.mrb[0].mxu0
      %v920 = vadd.f32 0.0, %v919
      %921 = vdwg.mxu0
      %s922 = scalar_lea.vmem %s4, 6
      %v923 = vld [vmem:[%s922] sm:$0x3]
      %v925 = vlaneseq
      %v926 = vshrl.u32 %v925, 7
      %v927 = vsub.s32 0, %v926
      %v928 = vrot.slane %v923, %v927
      %v929 = vlaneseq
      %v930 = vshrl.u32 %v929, 7
      %v931 = vsub.s32 1, %v930
      %v932 = vrot.slane %v923, %v931
      %v935 = vmul.f32 %v918, %v928
      %v936 = vmul.f32 %v920, %v932
      %v937 = vadd.f32 %v826, %v935
      %v938 = vadd.f32 %v827, %v936
      %v939 = vld [vmem:[#allocation3 + $0x4] sm:$0xff]
      %v940 = vld [vmem:[#allocation3 + $0xc] sm:$0xf]
      %s941 = scalar_lea.vmem %s279, 40
      %v942 = vld [vmem:[%s941] sm:$0xff]
      %v945 = vcombine.high %v939, %v939
      %946 = vrot.lane.b32.xlu0 %v939, 127
      %v947 = vpop.permute.xlu0 %946
      %948 = vrot.lane.b32.xlu0 %v945, 127
      %v949 = vpop.permute.xlu0 %948
      %950 = vrot.lane.b32.xlu0 %v940, 127
      %v951 = vpop.permute.xlu0 %950
      %vm952 = vcmask 1039360
      %v953 = vsel %vm952, %v947, %v949
      %v954 = vsel %vm952, %v949, %v951
      %v956 = vsel %vm330, %v942, 0
      %v958 = vsel %vm334, %v953, 0
      %v960 = vsel %vm334, %v954, 0
      %962 = vmatprep.subr.mxu0 %v960
      %963 = vmatpush1.msra.mxu0 %v958
      %964 = vmatprep.subr.mxu0 0.0
      %965 = vmatpush1.msra.mxu0 0.0
      %966 = vmatprep.subr.mxu0 0.0
      %967 = vmatpush1.msra.mxu0 0.0
      %968 = vmatprep.subr.mxu0 0.0
      %969 = vmatpush1.msra.mxu0 0.0
      %970 = vmatprep.subr.mxu0 0.0
      %971 = vmatpush1.msra.mxu0 0.0
      %972 = vmatprep.subr.mxu0 0.0
      %973 = vmatpush1.msra.mxu0 0.0
      %974 = vmatprep.subr.mxu0 0.0
      %975 = vmatpush1.msra.mxu0 0.0
      %976 = vmatprep.subr.mxu0 0.0
      %977 = vmatpush1.msra.mxu0 0.0
      %978 = vmatprep.subr.mxu0 0.0
      %979 = vmatpush1.msra.mxu0 0.0
      %980 = vmatprep.subr.mxu0 0.0
      %981 = vmatpush1.msra.mxu0 0.0
      %982 = vmatprep.subr.mxu0 0.0
      %983 = vmatpush1.msra.mxu0 0.0
      %984 = vmatprep.subr.mxu0 0.0
      %985 = vmatpush1.msra.mxu0 0.0
      %986 = vmatprep.subr.mxu0 0.0
      %987 = vmatpush1.msra.mxu0 0.0
      %988 = vmatprep.subr.mxu0 0.0
      %989 = vmatpush1.msra.mxu0 0.0
      %990 = vmatprep.subr.mxu0 0.0
      %991 = vmatpush1.msra.mxu0 0.0
      %992 = vmatprep.subr.mxu0 0.0
      %993 = vmatpush1.msra.mxu0 0.0
      %994 = vmatprep.subr.mxu0 0.0
      %995 = vmatpush1.msra.mxu0 0.0
      %996 = vmatprep.subr.mxu0 0.0
      %997 = vmatpush1.msra.mxu0 0.0
      %998 = vmatprep.subr.mxu0 0.0
      %999 = vmatpush1.msra.mxu0 0.0
      %1000 = vmatprep.subr.mxu0 0.0
      %1001 = vmatpush1.msra.mxu0 0.0
      %1002 = vmatprep.subr.mxu0 0.0
      %1003 = vmatpush1.msra.mxu0 0.0
      %1004 = vmatprep.subr.mxu0 0.0
      %1005 = vmatpush1.msra.mxu0 0.0
      %1006 = vmatprep.subr.mxu0 0.0
      %1007 = vmatpush1.msra.mxu0 0.0
      %1008 = vmatprep.subr.mxu0 0.0
      %1009 = vmatpush1.msra.mxu0 0.0
      %1010 = vmatprep.subr.mxu0 0.0
      %1011 = vmatpush1.msra.mxu0 0.0
      %1012 = vmatprep.subr.mxu0 0.0
      %1013 = vmatpush1.msra.mxu0 0.0
      %1014 = vmatprep.subr.mxu0 0.0
      %1015 = vmatpush1.msra.mxu0 0.0
      %1016 = vmatprep.subr.mxu0 0.0
      %1017 = vmatpush1.msra.mxu0 0.0
      %1018 = vmatprep.subr.mxu0 0.0
      %1019 = vmatpush1.msra.mxu0 0.0
      %1020 = vmatprep.subr.mxu0 0.0
      %1021 = vmatpush1.msra.mxu0 0.0
      %1022 = vmatprep.subr.mxu0 0.0
      %1023 = vmatpush1.msra.mxu0 0.0
      %1024 = vmatprep.subr.mxu0 0.0
      %1025 = vmatpush1.msra.mxu0 0.0
      %1026 = vmatprep.mubr.f32.mxu0 0.0
      %1027 = vmatmul.mubr.f32.gmra.mrb[0].mxu0 %v956
      %v1028 = vpop.f32.mrb[0].mxu0
      %v1029 = vadd.f32 0.0, %v1028
      %v1030 = vpop.f32.mrb[0].mxu0
      %v1031 = vadd.f32 0.0, %v1030
      %1032 = vdwg.mxu0
      %s1033 = scalar_lea.vmem %s4, 8
      %v1034 = vld [vmem:[%s1033] sm:$0x3]
      %v1036 = vlaneseq
      %v1037 = vshrl.u32 %v1036, 7
      %v1038 = vsub.s32 0, %v1037
      %v1039 = vrot.slane %v1034, %v1038
      %v1040 = vlaneseq
      %v1041 = vshrl.u32 %v1040, 7
      %v1042 = vsub.s32 1, %v1041
      %v1043 = vrot.slane %v1034, %v1042
      %v1046 = vmul.f32 %v1029, %v1039
      %v1047 = vmul.f32 %v1031, %v1043
      %v1048 = vadd.f32 %v937, %v1046
      %v1049 = vadd.f32 %v938, %v1047
      %v1050 = vld [vmem:[#allocation3 + $0x4] sm:$0xff]
      %v1051 = vld [vmem:[#allocation3 + $0xc] sm:$0xf]
      %s1052 = scalar_lea.vmem %s279, 48
      %v1053 = vld [vmem:[%s1052] sm:$0xff]
      %v1056 = vcombine.high %v1050, %v1050
      %1057 = vrot.lane.b32.xlu0 %v1050, 113
      %v1058 = vpop.permute.xlu0 %1057
      %1059 = vrot.lane.b32.xlu0 %v1056, 113
      %v1060 = vpop.permute.xlu0 %1059
      %1061 = vrot.lane.b32.xlu0 %v1051, 113
      %v1062 = vpop.permute.xlu0 %1061
      %vm1063 = vcmask 924672
      %v1064 = vsel %vm1063, %v1058, %v1060
      %v1065 = vsel %vm1063, %v1060, %v1062
      %v1067 = vsel %vm330, %v1053, 0
      %v1069 = vsel %vm334, %v1064, 0
      %v1071 = vsel %vm334, %v1065, 0
      %1073 = vmatprep.subr.mxu0 %v1071
      %1074 = vmatpush1.msra.mxu0 %v1069
      %1075 = vmatprep.subr.mxu0 0.0
      %1076 = vmatpush1.msra.mxu0 0.0
      %1077 = vmatprep.subr.mxu0 0.0
      %1078 = vmatpush1.msra.mxu0 0.0
      %1079 = vmatprep.subr.mxu0 0.0
      %1080 = vmatpush1.msra.mxu0 0.0
      %1081 = vmatprep.subr.mxu0 0.0
      %1082 = vmatpush1.msra.mxu0 0.0
      %1083 = vmatprep.subr.mxu0 0.0
      %1084 = vmatpush1.msra.mxu0 0.0
      %1085 = vmatprep.subr.mxu0 0.0
      %1086 = vmatpush1.msra.mxu0 0.0
      %1087 = vmatprep.subr.mxu0 0.0
      %1088 = vmatpush1.msra.mxu0 0.0
      %1089 = vmatprep.subr.mxu0 0.0
      %1090 = vmatpush1.msra.mxu0 0.0
      %1091 = vmatprep.subr.mxu0 0.0
      %1092 = vmatpush1.msra.mxu0 0.0
      %1093 = vmatprep.subr.mxu0 0.0
      %1094 = vmatpush1.msra.mxu0 0.0
      %1095 = vmatprep.subr.mxu0 0.0
      %1096 = vmatpush1.msra.mxu0 0.0
      %1097 = vmatprep.subr.mxu0 0.0
      %1098 = vmatpush1.msra.mxu0 0.0
      %1099 = vmatprep.subr.mxu0 0.0
      %1100 = vmatpush1.msra.mxu0 0.0
      %1101 = vmatprep.subr.mxu0 0.0
      %1102 = vmatpush1.msra.mxu0 0.0
      %1103 = vmatprep.subr.mxu0 0.0
      %1104 = vmatpush1.msra.mxu0 0.0
      %1105 = vmatprep.subr.mxu0 0.0
      %1106 = vmatpush1.msra.mxu0 0.0
      %1107 = vmatprep.subr.mxu0 0.0
      %1108 = vmatpush1.msra.mxu0 0.0
      %1109 = vmatprep.subr.mxu0 0.0
      %1110 = vmatpush1.msra.mxu0 0.0
      %1111 = vmatprep.subr.mxu0 0.0
      %1112 = vmatpush1.msra.mxu0 0.0
      %1113 = vmatprep.subr.mxu0 0.0
      %1114 = vmatpush1.msra.mxu0 0.0
      %1115 = vmatprep.subr.mxu0 0.0
      %1116 = vmatpush1.msra.mxu0 0.0
      %1117 = vmatprep.subr.mxu0 0.0
      %1118 = vmatpush1.msra.mxu0 0.0
      %1119 = vmatprep.subr.mxu0 0.0
      %1120 = vmatpush1.msra.mxu0 0.0
      %1121 = vmatprep.subr.mxu0 0.0
      %1122 = vmatpush1.msra.mxu0 0.0
      %1123 = vmatprep.subr.mxu0 0.0
      %1124 = vmatpush1.msra.mxu0 0.0
      %1125 = vmatprep.subr.mxu0 0.0
      %1126 = vmatpush1.msra.mxu0 0.0
      %1127 = vmatprep.subr.mxu0 0.0
      %1128 = vmatpush1.msra.mxu0 0.0
      %1129 = vmatprep.subr.mxu0 0.0
      %1130 = vmatpush1.msra.mxu0 0.0
      %1131 = vmatprep.subr.mxu0 0.0
      %1132 = vmatpush1.msra.mxu0 0.0
      %1133 = vmatprep.subr.mxu0 0.0
      %1134 = vmatpush1.msra.mxu0 0.0
      %1135 = vmatprep.subr.mxu0 0.0
      %1136 = vmatpush1.msra.mxu0 0.0
      %1137 = vmatprep.mubr.f32.mxu0 0.0
      %1138 = vmatmul.mubr.f32.gmra.mrb[0].mxu0 %v1067
      %v1139 = vpop.f32.mrb[0].mxu0
      %v1140 = vadd.f32 0.0, %v1139
      %v1141 = vpop.f32.mrb[0].mxu0
      %v1142 = vadd.f32 0.0, %v1141
      %1143 = vdwg.mxu0
      %s1144 = scalar_lea.vmem %s4, 10
      %v1145 = vld [vmem:[%s1144] sm:$0x3]
      %v1147 = vlaneseq
      %v1148 = vshrl.u32 %v1147, 7
      %v1149 = vsub.s32 0, %v1148
      %v1150 = vrot.slane %v1145, %v1149
      %v1151 = vlaneseq
      %v1152 = vshrl.u32 %v1151, 7
      %v1153 = vsub.s32 1, %v1152
      %v1154 = vrot.slane %v1145, %v1153
      %v1157 = vmul.f32 %v1140, %v1150
      %v1158 = vmul.f32 %v1142, %v1154
      %v1159 = vadd.f32 %v1048, %v1157
      %v1160 = vadd.f32 %v1049, %v1158
      %v1161 = vld [vmem:[#allocation3 + $0x4] sm:$0xff]
      %v1162 = vld [vmem:[#allocation3 + $0xc] sm:$0xf]
      %s1163 = scalar_lea.vmem %s279, 56
      %v1164 = vld [vmem:[%s1163] sm:$0xff]
      %v1167 = vcombine.high %v1161, %v1161
      %1168 = vrot.lane.b32.xlu0 %v1161, 112
      %v1169 = vpop.permute.xlu0 %1168
      %1170 = vrot.lane.b32.xlu0 %v1167, 112
      %v1171 = vpop.permute.xlu0 %1170
      %1172 = vrot.lane.b32.xlu0 %v1162, 112
      %v1173 = vpop.permute.xlu0 %1172
      %vm1174 = vcmask 916480
      %v1175 = vsel %vm1174, %v1169, %v1171
      %v1176 = vsel %vm1174, %v1171, %v1173
      %v1178 = vsel %vm330, %v1164, 0
      %v1180 = vsel %vm334, %v1175, 0
      %v1182 = vsel %vm334, %v1176, 0
      %1184 = vmatprep.subr.mxu0 %v1182
      %1185 = vmatpush1.msra.mxu0 %v1180
      %1186 = vmatprep.subr.mxu0 0.0
      %1187 = vmatpush1.msra.mxu0 0.0
      %1188 = vmatprep.subr.mxu0 0.0
      %1189 = vmatpush1.msra.mxu0 0.0
      %1190 = vmatprep.subr.mxu0 0.0
      %1191 = vmatpush1.msra.mxu0 0.0
      %1192 = vmatprep.subr.mxu0 0.0
      %1193 = vmatpush1.msra.mxu0 0.0
      %1194 = vmatprep.subr.mxu0 0.0
      %1195 = vmatpush1.msra.mxu0 0.0
      %1196 = vmatprep.subr.mxu0 0.0
      %1197 = vmatpush1.msra.mxu0 0.0
      %1198 = vmatprep.subr.mxu0 0.0
      %1199 = vmatpush1.msra.mxu0 0.0
      %1200 = vmatprep.subr.mxu0 0.0
      %1201 = vmatpush1.msra.mxu0 0.0
      %1202 = vmatprep.subr.mxu0 0.0
      %1203 = vmatpush1.msra.mxu0 0.0
      %1204 = vmatprep.subr.mxu0 0.0
      %1205 = vmatpush1.msra.mxu0 0.0
      %1206 = vmatprep.subr.mxu0 0.0
      %1207 = vmatpush1.msra.mxu0 0.0
      %1208 = vmatprep.subr.mxu0 0.0
      %1209 = vmatpush1.msra.mxu0 0.0
      %1210 = vmatprep.subr.mxu0 0.0
      %1211 = vmatpush1.msra.mxu0 0.0
      %1212 = vmatprep.subr.mxu0 0.0
      %1213 = vmatpush1.msra.mxu0 0.0
      %1214 = vmatprep.subr.mxu0 0.0
      %1215 = vmatpush1.msra.mxu0 0.0
      %1216 = vmatprep.subr.mxu0 0.0
      %1217 = vmatpush1.msra.mxu0 0.0
      %1218 = vmatprep.subr.mxu0 0.0
      %1219 = vmatpush1.msra.mxu0 0.0
      %1220 = vmatprep.subr.mxu0 0.0
      %1221 = vmatpush1.msra.mxu0 0.0
      %1222 = vmatprep.subr.mxu0 0.0
      %1223 = vmatpush1.msra.mxu0 0.0
      %1224 = vmatprep.subr.mxu0 0.0
      %1225 = vmatpush1.msra.mxu0 0.0
      %1226 = vmatprep.subr.mxu0 0.0
      %1227 = vmatpush1.msra.mxu0 0.0
      %1228 = vmatprep.subr.mxu0 0.0
      %1229 = vmatpush1.msra.mxu0 0.0
      %1230 = vmatprep.subr.mxu0 0.0
      %1231 = vmatpush1.msra.mxu0 0.0
      %1232 = vmatprep.subr.mxu0 0.0
      %1233 = vmatpush1.msra.mxu0 0.0
      %1234 = vmatprep.subr.mxu0 0.0
      %1235 = vmatpush1.msra.mxu0 0.0
      %1236 = vmatprep.subr.mxu0 0.0
      %1237 = vmatpush1.msra.mxu0 0.0
      %1238 = vmatprep.subr.mxu0 0.0
      %1239 = vmatpush1.msra.mxu0 0.0
      %1240 = vmatprep.subr.mxu0 0.0
      %1241 = vmatpush1.msra.mxu0 0.0
      %1242 = vmatprep.subr.mxu0 0.0
      %1243 = vmatpush1.msra.mxu0 0.0
      %1244 = vmatprep.subr.mxu0 0.0
      %1245 = vmatpush1.msra.mxu0 0.0
      %1246 = vmatprep.subr.mxu0 0.0
      %1247 = vmatpush1.msra.mxu0 0.0
      %1248 = vmatprep.mubr.f32.mxu0 0.0
      %1249 = vmatmul.mubr.f32.gmra.mrb[0].mxu0 %v1178
      %v1250 = vpop.f32.mrb[0].mxu0
      %v1251 = vadd.f32 0.0, %v1250
      %v1252 = vpop.f32.mrb[0].mxu0
      %v1253 = vadd.f32 0.0, %v1252
      %1254 = vdwg.mxu0
      %s1255 = scalar_lea.vmem %s4, 12
      %v1256 = vld [vmem:[%s1255] sm:$0x3]
      %v1258 = vlaneseq
      %v1259 = vshrl.u32 %v1258, 7
      %v1260 = vsub.s32 0, %v1259
      %v1261 = vrot.slane %v1256, %v1260
      %v1262 = vlaneseq
      %v1263 = vshrl.u32 %v1262, 7
      %v1264 = vsub.s32 1, %v1263
      %v1265 = vrot.slane %v1256, %v1264
      %v1268 = vmul.f32 %v1251, %v1261
      %v1269 = vmul.f32 %v1253, %v1265
      %v1270 = vadd.f32 %v1159, %v1268
      %v1271 = vadd.f32 %v1160, %v1269
      %v1272 = vld [vmem:[#allocation3 + $0x4] sm:$0xff]
      %v1273 = vld [vmem:[#allocation3 + $0xc] sm:$0xf]
      %s1274 = scalar_lea.vmem %s279, 64
      %v1275 = vld [vmem:[%s1274] sm:$0xff]
      %v1278 = vcombine.high %v1272, %v1272
      %1279 = vrot.lane.b32.xlu0 %v1272, 111
      %v1280 = vpop.permute.xlu0 %1279
      %1281 = vrot.lane.b32.xlu0 %v1278, 111
      %v1282 = vpop.permute.xlu0 %1281
      %1283 = vrot.lane.b32.xlu0 %v1273, 111
      %v1284 = vpop.permute.xlu0 %1283
      %vm1285 = vcmask 908288
      %v1286 = vsel %vm1285, %v1280, %v1282
      %v1287 = vsel %vm1285, %v1282, %v1284
      %v1289 = vsel %vm330, %v1275, 0
      %v1291 = vsel %vm334, %v1286, 0
      %v1293 = vsel %vm334, %v1287, 0
      %1295 = vmatprep.subr.mxu0 %v1293
      %1296 = vmatpush1.msra.mxu0 %v1291
      %1297 = vmatprep.subr.mxu0 0.0
      %1298 = vmatpush1.msra.mxu0 0.0
      %1299 = vmatprep.subr.mxu0 0.0
      %1300 = vmatpush1.msra.mxu0 0.0
      %1301 = vmatprep.subr.mxu0 0.0
      %1302 = vmatpush1.msra.mxu0 0.0
      %1303 = vmatprep.subr.mxu0 0.0
      %1304 = vmatpush1.msra.mxu0 0.0
      %1305 = vmatprep.subr.mxu0 0.0
      %1306 = vmatpush1.msra.mxu0 0.0
      %1307 = vmatprep.subr.mxu0 0.0
      %1308 = vmatpush1.msra.mxu0 0.0
      %1309 = vmatprep.subr.mxu0 0.0
      %1310 = vmatpush1.msra.mxu0 0.0
      %1311 = vmatprep.subr.mxu0 0.0
      %1312 = vmatpush1.msra.mxu0 0.0
      %1313 = vmatprep.subr.mxu0 0.0
      %1314 = vmatpush1.msra.mxu0 0.0
      %1315 = vmatprep.subr.mxu0 0.0
      %1316 = vmatpush1.msra.mxu0 0.0
      %1317 = vmatprep.subr.mxu0 0.0
      %1318 = vmatpush1.msra.mxu0 0.0
      %1319 = vmatprep.subr.mxu0 0.0
      %1320 = vmatpush1.msra.mxu0 0.0
      %1321 = vmatprep.subr.mxu0 0.0
      %1322 = vmatpush1.msra.mxu0 0.0
      %1323 = vmatprep.subr.mxu0 0.0
      %1324 = vmatpush1.msra.mxu0 0.0
      %1325 = vmatprep.subr.mxu0 0.0
      %1326 = vmatpush1.msra.mxu0 0.0
      %1327 = vmatprep.subr.mxu0 0.0
      %1328 = vmatpush1.msra.mxu0 0.0
      %1329 = vmatprep.subr.mxu0 0.0
      %1330 = vmatpush1.msra.mxu0 0.0
      %1331 = vmatprep.subr.mxu0 0.0
      %1332 = vmatpush1.msra.mxu0 0.0
      %1333 = vmatprep.subr.mxu0 0.0
      %1334 = vmatpush1.msra.mxu0 0.0
      %1335 = vmatprep.subr.mxu0 0.0
      %1336 = vmatpush1.msra.mxu0 0.0
      %1337 = vmatprep.subr.mxu0 0.0
      %1338 = vmatpush1.msra.mxu0 0.0
      %1339 = vmatprep.subr.mxu0 0.0
      %1340 = vmatpush1.msra.mxu0 0.0
      %1341 = vmatprep.subr.mxu0 0.0
      %1342 = vmatpush1.msra.mxu0 0.0
      %1343 = vmatprep.subr.mxu0 0.0
      %1344 = vmatpush1.msra.mxu0 0.0
      %1345 = vmatprep.subr.mxu0 0.0
      %1346 = vmatpush1.msra.mxu0 0.0
      %1347 = vmatprep.subr.mxu0 0.0
      %1348 = vmatpush1.msra.mxu0 0.0
      %1349 = vmatprep.subr.mxu0 0.0
      %1350 = vmatpush1.msra.mxu0 0.0
      %1351 = vmatprep.subr.mxu0 0.0
      %1352 = vmatpush1.msra.mxu0 0.0
      %1353 = vmatprep.subr.mxu0 0.0
      %1354 = vmatpush1.msra.mxu0 0.0
      %1355 = vmatprep.subr.mxu0 0.0
      %1356 = vmatpush1.msra.mxu0 0.0
      %1357 = vmatprep.subr.mxu0 0.0
      %1358 = vmatpush1.msra.mxu0 0.0
      %1359 = vmatprep.mubr.f32.mxu0 0.0
      %1360 = vmatmul.mubr.f32.gmra.mrb[0].mxu0 %v1289
      %v1361 = vpop.f32.mrb[0].mxu0
      %v1362 = vadd.f32 0.0, %v1361
      %v1363 = vpop.f32.mrb[0].mxu0
      %v1364 = vadd.f32 0.0, %v1363
      %1365 = vdwg.mxu0
      %s1366 = scalar_lea.vmem %s4, 14
      %v1367 = vld [vmem:[%s1366] sm:$0x3]
      %v1369 = vlaneseq
      %v1370 = vshrl.u32 %v1369, 7
      %v1371 = vsub.s32 0, %v1370
      %v1372 = vrot.slane %v1367, %v1371
      %v1373 = vlaneseq
      %v1374 = vshrl.u32 %v1373, 7
      %v1375 = vsub.s32 1, %v1374
      %v1376 = vrot.slane %v1367, %v1375
      %v1379 = vmul.f32 %v1362, %v1372
      %v1380 = vmul.f32 %v1364, %v1376
      %v1381 = vadd.f32 %v1270, %v1379
      %v1382 = vadd.f32 %v1271, %v1380
      %v1383 = vld [vmem:[#allocation2 + $0x10] sm:$0xff]
      %v1384 = vld [vmem:[#allocation2 + $0x18] sm:$0xff]
      %v1385 = vadd.f32 %v1383, %v1381
      %v1386 = vadd.f32 %v1384, %v1382
      %1387 = vst [vmem:[#allocation2 + $0x10] sm:$0xff] %v1385
      %1388 = vst [vmem:[#allocation2 + $0x18] sm:$0xff] %v1386
      // Predicated region
      $region49: #{aspp_forward.1} parent=39 // pred_check
        %p1389 = pneg %p285
      $region50: #{aspp_forward.1} parent=39 // pred_check_branch
        %1391 = sbr.rel (%p1389) target = $region52
      $region51: #{aspp_forward.1} parent=39 // pred_region
        %v1392 = vld [vmem:[#allocation2 + $0x10] sm:$0xff]
        %v1393 = vld [vmem:[#allocation2 + $0x18] sm:$0xff]
        %v1394 = vmax.f32 %v1392, 0.0
        %v1395 = vmax.f32 %v1393, 0.0
        %1396 = vst [vmem:[%s284 + $0x10] sm:$0xff] %v1394
        %1397 = vst [vmem:[%s284 + $0x18] sm:$0xff] %v1395
      $region52: #{aspp_forward.1} parent=39 // pred_fallthru
        _
      %s1398 = scalar_lea.vmem %s279, 104
      %v1399 = vld [vmem:[%s1398] sm:$0xff]
      %v1400 = vld [vmem:[#allocation3] sm:$0xff]
      %v1401 = vld [vmem:[#allocation3 + $0x8] sm:$0xf]
      %s1402 = scalar_lea.vmem %s279, 72
      %v1403 = vld [vmem:[%s1402] sm:$0xff]
      %v1406 = vcombine.high %v1400, %v1400
      %1407 = vrot.lane.b32.xlu0 %v1400, 34
      %v1408 = vpop.permute.xlu0 %1407
      %1409 = vrot.lane.b32.xlu0 %v1406, 34
      %v1410 = vpop.permute.xlu0 %1409
      %1411 = vrot.lane.b32.xlu0 %v1401, 34
      %v1412 = vpop.permute.xlu0 %1411
      %vm1413 = vcmask 277504
      %v1414 = vsel %vm1413, %v1408, %v1410
      %v1415 = vsel %vm1413, %v1410, %v1412
      %v1417 = vsel %vm330, %v1403, 0
      %v1419 = vsel %vm334, %v1414, 0
      %v1421 = vsel %vm334, %v1415, 0
      %1423 = vmatprep.subr.mxu0 %v1421
      %1424 = vmatpush1.msra.mxu0 %v1419
      %1425 = vmatprep.subr.mxu0 0.0
      %1426 = vmatpush1.msra.mxu0 0.0
      %1427 = vmatprep.subr.mxu0 0.0
      %1428 = vmatpush1.msra.mxu0 0.0
      %1429 = vmatprep.subr.mxu0 0.0
      %1430 = vmatpush1.msra.mxu0 0.0
      %1431 = vmatprep.subr.mxu0 0.0
      %1432 = vmatpush1.msra.mxu0 0.0
      %1433 = vmatprep.subr.mxu0 0.0
      %1434 = vmatpush1.msra.mxu0 0.0
      %1435 = vmatprep.subr.mxu0 0.0
      %1436 = vmatpush1.msra.mxu0 0.0
      %1437 = vmatprep.subr.mxu0 0.0
      %1438 = vmatpush1.msra.mxu0 0.0
      %1439 = vmatprep.subr.mxu0 0.0
      %1440 = vmatpush1.msra.mxu0 0.0
      %1441 = vmatprep.subr.mxu0 0.0
      %1442 = vmatpush1.msra.mxu0 0.0
      %1443 = vmatprep.subr.mxu0 0.0
      %1444 = vmatpush1.msra.mxu0 0.0
      %1445 = vmatprep.subr.mxu0 0.0
      %1446 = vmatpush1.msra.mxu0 0.0
      %1447 = vmatprep.subr.mxu0 0.0
      %1448 = vmatpush1.msra.mxu0 0.0
      %1449 = vmatprep.subr.mxu0 0.0
      %1450 = vmatpush1.msra.mxu0 0.0
      %1451 = vmatprep.subr.mxu0 0.0
      %1452 = vmatpush1.msra.mxu0 0.0
      %1453 = vmatprep.subr.mxu0 0.0
      %1454 = vmatpush1.msra.mxu0 0.0
      %1455 = vmatprep.subr.mxu0 0.0
      %1456 = vmatpush1.msra.mxu0 0.0
      %1457 = vmatprep.subr.mxu0 0.0
      %1458 = vmatpush1.msra.mxu0 0.0
      %1459 = vmatprep.subr.mxu0 0.0
      %1460 = vmatpush1.msra.mxu0 0.0
      %1461 = vmatprep.subr.mxu0 0.0
      %1462 = vmatpush1.msra.mxu0 0.0
      %1463 = vmatprep.subr.mxu0 0.0
      %1464 = vmatpush1.msra.mxu0 0.0
      %1465 = vmatprep.subr.mxu0 0.0
      %1466 = vmatpush1.msra.mxu0 0.0
      %1467 = vmatprep.subr.mxu0 0.0
      %1468 = vmatpush1.msra.mxu0 0.0
      %1469 = vmatprep.subr.mxu0 0.0
      %1470 = vmatpush1.msra.mxu0 0.0
      %1471 = vmatprep.subr.mxu0 0.0
      %1472 = vmatpush1.msra.mxu0 0.0
      %1473 = vmatprep.subr.mxu0 0.0
      %1474 = vmatpush1.msra.mxu0 0.0
      %1475 = vmatprep.subr.mxu0 0.0
      %1476 = vmatpush1.msra.mxu0 0.0
      %1477 = vmatprep.subr.mxu0 0.0
      %1478 = vmatpush1.msra.mxu0 0.0
      %1479 = vmatprep.subr.mxu0 0.0
      %1480 = vmatpush1.msra.mxu0 0.0
      %1481 = vmatprep.subr.mxu0 0.0
      %1482 = vmatpush1.msra.mxu0 0.0
      %1483 = vmatprep.subr.mxu0 0.0
      %1484 = vmatpush1.msra.mxu0 0.0
      %1485 = vmatprep.subr.mxu0 0.0
      %1486 = vmatpush1.msra.mxu0 0.0
      %1487 = vmatprep.mubr.f32.mxu0 0.0
      %1488 = vmatmul.mubr.f32.gmra.mrb[0].mxu0 %v1417
      %v1489 = vpop.f32.mrb[0].mxu0
      %v1490 = vadd.f32 0.0, %v1489
      %v1491 = vpop.f32.mrb[0].mxu0
      %v1492 = vadd.f32 0.0, %v1491
      %1493 = vdwg.mxu0
      %s1494 = scalar_lea.vmem %s4, 16
      %v1495 = vld [vmem:[%s1494] sm:$0x3]
      %v1497 = vlaneseq
      %v1498 = vshrl.u32 %v1497, 7
      %v1499 = vsub.s32 0, %v1498
      %v1500 = vrot.slane %v1495, %v1499
      %v1501 = vlaneseq
      %v1502 = vshrl.u32 %v1501, 7
      %v1503 = vsub.s32 1, %v1502
      %v1504 = vrot.slane %v1495, %v1503
      %v1507 = vmul.f32 %v1490, %v1500
      %v1508 = vmul.f32 %v1492, %v1504
      %v1510 = vsel %vm330, %v1399, 0
      %1512 = vmatprep.subr.mxu0 %v337
      %1513 = vmatpush1.msra.mxu0 %v335
      %1514 = vmatprep.subr.mxu0 0.0
      %1515 = vmatpush1.msra.mxu0 0.0
      %1516 = vmatprep.subr.mxu0 0.0
      %1517 = vmatpush1.msra.mxu0 0.0
      %1518 = vmatprep.subr.mxu0 0.0
      %1519 = vmatpush1.msra.mxu0 0.0
      %1520 = vmatprep.subr.mxu0 0.0
      %1521 = vmatpush1.msra.mxu0 0.0
      %1522 = vmatprep.subr.mxu0 0.0
      %1523 = vmatpush1.msra.mxu0 0.0
      %1524 = vmatprep.subr.mxu0 0.0
      %1525 = vmatpush1.msra.mxu0 0.0
      %1526 = vmatprep.subr.mxu0 0.0
      %1527 = vmatpush1.msra.mxu0 0.0
      %1528 = vmatprep.subr.mxu0 0.0
      %1529 = vmatpush1.msra.mxu0 0.0
      %1530 = vmatprep.subr.mxu0 0.0
      %1531 = vmatpush1.msra.mxu0 0.0
      %1532 = vmatprep.subr.mxu0 0.0
      %1533 = vmatpush1.msra.mxu0 0.0
      %1534 = vmatprep.subr.mxu0 0.0
      %1535 = vmatpush1.msra.mxu0 0.0
      %1536 = vmatprep.subr.mxu0 0.0
      %1537 = vmatpush1.msra.mxu0 0.0
      %1538 = vmatprep.subr.mxu0 0.0
      %1539 = vmatpush1.msra.mxu0 0.0
      %1540 = vmatprep.subr.mxu0 0.0
      %1541 = vmatpush1.msra.mxu0 0.0
      %1542 = vmatprep.subr.mxu0 0.0
      %1543 = vmatpush1.msra.mxu0 0.0
      %1544 = vmatprep.subr.mxu0 0.0
      %1545 = vmatpush1.msra.mxu0 0.0
      %1546 = vmatprep.subr.mxu0 0.0
      %1547 = vmatpush1.msra.mxu0 0.0
      %1548 = vmatprep.subr.mxu0 0.0
      %1549 = vmatpush1.msra.mxu0 0.0
      %1550 = vmatprep.subr.mxu0 0.0
      %1551 = vmatpush1.msra.mxu0 0.0
      %1552 = vmatprep.subr.mxu0 0.0
      %1553 = vmatpush1.msra.mxu0 0.0
      %1554 = vmatprep.subr.mxu0 0.0
      %1555 = vmatpush1.msra.mxu0 0.0
      %1556 = vmatprep.subr.mxu0 0.0
      %1557 = vmatpush1.msra.mxu0 0.0
      %1558 = vmatprep.subr.mxu0 0.0
      %1559 = vmatpush1.msra.mxu0 0.0
      %1560 = vmatprep.subr.mxu0 0.0
      %1561 = vmatpush1.msra.mxu0 0.0
      %1562 = vmatprep.subr.mxu0 0.0
      %1563 = vmatpush1.msra.mxu0 0.0
      %1564 = vmatprep.subr.mxu0 0.0
      %1565 = vmatpush1.msra.mxu0 0.0
      %1566 = vmatprep.subr.mxu0 0.0
      %1567 = vmatpush1.msra.mxu0 0.0
      %1568 = vmatprep.subr.mxu0 0.0
      %1569 = vmatpush1.msra.mxu0 0.0
      %1570 = vmatprep.subr.mxu0 0.0
      %1571 = vmatpush1.msra.mxu0 0.0
      %1572 = vmatprep.subr.mxu0 0.0
      %1573 = vmatpush1.msra.mxu0 0.0
      %1574 = vmatprep.subr.mxu0 0.0
      %1575 = vmatpush1.msra.mxu0 0.0
      %1576 = vmatprep.mubr.f32.mxu0 0.0
      %1577 = vmatmul.mubr.f32.gmra.mrb[0].mxu0 %v1510
      %v1578 = vpop.f32.mrb[0].mxu0
      %v1579 = vadd.f32 %v1507, %v1578
      %v1580 = vpop.f32.mrb[0].mxu0
      %v1581 = vadd.f32 %v1508, %v1580
      %1582 = vdwg.mxu0
      %v1583 = vld [vmem:[#allocation3] sm:$0xff]
      %v1584 = vld [vmem:[#allocation3 + $0x8] sm:$0xf]
      %s1585 = scalar_lea.vmem %s279, 80
      %v1586 = vld [vmem:[%s1585] sm:$0xff]
      %v1589 = vcombine.high %v1583, %v1583
      %1590 = vrot.lane.b32.xlu0 %v1583, 32
      %v1591 = vpop.permute.xlu0 %1590
      %1592 = vrot.lane.b32.xlu0 %v1589, 32
      %v1593 = vpop.permute.xlu0 %1592
      %1594 = vrot.lane.b32.xlu0 %v1584, 32
      %v1595 = vpop.permute.xlu0 %1594
      %vm1596 = vcmask 261120
      %v1597 = vsel %vm1596, %v1591, %v1593
      %v1598 = vsel %vm1596, %v1593, %v1595
      %v1600 = vsel %vm330, %v1586, 0
      %v1602 = vsel %vm334, %v1597, 0
      %v1604 = vsel %vm334, %v1598, 0
      %1606 = vmatprep.subr.mxu0 %v1604
      %1607 = vmatpush1.msra.mxu0 %v1602
      %1608 = vmatprep.subr.mxu0 0.0
      %1609 = vmatpush1.msra.mxu0 0.0
      %1610 = vmatprep.subr.mxu0 0.0
      %1611 = vmatpush1.msra.mxu0 0.0
      %1612 = vmatprep.subr.mxu0 0.0
      %1613 = vmatpush1.msra.mxu0 0.0
      %1614 = vmatprep.subr.mxu0 0.0
      %1615 = vmatpush1.msra.mxu0 0.0
      %1616 = vmatprep.subr.mxu0 0.0
      %1617 = vmatpush1.msra.mxu0 0.0
      %1618 = vmatprep.subr.mxu0 0.0
      %1619 = vmatpush1.msra.mxu0 0.0
      %1620 = vmatprep.subr.mxu0 0.0
      %1621 = vmatpush1.msra.mxu0 0.0
      %1622 = vmatprep.subr.mxu0 0.0
      %1623 = vmatpush1.msra.mxu0 0.0
      %1624 = vmatprep.subr.mxu0 0.0
      %1625 = vmatpush1.msra.mxu0 0.0
      %1626 = vmatprep.subr.mxu0 0.0
      %1627 = vmatpush1.msra.mxu0 0.0
      %1628 = vmatprep.subr.mxu0 0.0
      %1629 = vmatpush1.msra.mxu0 0.0
      %1630 = vmatprep.subr.mxu0 0.0
      %1631 = vmatpush1.msra.mxu0 0.0
      %1632 = vmatprep.subr.mxu0 0.0
      %1633 = vmatpush1.msra.mxu0 0.0
      %1634 = vmatprep.subr.mxu0 0.0
      %1635 = vmatpush1.msra.mxu0 0.0
      %1636 = vmatprep.subr.mxu0 0.0
      %1637 = vmatpush1.msra.mxu0 0.0
      %1638 = vmatprep.subr.mxu0 0.0
      %1639 = vmatpush1.msra.mxu0 0.0
      %1640 = vmatprep.subr.mxu0 0.0
      %1641 = vmatpush1.msra.mxu0 0.0
      %1642 = vmatprep.subr.mxu0 0.0
      %1643 = vmatpush1.msra.mxu0 0.0
      %1644 = vmatprep.subr.mxu0 0.0
      %1645 = vmatpush1.msra.mxu0 0.0
      %1646 = vmatprep.subr.mxu0 0.0
      %1647 = vmatpush1.msra.mxu0 0.0
      %1648 = vmatprep.subr.mxu0 0.0
      %1649 = vmatpush1.msra.mxu0 0.0
      %1650 = vmatprep.subr.mxu0 0.0
      %1651 = vmatpush1.msra.mxu0 0.0
      %1652 = vmatprep.subr.mxu0 0.0
      %1653 = vmatpush1.msra.mxu0 0.0
      %1654 = vmatprep.subr.mxu0 0.0
      %1655 = vmatpush1.msra.mxu0 0.0
      %1656 = vmatprep.subr.mxu0 0.0
      %1657 = vmatpush1.msra.mxu0 0.0
      %1658 = vmatprep.subr.mxu0 0.0
      %1659 = vmatpush1.msra.mxu0 0.0
      %1660 = vmatprep.subr.mxu0 0.0
      %1661 = vmatpush1.msra.mxu0 0.0
      %1662 = vmatprep.subr.mxu0 0.0
      %1663 = vmatpush1.msra.mxu0 0.0
      %1664 = vmatprep.subr.mxu0 0.0
      %1665 = vmatpush1.msra.mxu0 0.0
      %1666 = vmatprep.subr.mxu0 0.0
      %1667 = vmatpush1.msra.mxu0 0.0
      %1668 = vmatprep.subr.mxu0 0.0
      %1669 = vmatpush1.msra.mxu0 0.0
      %1670 = vmatprep.mubr.f32.mxu0 0.0
      %1671 = vmatmul.mubr.f32.gmra.mrb[0].mxu0 %v1600
      %v1672 = vpop.f32.mrb[0].mxu0
      %v1673 = vadd.f32 0.0, %v1672
      %v1674 = vpop.f32.mrb[0].mxu0
      %v1675 = vadd.f32 0.0, %v1674
      %1676 = vdwg.mxu0
      %s1677 = scalar_lea.vmem %s4, 18
      %v1678 = vld [vmem:[%s1677] sm:$0x3]
      %v1680 = vlaneseq
      %v1681 = vshrl.u32 %v1680, 7
      %v1682 = vsub.s32 0, %v1681
      %v1683 = vrot.slane %v1678, %v1682
      %v1684 = vlaneseq
      %v1685 = vshrl.u32 %v1684, 7
      %v1686 = vsub.s32 1, %v1685
      %v1687 = vrot.slane %v1678, %v1686
      %v1690 = vmul.f32 %v1673, %v1683
      %v1691 = vmul.f32 %v1675, %v1687
      %v1692 = vadd.f32 %v1579, %v1690
      %v1693 = vadd.f32 %v1581, %v1691
      %v1694 = vld [vmem:[#allocation3] sm:$0xff]
      %v1695 = vld [vmem:[#allocation3 + $0x8] sm:$0xf]
      %s1696 = scalar_lea.vmem %s279, 88
      %v1697 = vld [vmem:[%s1696] sm:$0xff]
      %v1700 = vcombine.high %v1694, %v1694
      %1701 = vrot.lane.b32.xlu0 %v1694, 30
      %v1702 = vpop.permute.xlu0 %1701
      %1703 = vrot.lane.b32.xlu0 %v1700, 30
      %v1704 = vpop.permute.xlu0 %1703
      %1705 = vrot.lane.b32.xlu0 %v1695, 30
      %v1706 = vpop.permute.xlu0 %1705
      %vm1707 = vcmask 244736
      %v1708 = vsel %vm1707, %v1702, %v1704
      %v1709 = vsel %vm1707, %v1704, %v1706
      %v1711 = vsel %vm330, %v1697, 0
      %v1713 = vsel %vm334, %v1708, 0
      %v1715 = vsel %vm334, %v1709, 0
      %1717 = vmatprep.subr.mxu0 %v1715
      %1718 = vmatpush1.msra.mxu0 %v1713
      %1719 = vmatprep.subr.mxu0 0.0
      %1720 = vmatpush1.msra.mxu0 0.0
      %1721 = vmatprep.subr.mxu0 0.0
      %1722 = vmatpush1.msra.mxu0 0.0
      %1723 = vmatprep.subr.mxu0 0.0
      %1724 = vmatpush1.msra.mxu0 0.0
      %1725 = vmatprep.subr.mxu0 0.0
      %1726 = vmatpush1.msra.mxu0 0.0
      %1727 = vmatprep.subr.mxu0 0.0
      %1728 = vmatpush1.msra.mxu0 0.0
      %1729 = vmatprep.subr.mxu0 0.0
      %1730 = vmatpush1.msra.mxu0 0.0
      %1731 = vmatprep.subr.mxu0 0.0
      %1732 = vmatpush1.msra.mxu0 0.0
      %1733 = vmatprep.subr.mxu0 0.0
      %1734 = vmatpush1.msra.mxu0 0.0
      %1735 = vmatprep.subr.mxu0 0.0
      %1736 = vmatpush1.msra.mxu0 0.0
      %1737 = vmatprep.subr.mxu0 0.0
      %1738 = vmatpush1.msra.mxu0 0.0
      %1739 = vmatprep.subr.mxu0 0.0
      %1740 = vmatpush1.msra.mxu0 0.0
      %1741 = vmatprep.subr.mxu0 0.0
      %1742 = vmatpush1.msra.mxu0 0.0
      %1743 = vmatprep.subr.mxu0 0.0
      %1744 = vmatpush1.msra.mxu0 0.0
      %1745 = vmatprep.subr.mxu0 0.0
      %1746 = vmatpush1.msra.mxu0 0.0
      %1747 = vmatprep.subr.mxu0 0.0
      %1748 = vmatpush1.msra.mxu0 0.0
      %1749 = vmatprep.subr.mxu0 0.0
      %1750 = vmatpush1.msra.mxu0 0.0
      %1751 = vmatprep.subr.mxu0 0.0
      %1752 = vmatpush1.msra.mxu0 0.0
      %1753 = vmatprep.subr.mxu0 0.0
      %1754 = vmatpush1.msra.mxu0 0.0
      %1755 = vmatprep.subr.mxu0 0.0
      %1756 = vmatpush1.msra.mxu0 0.0
      %1757 = vmatprep.subr.mxu0 0.0
      %1758 = vmatpush1.msra.mxu0 0.0
      %1759 = vmatprep.subr.mxu0 0.0
      %1760 = vmatpush1.msra.mxu0 0.0
      %1761 = vmatprep.subr.mxu0 0.0
      %1762 = vmatpush1.msra.mxu0 0.0
      %1763 = vmatprep.subr.mxu0 0.0
      %1764 = vmatpush1.msra.mxu0 0.0
      %1765 = vmatprep.subr.mxu0 0.0
      %1766 = vmatpush1.msra.mxu0 0.0
      %1767 = vmatprep.subr.mxu0 0.0
      %1768 = vmatpush1.msra.mxu0 0.0
      %1769 = vmatprep.subr.mxu0 0.0
      %1770 = vmatpush1.msra.mxu0 0.0
      %1771 = vmatprep.subr.mxu0 0.0
      %1772 = vmatpush1.msra.mxu0 0.0
      %1773 = vmatprep.subr.mxu0 0.0
      %1774 = vmatpush1.msra.mxu0 0.0
      %1775 = vmatprep.subr.mxu0 0.0
      %1776 = vmatpush1.msra.mxu0 0.0
      %1777 = vmatprep.subr.mxu0 0.0
      %1778 = vmatpush1.msra.mxu0 0.0
      %1779 = vmatprep.subr.mxu0 0.0
      %1780 = vmatpush1.msra.mxu0 0.0
      %1781 = vmatprep.mubr.f32.mxu0 0.0
      %1782 = vmatmul.mubr.f32.gmra.mrb[0].mxu0 %v1711
      %v1783 = vpop.f32.mrb[0].mxu0
      %v1784 = vadd.f32 0.0, %v1783
      %v1785 = vpop.f32.mrb[0].mxu0
      %v1786 = vadd.f32 0.0, %v1785
      %1787 = vdwg.mxu0
      %s1788 = scalar_lea.vmem %s4, 20
      %v1789 = vld [vmem:[%s1788] sm:$0x3]
      %v1791 = vlaneseq
      %v1792 = vshrl.u32 %v1791, 7
      %v1793 = vsub.s32 0, %v1792
      %v1794 = vrot.slane %v1789, %v1793
      %v1795 = vlaneseq
      %v1796 = vshrl.u32 %v1795, 7
      %v1797 = vsub.s32 1, %v1796
      %v1798 = vrot.slane %v1789, %v1797
      %v1801 = vmul.f32 %v1784, %v1794
      %v1802 = vmul.f32 %v1786, %v1798
      %v1803 = vadd.f32 %v1692, %v1801
      %v1804 = vadd.f32 %v1693, %v1802
      %v1805 = vld [vmem:[#allocation3] sm:$0xff]
      %v1806 = vld [vmem:[#allocation3 + $0x8] sm:$0xf]
      %s1807 = scalar_lea.vmem %s279, 96
      %v1808 = vld [vmem:[%s1807] sm:$0xff]
      %v1811 = vcombine.high %v1805, %v1805
      %1812 = vrot.lane.b32.xlu0 %v1805, 2
      %v1813 = vpop.permute.xlu0 %1812
      %1814 = vrot.lane.b32.xlu0 %v1811, 2
      %v1815 = vpop.permute.xlu0 %1814
      %1816 = vrot.lane.b32.xlu0 %v1806, 2
      %v1817 = vpop.permute.xlu0 %1816
      %vm1818 = vcmask 15360
      %v1819 = vsel %vm1818, %v1813, %v1815
      %v1820 = vsel %vm1818, %v1815, %v1817
      %v1822 = vsel %vm330, %v1808, 0
      %v1824 = vsel %vm334, %v1819, 0
      %v1826 = vsel %vm334, %v1820, 0
      %1828 = vmatprep.subr.mxu0 %v1826
      %1829 = vmatpush1.msra.mxu0 %v1824
      %1830 = vmatprep.subr.mxu0 0.0
      %1831 = vmatpush1.msra.mxu0 0.0
      %1832 = vmatprep.subr.mxu0 0.0
      %1833 = vmatpush1.msra.mxu0 0.0
      %1834 = vmatprep.subr.mxu0 0.0
      %1835 = vmatpush1.msra.mxu0 0.0
      %1836 = vmatprep.subr.mxu0 0.0
      %1837 = vmatpush1.msra.mxu0 0.0
      %1838 = vmatprep.subr.mxu0 0.0
      %1839 = vmatpush1.msra.mxu0 0.0
      %1840 = vmatprep.subr.mxu0 0.0
      %1841 = vmatpush1.msra.mxu0 0.0
      %1842 = vmatprep.subr.mxu0 0.0
      %1843 = vmatpush1.msra.mxu0 0.0
      %1844 = vmatprep.subr.mxu0 0.0
      %1845 = vmatpush1.msra.mxu0 0.0
      %1846 = vmatprep.subr.mxu0 0.0
      %1847 = vmatpush1.msra.mxu0 0.0
      %1848 = vmatprep.subr.mxu0 0.0
      %1849 = vmatpush1.msra.mxu0 0.0
      %1850 = vmatprep.subr.mxu0 0.0
      %1851 = vmatpush1.msra.mxu0 0.0
      %1852 = vmatprep.subr.mxu0 0.0
      %1853 = vmatpush1.msra.mxu0 0.0
      %1854 = vmatprep.subr.mxu0 0.0
      %1855 = vmatpush1.msra.mxu0 0.0
      %1856 = vmatprep.subr.mxu0 0.0
      %1857 = vmatpush1.msra.mxu0 0.0
      %1858 = vmatprep.subr.mxu0 0.0
      %1859 = vmatpush1.msra.mxu0 0.0
      %1860 = vmatprep.subr.mxu0 0.0
      %1861 = vmatpush1.msra.mxu0 0.0
      %1862 = vmatprep.subr.mxu0 0.0
      %1863 = vmatpush1.msra.mxu0 0.0
      %1864 = vmatprep.subr.mxu0 0.0
      %1865 = vmatpush1.msra.mxu0 0.0
      %1866 = vmatprep.subr.mxu0 0.0
      %1867 = vmatpush1.msra.mxu0 0.0
      %1868 = vmatprep.subr.mxu0 0.0
      %1869 = vmatpush1.msra.mxu0 0.0
      %1870 = vmatprep.subr.mxu0 0.0
      %1871 = vmatpush1.msra.mxu0 0.0
      %1872 = vmatprep.subr.mxu0 0.0
      %1873 = vmatpush1.msra.mxu0 0.0
      %1874 = vmatprep.subr.mxu0 0.0
      %1875 = vmatpush1.msra.mxu0 0.0
      %1876 = vmatprep.subr.mxu0 0.0
      %1877 = vmatpush1.msra.mxu0 0.0
      %1878 = vmatprep.subr.mxu0 0.0
      %1879 = vmatpush1.msra.mxu0 0.0
      %1880 = vmatprep.subr.mxu0 0.0
      %1881 = vmatpush1.msra.mxu0 0.0
      %1882 = vmatprep.subr.mxu0 0.0
      %1883 = vmatpush1.msra.mxu0 0.0
      %1884 = vmatprep.subr.mxu0 0.0
      %1885 = vmatpush1.msra.mxu0 0.0
      %1886 = vmatprep.subr.mxu0 0.0
      %1887 = vmatpush1.msra.mxu0 0.0
      %1888 = vmatprep.subr.mxu0 0.0
      %1889 = vmatpush1.msra.mxu0 0.0
      %1890 = vmatprep.subr.mxu0 0.0
      %1891 = vmatpush1.msra.mxu0 0.0
      %1892 = vmatprep.mubr.f32.mxu0 0.0
      %1893 = vmatmul.mubr.f32.gmra.mrb[0].mxu0 %v1822
      %v1894 = vpop.f32.mrb[0].mxu0
      %v1895 = vadd.f32 0.0, %v1894
      %v1896 = vpop.f32.mrb[0].mxu0
      %v1897 = vadd.f32 0.0, %v1896
      %1898 = vdwg.mxu0
      %s1899 = scalar_lea.vmem %s4, 22
      %v1900 = vld [vmem:[%s1899] sm:$0x3]
      %v1902 = vlaneseq
      %v1903 = vshrl.u32 %v1902, 7
      %v1904 = vsub.s32 0, %v1903
      %v1905 = vrot.slane %v1900, %v1904
      %v1906 = vlaneseq
      %v1907 = vshrl.u32 %v1906, 7
      %v1908 = vsub.s32 1, %v1907
      %v1909 = vrot.slane %v1900, %v1908
      %v1912 = vmul.f32 %v1895, %v1905
      %v1913 = vmul.f32 %v1897, %v1909
      %v1914 = vadd.f32 %v1803, %v1912
      %v1915 = vadd.f32 %v1804, %v1913
      %v1916 = vld [vmem:[#allocation3 + $0x4] sm:$0xff]
      %v1917 = vld [vmem:[#allocation3 + $0xc] sm:$0xf]
      %s1918 = scalar_lea.vmem %s279, 112
      %v1919 = vld [vmem:[%s1918] sm:$0xff]
      %v1922 = vcombine.high %v1916, %v1916
      %1923 = vrot.lane.b32.xlu0 %v1916, 126
      %v1924 = vpop.permute.xlu0 %1923
      %1925 = vrot.lane.b32.xlu0 %v1922, 126
      %v1926 = vpop.permute.xlu0 %1925
      %1927 = vrot.lane.b32.xlu0 %v1917, 126
      %v1928 = vpop.permute.xlu0 %1927
      %vm1929 = vcmask 1031168
      %v1930 = vsel %vm1929, %v1924, %v1926
      %v1931 = vsel %vm1929, %v1926, %v1928
      %v1933 = vsel %vm330, %v1919, 0
      %v1935 = vsel %vm334, %v1930, 0
      %v1937 = vsel %vm334, %v1931, 0
      %1939 = vmatprep.subr.mxu0 %v1937
      %1940 = vmatpush1.msra.mxu0 %v1935
      %1941 = vmatprep.subr.mxu0 0.0
      %1942 = vmatpush1.msra.mxu0 0.0
      %1943 = vmatprep.subr.mxu0 0.0
      %1944 = vmatpush1.msra.mxu0 0.0
      %1945 = vmatprep.subr.mxu0 0.0
      %1946 = vmatpush1.msra.mxu0 0.0
      %1947 = vmatprep.subr.mxu0 0.0
      %1948 = vmatpush1.msra.mxu0 0.0
      %1949 = vmatprep.subr.mxu0 0.0
      %1950 = vmatpush1.msra.mxu0 0.0
      %1951 = vmatprep.subr.mxu0 0.0
      %1952 = vmatpush1.msra.mxu0 0.0
      %1953 = vmatprep.subr.mxu0 0.0
      %1954 = vmatpush1.msra.mxu0 0.0
      %1955 = vmatprep.subr.mxu0 0.0
      %1956 = vmatpush1.msra.mxu0 0.0
      %1957 = vmatprep.subr.mxu0 0.0
      %1958 = vmatpush1.msra.mxu0 0.0
      %1959 = vmatprep.subr.mxu0 0.0
      %1960 = vmatpush1.msra.mxu0 0.0
      %1961 = vmatprep.subr.mxu0 0.0
      %1962 = vmatpush1.msra.mxu0 0.0
      %1963 = vmatprep.subr.mxu0 0.0
      %1964 = vmatpush1.msra.mxu0 0.0
      %1965 = vmatprep.subr.mxu0 0.0
      %1966 = vmatpush1.msra.mxu0 0.0
      %1967 = vmatprep.subr.mxu0 0.0
      %1968 = vmatpush1.msra.mxu0 0.0
      %1969 = vmatprep.subr.mxu0 0.0
      %1970 = vmatpush1.msra.mxu0 0.0
      %1971 = vmatprep.subr.mxu0 0.0
      %1972 = vmatpush1.msra.mxu0 0.0
      %1973 = vmatprep.subr.mxu0 0.0
      %1974 = vmatpush1.msra.mxu0 0.0
      %1975 = vmatprep.subr.mxu0 0.0
      %1976 = vmatpush1.msra.mxu0 0.0
      %1977 = vmatprep.subr.mxu0 0.0
      %1978 = vmatpush1.msra.mxu0 0.0
      %1979 = vmatprep.subr.mxu0 0.0
      %1980 = vmatpush1.msra.mxu0 0.0
      %1981 = vmatprep.subr.mxu0 0.0
      %1982 = vmatpush1.msra.mxu0 0.0
      %1983 = vmatprep.subr.mxu0 0.0
      %1984 = vmatpush1.msra.mxu0 0.0
      %1985 = vmatprep.subr.mxu0 0.0
      %1986 = vmatpush1.msra.mxu0 0.0
      %1987 = vmatprep.subr.mxu0 0.0
      %1988 = vmatpush1.msra.mxu0 0.0
      %1989 = vmatprep.subr.mxu0 0.0
      %1990 = vmatpush1.msra.mxu0 0.0
      %1991 = vmatprep.subr.mxu0 0.0
      %1992 = vmatpush1.msra.mxu0 0.0
      %1993 = vmatprep.subr.mxu0 0.0
      %1994 = vmatpush1.msra.mxu0 0.0
      %1995 = vmatprep.subr.mxu0 0.0
      %1996 = vmatpush1.msra.mxu0 0.0
      %1997 = vmatprep.subr.mxu0 0.0
      %1998 = vmatpush1.msra.mxu0 0.0
      %1999 = vmatprep.subr.mxu0 0.0
      %2000 = vmatpush1.msra.mxu0 0.0
      %2001 = vmatprep.subr.mxu0 0.0
      %2002 = vmatpush1.msra.mxu0 0.0
      %2003 = vmatprep.mubr.f32.mxu0 0.0
      %2004 = vmatmul.mubr.f32.gmra.mrb[0].mxu0 %v1933
      %v2005 = vpop.f32.mrb[0].mxu0
      %v2006 = vadd.f32 0.0, %v2005
      %v2007 = vpop.f32.mrb[0].mxu0
      %v2008 = vadd.f32 0.0, %v2007
      %2009 = vdwg.mxu0
      %s2010 = scalar_lea.vmem %s4, 24
      %v2011 = vld [vmem:[%s2010] sm:$0x3]
      %v2013 = vlaneseq
      %v2014 = vshrl.u32 %v2013, 7
      %v2015 = vsub.s32 0, %v2014
      %v2016 = vrot.slane %v2011, %v2015
      %v2017 = vlaneseq
      %v2018 = vshrl.u32 %v2017, 7
      %v2019 = vsub.s32 1, %v2018
      %v2020 = vrot.slane %v2011, %v2019
      %v2023 = vmul.f32 %v2006, %v2016
      %v2024 = vmul.f32 %v2008, %v2020
      %v2025 = vadd.f32 %v1914, %v2023
      %v2026 = vadd.f32 %v1915, %v2024
      %v2027 = vld [vmem:[#allocation3 + $0x4] sm:$0xff]
      %v2028 = vld [vmem:[#allocation3 + $0xc] sm:$0xf]
      %s2029 = scalar_lea.vmem %s279, 120
      %v2030 = vld [vmem:[%s2029] sm:$0xff]
      %v2033 = vcombine.high %v2027, %v2027
      %2034 = vrot.lane.b32.xlu0 %v2027, 98
      %v2035 = vpop.permute.xlu0 %2034
      %2036 = vrot.lane.b32.xlu0 %v2033, 98
      %v2037 = vpop.permute.xlu0 %2036
      %2038 = vrot.lane.b32.xlu0 %v2028, 98
      %v2039 = vpop.permute.xlu0 %2038
      %vm2040 = vcmask 801792
      %v2041 = vsel %vm2040, %v2035, %v2037
      %v2042 = vsel %vm2040, %v2037, %v2039
      %v2044 = vsel %vm330, %v2030, 0
      %v2046 = vsel %vm334, %v2041, 0
      %v2048 = vsel %vm334, %v2042, 0
      %2050 = vmatprep.subr.mxu0 %v2048
      %2051 = vmatpush1.msra.mxu0 %v2046
      %2052 = vmatprep.subr.mxu0 0.0
      %2053 = vmatpush1.msra.mxu0 0.0
      %2054 = vmatprep.subr.mxu0 0.0
      %2055 = vmatpush1.msra.mxu0 0.0
      %2056 = vmatprep.subr.mxu0 0.0
      %2057 = vmatpush1.msra.mxu0 0.0
      %2058 = vmatprep.subr.mxu0 0.0
      %2059 = vmatpush1.msra.mxu0 0.0
      %2060 = vmatprep.subr.mxu0 0.0
      %2061 = vmatpush1.msra.mxu0 0.0
      %2062 = vmatprep.subr.mxu0 0.0
      %2063 = vmatpush1.msra.mxu0 0.0
      %2064 = vmatprep.subr.mxu0 0.0
      %2065 = vmatpush1.msra.mxu0 0.0
      %2066 = vmatprep.subr.mxu0 0.0
      %2067 = vmatpush1.msra.mxu0 0.0
      %2068 = vmatprep.subr.mxu0 0.0
      %2069 = vmatpush1.msra.mxu0 0.0
      %2070 = vmatprep.subr.mxu0 0.0
      %2071 = vmatpush1.msra.mxu0 0.0
      %2072 = vmatprep.subr.mxu0 0.0
      %2073 = vmatpush1.msra.mxu0 0.0
      %2074 = vmatprep.subr.mxu0 0.0
      %2075 = vmatpush1.msra.mxu0 0.0
      %2076 = vmatprep.subr.mxu0 0.0
      %2077 = vmatpush1.msra.mxu0 0.0
      %2078 = vmatprep.subr.mxu0 0.0
      %2079 = vmatpush1.msra.mxu0 0.0
      %2080 = vmatprep.subr.mxu0 0.0
      %2081 = vmatpush1.msra.mxu0 0.0
      %2082 = vmatprep.subr.mxu0 0.0
      %2083 = vmatpush1.msra.mxu0 0.0
      %2084 = vmatprep.subr.mxu0 0.0
      %2085 = vmatpush1.msra.mxu0 0.0
      %2086 = vmatprep.subr.mxu0 0.0
      %2087 = vmatpush1.msra.mxu0 0.0
      %2088 = vmatprep.subr.mxu0 0.0
      %2089 = vmatpush1.msra.mxu0 0.0
      %2090 = vmatprep.subr.mxu0 0.0
      %2091 = vmatpush1.msra.mxu0 0.0
      %2092 = vmatprep.subr.mxu0 0.0
      %2093 = vmatpush1.msra.mxu0 0.0
      %2094 = vmatprep.subr.mxu0 0.0
      %2095 = vmatpush1.msra.mxu0 0.0
      %2096 = vmatprep.subr.mxu0 0.0
      %2097 = vmatpush1.msra.mxu0 0.0
      %2098 = vmatprep.subr.mxu0 0.0
      %2099 = vmatpush1.msra.mxu0 0.0
      %2100 = vmatprep.subr.mxu0 0.0
      %2101 = vmatpush1.msra.mxu0 0.0
      %2102 = vmatprep.subr.mxu0 0.0
      %2103 = vmatpush1.msra.mxu0 0.0
      %2104 = vmatprep.subr.mxu0 0.0
      %2105 = vmatpush1.msra.mxu0 0.0
      %2106 = vmatprep.subr.mxu0 0.0
      %2107 = vmatpush1.msra.mxu0 0.0
      %2108 = vmatprep.subr.mxu0 0.0
      %2109 = vmatpush1.msra.mxu0 0.0
      %2110 = vmatprep.subr.mxu0 0.0
      %2111 = vmatpush1.msra.mxu0 0.0
      %2112 = vmatprep.subr.mxu0 0.0
      %2113 = vmatpush1.msra.mxu0 0.0
      %2114 = vmatprep.mubr.f32.mxu0 0.0
      %2115 = vmatmul.mubr.f32.gmra.mrb[0].mxu0 %v2044
      %v2116 = vpop.f32.mrb[0].mxu0
      %v2117 = vadd.f32 0.0, %v2116
      %v2118 = vpop.f32.mrb[0].mxu0
      %v2119 = vadd.f32 0.0, %v2118
      %2120 = vdwg.mxu0
      %s2121 = scalar_lea.vmem %s4, 26
      %v2122 = vld [vmem:[%s2121] sm:$0x3]
      %v2124 = vlaneseq
      %v2125 = vshrl.u32 %v2124, 7
      %v2126 = vsub.s32 0, %v2125
      %v2127 = vrot.slane %v2122, %v2126
      %v2128 = vlaneseq
      %v2129 = vshrl.u32 %v2128, 7
      %v2130 = vsub.s32 1, %v2129
      %v2131 = vrot.slane %v2122, %v2130
      %v2134 = vmul.f32 %v2117, %v2127
      %v2135 = vmul.f32 %v2119, %v2131
      %v2136 = vadd.f32 %v2025, %v2134
      %v2137 = vadd.f32 %v2026, %v2135
      %v2138 = vld [vmem:[#allocation3 + $0x4] sm:$0xff]
      %v2139 = vld [vmem:[#allocation3 + $0xc] sm:$0xf]
      %s2140 = scalar_lea.vmem %s279, 128
      %v2141 = vld [vmem:[%s2140] sm:$0xff]
      %v2144 = vcombine.high %v2138, %v2138
      %2145 = vrot.lane.b32.xlu0 %v2138, 96
      %v2146 = vpop.permute.xlu0 %2145
      %2147 = vrot.lane.b32.xlu0 %v2144, 96
      %v2148 = vpop.permute.xlu0 %2147
      %2149 = vrot.lane.b32.xlu0 %v2139, 96
      %v2150 = vpop.permute.xlu0 %2149
      %vm2151 = vcmask 785408
      %v2152 = vsel %vm2151, %v2146, %v2148
      %v2153 = vsel %vm2151, %v2148, %v2150
      %v2155 = vsel %vm330, %v2141, 0
      %v2157 = vsel %vm334, %v2152, 0
      %v2159 = vsel %vm334, %v2153, 0
      %2161 = vmatprep.subr.mxu0 %v2159
      %2162 = vmatpush1.msra.mxu0 %v2157
      %2163 = vmatprep.subr.mxu0 0.0
      %2164 = vmatpush1.msra.mxu0 0.0
      %2165 = vmatprep.subr.mxu0 0.0
      %2166 = vmatpush1.msra.mxu0 0.0
      %2167 = vmatprep.subr.mxu0 0.0
      %2168 = vmatpush1.msra.mxu0 0.0
      %2169 = vmatprep.subr.mxu0 0.0
      %2170 = vmatpush1.msra.mxu0 0.0
      %2171 = vmatprep.subr.mxu0 0.0
      %2172 = vmatpush1.msra.mxu0 0.0
      %2173 = vmatprep.subr.mxu0 0.0
      %2174 = vmatpush1.msra.mxu0 0.0
      %2175 = vmatprep.subr.mxu0 0.0
      %2176 = vmatpush1.msra.mxu0 0.0
      %2177 = vmatprep.subr.mxu0 0.0
      %2178 = vmatpush1.msra.mxu0 0.0
      %2179 = vmatprep.subr.mxu0 0.0
      %2180 = vmatpush1.msra.mxu0 0.0
      %2181 = vmatprep.subr.mxu0 0.0
      %2182 = vmatpush1.msra.mxu0 0.0
      %2183 = vmatprep.subr.mxu0 0.0
      %2184 = vmatpush1.msra.mxu0 0.0
      %2185 = vmatprep.subr.mxu0 0.0
      %2186 = vmatpush1.msra.mxu0 0.0
      %2187 = vmatprep.subr.mxu0 0.0
      %2188 = vmatpush1.msra.mxu0 0.0
      %2189 = vmatprep.subr.mxu0 0.0
      %2190 = vmatpush1.msra.mxu0 0.0
      %2191 = vmatprep.subr.mxu0 0.0
      %2192 = vmatpush1.msra.mxu0 0.0
      %2193 = vmatprep.subr.mxu0 0.0
      %2194 = vmatpush1.msra.mxu0 0.0
      %2195 = vmatprep.subr.mxu0 0.0
      %2196 = vmatpush1.msra.mxu0 0.0
      %2197 = vmatprep.subr.mxu0 0.0
      %2198 = vmatpush1.msra.mxu0 0.0
      %2199 = vmatprep.subr.mxu0 0.0
      %2200 = vmatpush1.msra.mxu0 0.0
      %2201 = vmatprep.subr.mxu0 0.0
      %2202 = vmatpush1.msra.mxu0 0.0
      %2203 = vmatprep.subr.mxu0 0.0
      %2204 = vmatpush1.msra.mxu0 0.0
      %2205 = vmatprep.subr.mxu0 0.0
      %2206 = vmatpush1.msra.mxu0 0.0
      %2207 = vmatprep.subr.mxu0 0.0
      %2208 = vmatpush1.msra.mxu0 0.0
      %2209 = vmatprep.subr.mxu0 0.0
      %2210 = vmatpush1.msra.mxu0 0.0
      %2211 = vmatprep.subr.mxu0 0.0
      %2212 = vmatpush1.msra.mxu0 0.0
      %2213 = vmatprep.subr.mxu0 0.0
      %2214 = vmatpush1.msra.mxu0 0.0
      %2215 = vmatprep.subr.mxu0 0.0
      %2216 = vmatpush1.msra.mxu0 0.0
      %2217 = vmatprep.subr.mxu0 0.0
      %2218 = vmatpush1.msra.mxu0 0.0
      %2219 = vmatprep.subr.mxu0 0.0
      %2220 = vmatpush1.msra.mxu0 0.0
      %2221 = vmatprep.subr.mxu0 0.0
      %2222 = vmatpush1.msra.mxu0 0.0
      %2223 = vmatprep.subr.mxu0 0.0
      %2224 = vmatpush1.msra.mxu0 0.0
      %2225 = vmatprep.mubr.f32.mxu0 0.0
      %2226 = vmatmul.mubr.f32.gmra.mrb[0].mxu0 %v2155
      %v2227 = vpop.f32.mrb[0].mxu0
      %v2228 = vadd.f32 0.0, %v2227
      %v2229 = vpop.f32.mrb[0].mxu0
      %v2230 = vadd.f32 0.0, %v2229
      %2231 = vdwg.mxu0
      %s2232 = scalar_lea.vmem %s4, 28
      %v2233 = vld [vmem:[%s2232] sm:$0x3]
      %v2235 = vlaneseq
      %v2236 = vshrl.u32 %v2235, 7
      %v2237 = vsub.s32 0, %v2236
      %v2238 = vrot.slane %v2233, %v2237
      %v2239 = vlaneseq
      %v2240 = vshrl.u32 %v2239, 7
      %v2241 = vsub.s32 1, %v2240
      %v2242 = vrot.slane %v2233, %v2241
      %v2245 = vmul.f32 %v2228, %v2238
      %v2246 = vmul.f32 %v2230, %v2242
      %v2247 = vadd.f32 %v2136, %v2245
      %v2248 = vadd.f32 %v2137, %v2246
      %v2249 = vld [vmem:[#allocation3 + $0x4] sm:$0xff]
      %v2250 = vld [vmem:[#allocation3 + $0xc] sm:$0xf]
      %s2251 = scalar_lea.vmem %s279, 136
      %v2252 = vld [vmem:[%s2251] sm:$0xff]
      %v2255 = vcombine.high %v2249, %v2249
      %2256 = vrot.lane.b32.xlu0 %v2249, 94
      %v2257 = vpop.permute.xlu0 %2256
      %2258 = vrot.lane.b32.xlu0 %v2255, 94
      %v2259 = vpop.permute.xlu0 %2258
      %2260 = vrot.lane.b32.xlu0 %v2250, 94
      %v2261 = vpop.permute.xlu0 %2260
      %vm2262 = vcmask 769024
      %v2263 = vsel %vm2262, %v2257, %v2259
      %v2264 = vsel %vm2262, %v2259, %v2261
      %v2266 = vsel %vm330, %v2252, 0
      %v2268 = vsel %vm334, %v2263, 0
      %v2270 = vsel %vm334, %v2264, 0
      %2272 = vmatprep.subr.mxu0 %v2270
      %2273 = vmatpush1.msra.mxu0 %v2268
      %2274 = vmatprep.subr.mxu0 0.0
      %2275 = vmatpush1.msra.mxu0 0.0
      %2276 = vmatprep.subr.mxu0 0.0
      %2277 = vmatpush1.msra.mxu0 0.0
      %2278 = vmatprep.subr.mxu0 0.0
      %2279 = vmatpush1.msra.mxu0 0.0
      %2280 = vmatprep.subr.mxu0 0.0
      %2281 = vmatpush1.msra.mxu0 0.0
      %2282 = vmatprep.subr.mxu0 0.0
      %2283 = vmatpush1.msra.mxu0 0.0
      %2284 = vmatprep.subr.mxu0 0.0
      %2285 = vmatpush1.msra.mxu0 0.0
      %2286 = vmatprep.subr.mxu0 0.0
      %2287 = vmatpush1.msra.mxu0 0.0
      %2288 = vmatprep.subr.mxu0 0.0
      %2289 = vmatpush1.msra.mxu0 0.0
      %2290 = vmatprep.subr.mxu0 0.0
      %2291 = vmatpush1.msra.mxu0 0.0
      %2292 = vmatprep.subr.mxu0 0.0
      %2293 = vmatpush1.msra.mxu0 0.0
      %2294 = vmatprep.subr.mxu0 0.0
      %2295 = vmatpush1.msra.mxu0 0.0
      %2296 = vmatprep.subr.mxu0 0.0
      %2297 = vmatpush1.msra.mxu0 0.0
      %2298 = vmatprep.subr.mxu0 0.0
      %2299 = vmatpush1.msra.mxu0 0.0
      %2300 = vmatprep.subr.mxu0 0.0
      %2301 = vmatpush1.msra.mxu0 0.0
      %2302 = vmatprep.subr.mxu0 0.0
      %2303 = vmatpush1.msra.mxu0 0.0
      %2304 = vmatprep.subr.mxu0 0.0
      %2305 = vmatpush1.msra.mxu0 0.0
      %2306 = vmatprep.subr.mxu0 0.0
      %2307 = vmatpush1.msra.mxu0 0.0
      %2308 = vmatprep.subr.mxu0 0.0
      %2309 = vmatpush1.msra.mxu0 0.0
      %2310 = vmatprep.subr.mxu0 0.0
      %2311 = vmatpush1.msra.mxu0 0.0
      %2312 = vmatprep.subr.mxu0 0.0
      %2313 = vmatpush1.msra.mxu0 0.0
      %2314 = vmatprep.subr.mxu0 0.0
      %2315 = vmatpush1.msra.mxu0 0.0
      %2316 = vmatprep.subr.mxu0 0.0
      %2317 = vmatpush1.msra.mxu0 0.0
      %2318 = vmatprep.subr.mxu0 0.0
      %2319 = vmatpush1.msra.mxu0 0.0
      %2320 = vmatprep.subr.mxu0 0.0
      %2321 = vmatpush1.msra.mxu0 0.0
      %2322 = vmatprep.subr.mxu0 0.0
      %2323 = vmatpush1.msra.mxu0 0.0
      %2324 = vmatprep.subr.mxu0 0.0
      %2325 = vmatpush1.msra.mxu0 0.0
      %2326 = vmatprep.subr.mxu0 0.0
      %2327 = vmatpush1.msra.mxu0 0.0
      %2328 = vmatprep.subr.mxu0 0.0
      %2329 = vmatpush1.msra.mxu0 0.0
      %2330 = vmatprep.subr.mxu0 0.0
      %2331 = vmatpush1.msra.mxu0 0.0
      %2332 = vmatprep.subr.mxu0 0.0
      %2333 = vmatpush1.msra.mxu0 0.0
      %2334 = vmatprep.subr.mxu0 0.0
      %2335 = vmatpush1.msra.mxu0 0.0
      %2336 = vmatprep.mubr.f32.mxu0 0.0
      %2337 = vmatmul.mubr.f32.gmra.mrb[0].mxu0 %v2266
      %v2338 = vpop.f32.mrb[0].mxu0
      %v2339 = vadd.f32 0.0, %v2338
      %v2340 = vpop.f32.mrb[0].mxu0
      %v2341 = vadd.f32 0.0, %v2340
      %2342 = vdwg.mxu0
      %s2343 = scalar_lea.vmem %s4, 30
      %v2344 = vld [vmem:[%s2343] sm:$0x3]
      %v2346 = vlaneseq
      %v2347 = vshrl.u32 %v2346, 7
      %v2348 = vsub.s32 0, %v2347
      %v2349 = vrot.slane %v2344, %v2348
      %v2350 = vlaneseq
      %v2351 = vshrl.u32 %v2350, 7
      %v2352 = vsub.s32 1, %v2351
      %v2353 = vrot.slane %v2344, %v2352
      %v2356 = vmul.f32 %v2339, %v2349
      %v2357 = vmul.f32 %v2341, %v2353
      %v2358 = vadd.f32 %v2247, %v2356
      %v2359 = vadd.f32 %v2248, %v2357
      %v2360 = vld [vmem:[#allocation2 + $0x20] sm:$0xff]
      %v2361 = vld [vmem:[#allocation2 + $0x28] sm:$0xff]
      %v2362 = vadd.f32 %v2360, %v2358
      %v2363 = vadd.f32 %v2361, %v2359
      %2364 = vst [vmem:[#allocation2 + $0x20] sm:$0xff] %v2362
      %2365 = vst [vmem:[#allocation2 + $0x28] sm:$0xff] %v2363
      // Predicated region
      $region53: #{aspp_forward.1} parent=39 // pred_check
        %p2366 = pneg %p285
      $region54: #{aspp_forward.1} parent=39 // pred_check_branch
        %2368 = sbr.rel (%p2366) target = $region56
      $region55: #{aspp_forward.1} parent=39 // pred_region
        %v2369 = vld [vmem:[#allocation2 + $0x20] sm:$0xff]
        %v2370 = vld [vmem:[#allocation2 + $0x28] sm:$0xff]
        %v2371 = vmax.f32 %v2369, 0.0
        %v2372 = vmax.f32 %v2370, 0.0
        %2373 = vst [vmem:[%s284 + $0x20] sm:$0xff] %v2371
        %2374 = vst [vmem:[%s284 + $0x28] sm:$0xff] %v2372
      $region56: #{aspp_forward.1} parent=39 // pred_fallthru
        _
      %s2375 = scalar_lea.vmem %s279, 176
      %v2376 = vld [vmem:[%s2375] sm:$0xff]
      %v2377 = vld [vmem:[#allocation3] sm:$0xff]
      %v2378 = vld [vmem:[#allocation3 + $0x8] sm:$0xf]
      %s2379 = scalar_lea.vmem %s279, 144
      %v2380 = vld [vmem:[%s2379] sm:$0xff]
      %v2383 = vcombine.high %v2377, %v2377
      %2384 = vrot.lane.b32.xlu0 %v2377, 51
      %v2385 = vpop.permute.xlu0 %2384
      %2386 = vrot.lane.b32.xlu0 %v2383, 51
      %v2387 = vpop.permute.xlu0 %2386
      %2388 = vrot.lane.b32.xlu0 %v2378, 51
      %v2389 = vpop.permute.xlu0 %2388
      %vm2390 = vcmask 416768
      %v2391 = vsel %vm2390, %v2385, %v2387
      %v2392 = vsel %vm2390, %v2387, %v2389
      %v2394 = vsel %vm330, %v2380, 0
      %v2396 = vsel %vm334, %v2391, 0
      %v2398 = vsel %vm334, %v2392, 0
      %2400 = vmatprep.subr.mxu0 %v2398
      %2401 = vmatpush1.msra.mxu0 %v2396
      %2402 = vmatprep.subr.mxu0 0.0
      %2403 = vmatpush1.msra.mxu0 0.0
      %2404 = vmatprep.subr.mxu0 0.0
      %2405 = vmatpush1.msra.mxu0 0.0
      %2406 = vmatprep.subr.mxu0 0.0
      %2407 = vmatpush1.msra.mxu0 0.0
      %2408 = vmatprep.subr.mxu0 0.0
      %2409 = vmatpush1.msra.mxu0 0.0
      %2410 = vmatprep.subr.mxu0 0.0
      %2411 = vmatpush1.msra.mxu0 0.0
      %2412 = vmatprep.subr.mxu0 0.0
      %2413 = vmatpush1.msra.mxu0 0.0
      %2414 = vmatprep.subr.mxu0 0.0
      %2415 = vmatpush1.msra.mxu0 0.0
      %2416 = vmatprep.subr.mxu0 0.0
      %2417 = vmatpush1.msra.mxu0 0.0
      %2418 = vmatprep.subr.mxu0 0.0
      %2419 = vmatpush1.msra.mxu0 0.0
      %2420 = vmatprep.subr.mxu0 0.0
      %2421 = vmatpush1.msra.mxu0 0.0
      %2422 = vmatprep.subr.mxu0 0.0
      %2423 = vmatpush1.msra.mxu0 0.0
      %2424 = vmatprep.subr.mxu0 0.0
      %2425 = vmatpush1.msra.mxu0 0.0
      %2426 = vmatprep.subr.mxu0 0.0
      %2427 = vmatpush1.msra.mxu0 0.0
      %2428 = vmatprep.subr.mxu0 0.0
      %2429 = vmatpush1.msra.mxu0 0.0
      %2430 = vmatprep.subr.mxu0 0.0
      %2431 = vmatpush1.msra.mxu0 0.0
      %2432 = vmatprep.subr.mxu0 0.0
      %2433 = vmatpush1.msra.mxu0 0.0
      %2434 = vmatprep.subr.mxu0 0.0
      %2435 = vmatpush1.msra.mxu0 0.0
      %2436 = vmatprep.subr.mxu0 0.0
      %2437 = vmatpush1.msra.mxu0 0.0
      %2438 = vmatprep.subr.mxu0 0.0
      %2439 = vmatpush1.msra.mxu0 0.0
      %2440 = vmatprep.subr.mxu0 0.0
      %2441 = vmatpush1.msra.mxu0 0.0
      %2442 = vmatprep.subr.mxu0 0.0
      %2443 = vmatpush1.msra.mxu0 0.0
      %2444 = vmatprep.subr.mxu0 0.0
      %2445 = vmatpush1.msra.mxu0 0.0
      %2446 = vmatprep.subr.mxu0 0.0
      %2447 = vmatpush1.msra.mxu0 0.0
      %2448 = vmatprep.subr.mxu0 0.0
      %2449 = vmatpush1.msra.mxu0 0.0
      %2450 = vmatprep.subr.mxu0 0.0
      %2451 = vmatpush1.msra.mxu0 0.0
      %2452 = vmatprep.subr.mxu0 0.0
      %2453 = vmatpush1.msra.mxu0 0.0
      %2454 = vmatprep.subr.mxu0 0.0
      %2455 = vmatpush1.msra.mxu0 0.0
      %2456 = vmatprep.subr.mxu0 0.0
      %2457 = vmatpush1.msra.mxu0 0.0
      %2458 = vmatprep.subr.mxu0 0.0
      %2459 = vmatpush1.msra.mxu0 0.0
      %2460 = vmatprep.subr.mxu0 0.0
      %2461 = vmatpush1.msra.mxu0 0.0
      %2462 = vmatprep.subr.mxu0 0.0
      %2463 = vmatpush1.msra.mxu0 0.0
      %2464 = vmatprep.mubr.f32.mxu0 0.0
      %2465 = vmatmul.mubr.f32.gmra.mrb[0].mxu0 %v2394
      %v2466 = vpop.f32.mrb[0].mxu0
      %v2467 = vadd.f32 0.0, %v2466
      %v2468 = vpop.f32.mrb[0].mxu0
      %v2469 = vadd.f32 0.0, %v2468
      %2470 = vdwg.mxu0
      %s2471 = scalar_lea.vmem %s4, 32
      %v2472 = vld [vmem:[%s2471] sm:$0x3]
      %v2474 = vlaneseq
      %v2475 = vshrl.u32 %v2474, 7
      %v2476 = vsub.s32 0, %v2475
      %v2477 = vrot.slane %v2472, %v2476
      %v2478 = vlaneseq
      %v2479 = vshrl.u32 %v2478, 7
      %v2480 = vsub.s32 1, %v2479
      %v2481 = vrot.slane %v2472, %v2480
      %v2484 = vmul.f32 %v2467, %v2477
      %v2485 = vmul.f32 %v2469, %v2481
      %v2487 = vsel %vm330, %v2376, 0
      %2489 = vmatprep.subr.mxu0 %v337
      %2490 = vmatpush1.msra.mxu0 %v335
      %2491 = vmatprep.subr.mxu0 0.0
      %2492 = vmatpush1.msra.mxu0 0.0
      %2493 = vmatprep.subr.mxu0 0.0
      %2494 = vmatpush1.msra.mxu0 0.0
      %2495 = vmatprep.subr.mxu0 0.0
      %2496 = vmatpush1.msra.mxu0 0.0
      %2497 = vmatprep.subr.mxu0 0.0
      %2498 = vmatpush1.msra.mxu0 0.0
      %2499 = vmatprep.subr.mxu0 0.0
      %2500 = vmatpush1.msra.mxu0 0.0
      %2501 = vmatprep.subr.mxu0 0.0
      %2502 = vmatpush1.msra.mxu0 0.0
      %2503 = vmatprep.subr.mxu0 0.0
      %2504 = vmatpush1.msra.mxu0 0.0
      %2505 = vmatprep.subr.mxu0 0.0
      %2506 = vmatpush1.msra.mxu0 0.0
      %2507 = vmatprep.subr.mxu0 0.0
      %2508 = vmatpush1.msra.mxu0 0.0
      %2509 = vmatprep.subr.mxu0 0.0
      %2510 = vmatpush1.msra.mxu0 0.0
      %2511 = vmatprep.subr.mxu0 0.0
      %2512 = vmatpush1.msra.mxu0 0.0
      %2513 = vmatprep.subr.mxu0 0.0
      %2514 = vmatpush1.msra.mxu0 0.0
      %2515 = vmatprep.subr.mxu0 0.0
      %2516 = vmatpush1.msra.mxu0 0.0
      %2517 = vmatprep.subr.mxu0 0.0
      %2518 = vmatpush1.msra.mxu0 0.0
      %2519 = vmatprep.subr.mxu0 0.0
      %2520 = vmatpush1.msra.mxu0 0.0
      %2521 = vmatprep.subr.mxu0 0.0
      %2522 = vmatpush1.msra.mxu0 0.0
      %2523 = vmatprep.subr.mxu0 0.0
      %2524 = vmatpush1.msra.mxu0 0.0
      %2525 = vmatprep.subr.mxu0 0.0
      %2526 = vmatpush1.msra.mxu0 0.0
      %2527 = vmatprep.subr.mxu0 0.0
      %2528 = vmatpush1.msra.mxu0 0.0
      %2529 = vmatprep.subr.mxu0 0.0
      %2530 = vmatpush1.msra.mxu0 0.0
      %2531 = vmatprep.subr.mxu0 0.0
      %2532 = vmatpush1.msra.mxu0 0.0
      %2533 = vmatprep.subr.mxu0 0.0
      %2534 = vmatpush1.msra.mxu0 0.0
      %2535 = vmatprep.subr.mxu0 0.0
      %2536 = vmatpush1.msra.mxu0 0.0
      %2537 = vmatprep.subr.mxu0 0.0
      %2538 = vmatpush1.msra.mxu0 0.0
      %2539 = vmatprep.subr.mxu0 0.0
      %2540 = vmatpush1.msra.mxu0 0.0
      %2541 = vmatprep.subr.mxu0 0.0
      %2542 = vmatpush1.msra.mxu0 0.0
      %2543 = vmatprep.subr.mxu0 0.0
      %2544 = vmatpush1.msra.mxu0 0.0
      %2545 = vmatprep.subr.mxu0 0.0
      %2546 = vmatpush1.msra.mxu0 0.0
      %2547 = vmatprep.subr.mxu0 0.0
      %2548 = vmatpush1.msra.mxu0 0.0
      %2549 = vmatprep.subr.mxu0 0.0
      %2550 = vmatpush1.msra.mxu0 0.0
      %2551 = vmatprep.subr.mxu0 0.0
      %2552 = vmatpush1.msra.mxu0 0.0
      %2553 = vmatprep.mubr.f32.mxu0 0.0
      %2554 = vmatmul.mubr.f32.gmra.mrb[0].mxu0 %v2487
      %v2555 = vpop.f32.mrb[0].mxu0
      %v2556 = vadd.f32 %v2484, %v2555
      %v2557 = vpop.f32.mrb[0].mxu0
      %v2558 = vadd.f32 %v2485, %v2557
      %2559 = vdwg.mxu0
      %v2560 = vld [vmem:[#allocation3] sm:$0xff]
      %v2561 = vld [vmem:[#allocation3 + $0x8] sm:$0xf]
      %s2562 = scalar_lea.vmem %s279, 152
      %v2563 = vld [vmem:[%s2562] sm:$0xff]
      %v2566 = vcombine.high %v2560, %v2560
      %2567 = vrot.lane.b32.xlu0 %v2560, 48
      %v2568 = vpop.permute.xlu0 %2567
      %2569 = vrot.lane.b32.xlu0 %v2566, 48
      %v2570 = vpop.permute.xlu0 %2569
      %2571 = vrot.lane.b32.xlu0 %v2561, 48
      %v2572 = vpop.permute.xlu0 %2571
      %vm2573 = vcmask 392192
      %v2574 = vsel %vm2573, %v2568, %v2570
      %v2575 = vsel %vm2573, %v2570, %v2572
      %v2577 = vsel %vm330, %v2563, 0
      %v2579 = vsel %vm334, %v2574, 0
      %v2581 = vsel %vm334, %v2575, 0
      %2583 = vmatprep.subr.mxu0 %v2581
      %2584 = vmatpush1.msra.mxu0 %v2579
      %2585 = vmatprep.subr.mxu0 0.0
      %2586 = vmatpush1.msra.mxu0 0.0
      %2587 = vmatprep.subr.mxu0 0.0
      %2588 = vmatpush1.msra.mxu0 0.0
      %2589 = vmatprep.subr.mxu0 0.0
      %2590 = vmatpush1.msra.mxu0 0.0
      %2591 = vmatprep.subr.mxu0 0.0
      %2592 = vmatpush1.msra.mxu0 0.0
      %2593 = vmatprep.subr.mxu0 0.0
      %2594 = vmatpush1.msra.mxu0 0.0
      %2595 = vmatprep.subr.mxu0 0.0
      %2596 = vmatpush1.msra.mxu0 0.0
      %2597 = vmatprep.subr.mxu0 0.0
      %2598 = vmatpush1.msra.mxu0 0.0
      %2599 = vmatprep.subr.mxu0 0.0
      %2600 = vmatpush1.msra.mxu0 0.0
      %2601 = vmatprep.subr.mxu0 0.0
      %2602 = vmatpush1.msra.mxu0 0.0
      %2603 = vmatprep.subr.mxu0 0.0
      %2604 = vmatpush1.msra.mxu0 0.0
      %2605 = vmatprep.subr.mxu0 0.0
      %2606 = vmatpush1.msra.mxu0 0.0
      %2607 = vmatprep.subr.mxu0 0.0
      %2608 = vmatpush1.msra.mxu0 0.0
      %2609 = vmatprep.subr.mxu0 0.0
      %2610 = vmatpush1.msra.mxu0 0.0
      %2611 = vmatprep.subr.mxu0 0.0
      %2612 = vmatpush1.msra.mxu0 0.0
      %2613 = vmatprep.subr.mxu0 0.0
      %2614 = vmatpush1.msra.mxu0 0.0
      %2615 = vmatprep.subr.mxu0 0.0
      %2616 = vmatpush1.msra.mxu0 0.0
      %2617 = vmatprep.subr.mxu0 0.0
      %2618 = vmatpush1.msra.mxu0 0.0
      %2619 = vmatprep.subr.mxu0 0.0
      %2620 = vmatpush1.msra.mxu0 0.0
      %2621 = vmatprep.subr.mxu0 0.0
      %2622 = vmatpush1.msra.mxu0 0.0
      %2623 = vmatprep.subr.mxu0 0.0
      %2624 = vmatpush1.msra.mxu0 0.0
      %2625 = vmatprep.subr.mxu0 0.0
      %2626 = vmatpush1.msra.mxu0 0.0
      %2627 = vmatprep.subr.mxu0 0.0
      %2628 = vmatpush1.msra.mxu0 0.0
      %2629 = vmatprep.subr.mxu0 0.0
      %2630 = vmatpush1.msra.mxu0 0.0
      %2631 = vmatprep.subr.mxu0 0.0
      %2632 = vmatpush1.msra.mxu0 0.0
      %2633 = vmatprep.subr.mxu0 0.0
      %2634 = vmatpush1.msra.mxu0 0.0
      %2635 = vmatprep.subr.mxu0 0.0
      %2636 = vmatpush1.msra.mxu0 0.0
      %2637 = vmatprep.subr.mxu0 0.0
      %2638 = vmatpush1.msra.mxu0 0.0
      %2639 = vmatprep.subr.mxu0 0.0
      %2640 = vmatpush1.msra.mxu0 0.0
      %2641 = vmatprep.subr.mxu0 0.0
      %2642 = vmatpush1.msra.mxu0 0.0
      %2643 = vmatprep.subr.mxu0 0.0
      %2644 = vmatpush1.msra.mxu0 0.0
      %2645 = vmatprep.subr.mxu0 0.0
      %2646 = vmatpush1.msra.mxu0 0.0
      %2647 = vmatprep.mubr.f32.mxu0 0.0
      %2648 = vmatmul.mubr.f32.gmra.mrb[0].mxu0 %v2577
      %v2649 = vpop.f32.mrb[0].mxu0
      %v2650 = vadd.f32 0.0, %v2649
      %v2651 = vpop.f32.mrb[0].mxu0
      %v2652 = vadd.f32 0.0, %v2651
      %2653 = vdwg.mxu0
      %s2654 = scalar_lea.vmem %s4, 34
      %v2655 = vld [vmem:[%s2654] sm:$0x3]
      %v2657 = vlaneseq
      %v2658 = vshrl.u32 %v2657, 7
      %v2659 = vsub.s32 0, %v2658
      %v2660 = vrot.slane %v2655, %v2659
      %v2661 = vlaneseq
      %v2662 = vshrl.u32 %v2661, 7
      %v2663 = vsub.s32 1, %v2662
      %v2664 = vrot.slane %v2655, %v2663
      %v2667 = vmul.f32 %v2650, %v2660
      %v2668 = vmul.f32 %v2652, %v2664
      %v2669 = vadd.f32 %v2556, %v2667
      %v2670 = vadd.f32 %v2558, %v2668
      %v2671 = vld [vmem:[#allocation3] sm:$0xff]
      %v2672 = vld [vmem:[#allocation3 + $0x8] sm:$0xf]
      %s2673 = scalar_lea.vmem %s279, 160
      %v2674 = vld [vmem:[%s2673] sm:$0xff]
      %v2677 = vcombine.high %v2671, %v2671
      %2678 = vrot.lane.b32.xlu0 %v2671, 45
      %v2679 = vpop.permute.xlu0 %2678
      %2680 = vrot.lane.b32.xlu0 %v2677, 45
      %v2681 = vpop.permute.xlu0 %2680
      %2682 = vrot.lane.b32.xlu0 %v2672, 45
      %v2683 = vpop.permute.xlu0 %2682
      %vm2684 = vcmask 367616
      %v2685 = vsel %vm2684, %v2679, %v2681
      %v2686 = vsel %vm2684, %v2681, %v2683
      %v2688 = vsel %vm330, %v2674, 0
      %v2690 = vsel %vm334, %v2685, 0
      %v2692 = vsel %vm334, %v2686, 0
      %2694 = vmatprep.subr.mxu0 %v2692
      %2695 = vmatpush1.msra.mxu0 %v2690
      %2696 = vmatprep.subr.mxu0 0.0
      %2697 = vmatpush1.msra.mxu0 0.0
      %2698 = vmatprep.subr.mxu0 0.0
      %2699 = vmatpush1.msra.mxu0 0.0
      %2700 = vmatprep.subr.mxu0 0.0
      %2701 = vmatpush1.msra.mxu0 0.0
      %2702 = vmatprep.subr.mxu0 0.0
      %2703 = vmatpush1.msra.mxu0 0.0
      %2704 = vmatprep.subr.mxu0 0.0
      %2705 = vmatpush1.msra.mxu0 0.0
      %2706 = vmatprep.subr.mxu0 0.0
      %2707 = vmatpush1.msra.mxu0 0.0
      %2708 = vmatprep.subr.mxu0 0.0
      %2709 = vmatpush1.msra.mxu0 0.0
      %2710 = vmatprep.subr.mxu0 0.0
      %2711 = vmatpush1.msra.mxu0 0.0
      %2712 = vmatprep.subr.mxu0 0.0
      %2713 = vmatpush1.msra.mxu0 0.0
      %2714 = vmatprep.subr.mxu0 0.0
      %2715 = vmatpush1.msra.mxu0 0.0
      %2716 = vmatprep.subr.mxu0 0.0
      %2717 = vmatpush1.msra.mxu0 0.0
      %2718 = vmatprep.subr.mxu0 0.0
      %2719 = vmatpush1.msra.mxu0 0.0
      %2720 = vmatprep.subr.mxu0 0.0
      %2721 = vmatpush1.msra.mxu0 0.0
      %2722 = vmatprep.subr.mxu0 0.0
      %2723 = vmatpush1.msra.mxu0 0.0
      %2724 = vmatprep.subr.mxu0 0.0
      %2725 = vmatpush1.msra.mxu0 0.0
      %2726 = vmatprep.subr.mxu0 0.0
      %2727 = vmatpush1.msra.mxu0 0.0
      %2728 = vmatprep.subr.mxu0 0.0
      %2729 = vmatpush1.msra.mxu0 0.0
      %2730 = vmatprep.subr.mxu0 0.0
      %2731 = vmatpush1.msra.mxu0 0.0
      %2732 = vmatprep.subr.mxu0 0.0
      %2733 = vmatpush1.msra.mxu0 0.0
      %2734 = vmatprep.subr.mxu0 0.0
      %2735 = vmatpush1.msra.mxu0 0.0
      %2736 = vmatprep.subr.mxu0 0.0
      %2737 = vmatpush1.msra.mxu0 0.0
      %2738 = vmatprep.subr.mxu0 0.0
      %2739 = vmatpush1.msra.mxu0 0.0
      %2740 = vmatprep.subr.mxu0 0.0
      %2741 = vmatpush1.msra.mxu0 0.0
      %2742 = vmatprep.subr.mxu0 0.0
      %2743 = vmatpush1.msra.mxu0 0.0
      %2744 = vmatprep.subr.mxu0 0.0
      %2745 = vmatpush1.msra.mxu0 0.0
      %2746 = vmatprep.subr.mxu0 0.0
      %2747 = vmatpush1.msra.mxu0 0.0
      %2748 = vmatprep.subr.mxu0 0.0
      %2749 = vmatpush1.msra.mxu0 0.0
      %2750 = vmatprep.subr.mxu0 0.0
      %2751 = vmatpush1.msra.mxu0 0.0
      %2752 = vmatprep.subr.mxu0 0.0
      %2753 = vmatpush1.msra.mxu0 0.0
      %2754 = vmatprep.subr.mxu0 0.0
      %2755 = vmatpush1.msra.mxu0 0.0
      %2756 = vmatprep.subr.mxu0 0.0
      %2757 = vmatpush1.msra.mxu0 0.0
      %2758 = vmatprep.mubr.f32.mxu0 0.0
      %2759 = vmatmul.mubr.f32.gmra.mrb[0].mxu0 %v2688
      %v2760 = vpop.f32.mrb[0].mxu0
      %v2761 = vadd.f32 0.0, %v2760
      %v2762 = vpop.f32.mrb[0].mxu0
      %v2763 = vadd.f32 0.0, %v2762
      %2764 = vdwg.mxu0
      %s2765 = scalar_lea.vmem %s4, 36
      %v2766 = vld [vmem:[%s2765] sm:$0x3]
      %v2768 = vlaneseq
      %v2769 = vshrl.u32 %v2768, 7
      %v2770 = vsub.s32 0, %v2769
      %v2771 = vrot.slane %v2766, %v2770
      %v2772 = vlaneseq
      %v2773 = vshrl.u32 %v2772, 7
      %v2774 = vsub.s32 1, %v2773
      %v2775 = vrot.slane %v2766, %v2774
      %v2778 = vmul.f32 %v2761, %v2771
      %v2779 = vmul.f32 %v2763, %v2775
      %v2780 = vadd.f32 %v2669, %v2778
      %v2781 = vadd.f32 %v2670, %v2779
      %v2782 = vld [vmem:[#allocation3] sm:$0xff]
      %v2783 = vld [vmem:[#allocation3 + $0x8] sm:$0xf]
      %s2784 = scalar_lea.vmem %s279, 168
      %v2785 = vld [vmem:[%s2784] sm:$0xff]
      %v2788 = vcombine.high %v2782, %v2782
      %2789 = vrot.lane.b32.xlu0 %v2782, 3
      %v2790 = vpop.permute.xlu0 %2789
      %2791 = vrot.lane.b32.xlu0 %v2788, 3
      %v2792 = vpop.permute.xlu0 %2791
      %2793 = vrot.lane.b32.xlu0 %v2783, 3
      %v2794 = vpop.permute.xlu0 %2793
      %vm2795 = vcmask 23552
      %v2796 = vsel %vm2795, %v2790, %v2792
      %v2797 = vsel %vm2795, %v2792, %v2794
      %v2799 = vsel %vm330, %v2785, 0
      %v2801 = vsel %vm334, %v2796, 0
      %v2803 = vsel %vm334, %v2797, 0
      %2805 = vmatprep.subr.mxu0 %v2803
      %2806 = vmatpush1.msra.mxu0 %v2801
      %2807 = vmatprep.subr.mxu0 0.0
      %2808 = vmatpush1.msra.mxu0 0.0
      %2809 = vmatprep.subr.mxu0 0.0
      %2810 = vmatpush1.msra.mxu0 0.0
      %2811 = vmatprep.subr.mxu0 0.0
      %2812 = vmatpush1.msra.mxu0 0.0
      %2813 = vmatprep.subr.mxu0 0.0
      %2814 = vmatpush1.msra.mxu0 0.0
      %2815 = vmatprep.subr.mxu0 0.0
      %2816 = vmatpush1.msra.mxu0 0.0
      %2817 = vmatprep.subr.mxu0 0.0
      %2818 = vmatpush1.msra.mxu0 0.0
      %2819 = vmatprep.subr.mxu0 0.0
      %2820 = vmatpush1.msra.mxu0 0.0
      %2821 = vmatprep.subr.mxu0 0.0
      %2822 = vmatpush1.msra.mxu0 0.0
      %2823 = vmatprep.subr.mxu0 0.0
      %2824 = vmatpush1.msra.mxu0 0.0
      %2825 = vmatprep.subr.mxu0 0.0
      %2826 = vmatpush1.msra.mxu0 0.0
      %2827 = vmatprep.subr.mxu0 0.0
      %2828 = vmatpush1.msra.mxu0 0.0
      %2829 = vmatprep.subr.mxu0 0.0
      %2830 = vmatpush1.msra.mxu0 0.0
      %2831 = vmatprep.subr.mxu0 0.0
      %2832 = vmatpush1.msra.mxu0 0.0
      %2833 = vmatprep.subr.mxu0 0.0
      %2834 = vmatpush1.msra.mxu0 0.0
      %2835 = vmatprep.subr.mxu0 0.0
      %2836 = vmatpush1.msra.mxu0 0.0
      %2837 = vmatprep.subr.mxu0 0.0
      %2838 = vmatpush1.msra.mxu0 0.0
      %2839 = vmatprep.subr.mxu0 0.0
      %2840 = vmatpush1.msra.mxu0 0.0
      %2841 = vmatprep.subr.mxu0 0.0
      %2842 = vmatpush1.msra.mxu0 0.0
      %2843 = vmatprep.subr.mxu0 0.0
      %2844 = vmatpush1.msra.mxu0 0.0
      %2845 = vmatprep.subr.mxu0 0.0
      %2846 = vmatpush1.msra.mxu0 0.0
      %2847 = vmatprep.subr.mxu0 0.0
      %2848 = vmatpush1.msra.mxu0 0.0
      %2849 = vmatprep.subr.mxu0 0.0
      %2850 = vmatpush1.msra.mxu0 0.0
      %2851 = vmatprep.subr.mxu0 0.0
      %2852 = vmatpush1.msra.mxu0 0.0
      %2853 = vmatprep.subr.mxu0 0.0
      %2854 = vmatpush1.msra.mxu0 0.0
      %2855 = vmatprep.subr.mxu0 0.0
      %2856 = vmatpush1.msra.mxu0 0.0
      %2857 = vmatprep.subr.mxu0 0.0
      %2858 = vmatpush1.msra.mxu0 0.0
      %2859 = vmatprep.subr.mxu0 0.0
      %2860 = vmatpush1.msra.mxu0 0.0
      %2861 = vmatprep.subr.mxu0 0.0
      %2862 = vmatpush1.msra.mxu0 0.0
      %2863 = vmatprep.subr.mxu0 0.0
      %2864 = vmatpush1.msra.mxu0 0.0
      %2865 = vmatprep.subr.mxu0 0.0
      %2866 = vmatpush1.msra.mxu0 0.0
      %2867 = vmatprep.subr.mxu0 0.0
      %2868 = vmatpush1.msra.mxu0 0.0
      %2869 = vmatprep.mubr.f32.mxu0 0.0
      %2870 = vmatmul.mubr.f32.gmra.mrb[0].mxu0 %v2799
      %v2871 = vpop.f32.mrb[0].mxu0
      %v2872 = vadd.f32 0.0, %v2871
      %v2873 = vpop.f32.mrb[0].mxu0
      %v2874 = vadd.f32 0.0, %v2873
      %2875 = vdwg.mxu0
      %s2876 = scalar_lea.vmem %s4, 38
      %v2877 = vld [vmem:[%s2876] sm:$0x3]
      %v2879 = vlaneseq
      %v2880 = vshrl.u32 %v2879, 7
      %v2881 = vsub.s32 0, %v2880
      %v2882 = vrot.slane %v2877, %v2881
      %v2883 = vlaneseq
      %v2884 = vshrl.u32 %v2883, 7
      %v2885 = vsub.s32 1, %v2884
      %v2886 = vrot.slane %v2877, %v2885
      %v2889 = vmul.f32 %v2872, %v2882
      %v2890 = vmul.f32 %v2874, %v2886
      %v2891 = vadd.f32 %v2780, %v2889
      %v2892 = vadd.f32 %v2781, %v2890
      %v2893 = vld [vmem:[#allocation3 + $0x4] sm:$0xff]
      %v2894 = vld [vmem:[#allocation3 + $0xc] sm:$0xf]
      %s2895 = scalar_lea.vmem %s279, 184
      %v2896 = vld [vmem:[%s2895] sm:$0xff]
      %v2899 = vcombine.high %v2893, %v2893
      %2900 = vrot.lane.b32.xlu0 %v2893, 125
      %v2901 = vpop.permute.xlu0 %2900
      %2902 = vrot.lane.b32.xlu0 %v2899, 125
      %v2903 = vpop.permute.xlu0 %2902
      %2904 = vrot.lane.b32.xlu0 %v2894, 125
      %v2905 = vpop.permute.xlu0 %2904
      %vm2906 = vcmask 1022976
      %v2907 = vsel %vm2906, %v2901, %v2903
      %v2908 = vsel %vm2906, %v2903, %v2905
      %v2910 = vsel %vm330, %v2896, 0
      %v2912 = vsel %vm334, %v2907, 0
      %v2914 = vsel %vm334, %v2908, 0
      %2916 = vmatprep.subr.mxu0 %v2914
      %2917 = vmatpush1.msra.mxu0 %v2912
      %2918 = vmatprep.subr.mxu0 0.0
      %2919 = vmatpush1.msra.mxu0 0.0
      %2920 = vmatprep.subr.mxu0 0.0
      %2921 = vmatpush1.msra.mxu0 0.0
      %2922 = vmatprep.subr.mxu0 0.0
      %2923 = vmatpush1.msra.mxu0 0.0
      %2924 = vmatprep.subr.mxu0 0.0
      %2925 = vmatpush1.msra.mxu0 0.0
      %2926 = vmatprep.subr.mxu0 0.0
      %2927 = vmatpush1.msra.mxu0 0.0
      %2928 = vmatprep.subr.mxu0 0.0
      %2929 = vmatpush1.msra.mxu0 0.0
      %2930 = vmatprep.subr.mxu0 0.0
      %2931 = vmatpush1.msra.mxu0 0.0
      %2932 = vmatprep.subr.mxu0 0.0
      %2933 = vmatpush1.msra.mxu0 0.0
      %2934 = vmatprep.subr.mxu0 0.0
      %2935 = vmatpush1.msra.mxu0 0.0
      %2936 = vmatprep.subr.mxu0 0.0
      %2937 = vmatpush1.msra.mxu0 0.0
      %2938 = vmatprep.subr.mxu0 0.0
      %2939 = vmatpush1.msra.mxu0 0.0
      %2940 = vmatprep.subr.mxu0 0.0
      %2941 = vmatpush1.msra.mxu0 0.0
      %2942 = vmatprep.subr.mxu0 0.0
      %2943 = vmatpush1.msra.mxu0 0.0
      %2944 = vmatprep.subr.mxu0 0.0
      %2945 = vmatpush1.msra.mxu0 0.0
      %2946 = vmatprep.subr.mxu0 0.0
      %2947 = vmatpush1.msra.mxu0 0.0
      %2948 = vmatprep.subr.mxu0 0.0
      %2949 = vmatpush1.msra.mxu0 0.0
      %2950 = vmatprep.subr.mxu0 0.0
      %2951 = vmatpush1.msra.mxu0 0.0
      %2952 = vmatprep.subr.mxu0 0.0
      %2953 = vmatpush1.msra.mxu0 0.0
      %2954 = vmatprep.subr.mxu0 0.0
      %2955 = vmatpush1.msra.mxu0 0.0
      %2956 = vmatprep.subr.mxu0 0.0
      %2957 = vmatpush1.msra.mxu0 0.0
      %2958 = vmatprep.subr.mxu0 0.0
      %2959 = vmatpush1.msra.mxu0 0.0
      %2960 = vmatprep.subr.mxu0 0.0
      %2961 = vmatpush1.msra.mxu0 0.0
      %2962 = vmatprep.subr.mxu0 0.0
      %2963 = vmatpush1.msra.mxu0 0.0
      %2964 = vmatprep.subr.mxu0 0.0
      %2965 = vmatpush1.msra.mxu0 0.0
      %2966 = vmatprep.subr.mxu0 0.0
      %2967 = vmatpush1.msra.mxu0 0.0
      %2968 = vmatprep.subr.mxu0 0.0
      %2969 = vmatpush1.msra.mxu0 0.0
      %2970 = vmatprep.subr.mxu0 0.0
      %2971 = vmatpush1.msra.mxu0 0.0
      %2972 = vmatprep.subr.mxu0 0.0
      %2973 = vmatpush1.msra.mxu0 0.0
      %2974 = vmatprep.subr.mxu0 0.0
      %2975 = vmatpush1.msra.mxu0 0.0
      %2976 = vmatprep.subr.mxu0 0.0
      %2977 = vmatpush1.msra.mxu0 0.0
      %2978 = vmatprep.subr.mxu0 0.0
      %2979 = vmatpush1.msra.mxu0 0.0
      %2980 = vmatprep.mubr.f32.mxu0 0.0
      %2981 = vmatmul.mubr.f32.gmra.mrb[0].mxu0 %v2910
      %v2982 = vpop.f32.mrb[0].mxu0
      %v2983 = vadd.f32 0.0, %v2982
      %v2984 = vpop.f32.mrb[0].mxu0
      %v2985 = vadd.f32 0.0, %v2984
      %2986 = vdwg.mxu0
      %s2987 = scalar_lea.vmem %s4, 40
      %v2988 = vld [vmem:[%s2987] sm:$0x3]
      %v2990 = vlaneseq
      %v2991 = vshrl.u32 %v2990, 7
      %v2992 = vsub.s32 0, %v2991
      %v2993 = vrot.slane %v2988, %v2992
      %v2994 = vlaneseq
      %v2995 = vshrl.u32 %v2994, 7
      %v2996 = vsub.s32 1, %v2995
      %v2997 = vrot.slane %v2988, %v2996
      %v3000 = vmul.f32 %v2983, %v2993
      %v3001 = vmul.f32 %v2985, %v2997
      %v3002 = vadd.f32 %v2891, %v3000
      %v3003 = vadd.f32 %v2892, %v3001
      %v3004 = vld [vmem:[#allocation3 + $0x4] sm:$0xff]
      %v3005 = vld [vmem:[#allocation3 + $0xc] sm:$0xf]
      %s3006 = scalar_lea.vmem %s279, 192
      %v3007 = vld [vmem:[%s3006] sm:$0xff]
      %v3010 = vcombine.high %v3004, %v3004
      %3011 = vrot.lane.b32.xlu0 %v3004, 83
      %v3012 = vpop.permute.xlu0 %3011
      %3013 = vrot.lane.b32.xlu0 %v3010, 83
      %v3014 = vpop.permute.xlu0 %3013
      %3015 = vrot.lane.b32.xlu0 %v3005, 83
      %v3016 = vpop.permute.xlu0 %3015
      %vm3017 = vcmask 678912
      %v3018 = vsel %vm3017, %v3012, %v3014
      %v3019 = vsel %vm3017, %v3014, %v3016
      %v3021 = vsel %vm330, %v3007, 0
      %v3023 = vsel %vm334, %v3018, 0
      %v3025 = vsel %vm334, %v3019, 0
      %3027 = vmatprep.subr.mxu0 %v3025
      %3028 = vmatpush1.msra.mxu0 %v3023
      %3029 = vmatprep.subr.mxu0 0.0
      %3030 = vmatpush1.msra.mxu0 0.0
      %3031 = vmatprep.subr.mxu0 0.0
      %3032 = vmatpush1.msra.mxu0 0.0
      %3033 = vmatprep.subr.mxu0 0.0
      %3034 = vmatpush1.msra.mxu0 0.0
      %3035 = vmatprep.subr.mxu0 0.0
      %3036 = vmatpush1.msra.mxu0 0.0
      %3037 = vmatprep.subr.mxu0 0.0
      %3038 = vmatpush1.msra.mxu0 0.0
      %3039 = vmatprep.subr.mxu0 0.0
      %3040 = vmatpush1.msra.mxu0 0.0
      %3041 = vmatprep.subr.mxu0 0.0
      %3042 = vmatpush1.msra.mxu0 0.0
      %3043 = vmatprep.subr.mxu0 0.0
      %3044 = vmatpush1.msra.mxu0 0.0
      %3045 = vmatprep.subr.mxu0 0.0
      %3046 = vmatpush1.msra.mxu0 0.0
      %3047 = vmatprep.subr.mxu0 0.0
      %3048 = vmatpush1.msra.mxu0 0.0
      %3049 = vmatprep.subr.mxu0 0.0
      %3050 = vmatpush1.msra.mxu0 0.0
      %3051 = vmatprep.subr.mxu0 0.0
      %3052 = vmatpush1.msra.mxu0 0.0
      %3053 = vmatprep.subr.mxu0 0.0
      %3054 = vmatpush1.msra.mxu0 0.0
      %3055 = vmatprep.subr.mxu0 0.0
      %3056 = vmatpush1.msra.mxu0 0.0
      %3057 = vmatprep.subr.mxu0 0.0
      %3058 = vmatpush1.msra.mxu0 0.0
      %3059 = vmatprep.subr.mxu0 0.0
      %3060 = vmatpush1.msra.mxu0 0.0
      %3061 = vmatprep.subr.mxu0 0.0
      %3062 = vmatpush1.msra.mxu0 0.0
      %3063 = vmatprep.subr.mxu0 0.0
      %3064 = vmatpush1.msra.mxu0 0.0
      %3065 = vmatprep.subr.mxu0 0.0
      %3066 = vmatpush1.msra.mxu0 0.0
      %3067 = vmatprep.subr.mxu0 0.0
      %3068 = vmatpush1.msra.mxu0 0.0
      %3069 = vmatprep.subr.mxu0 0.0
      %3070 = vmatpush1.msra.mxu0 0.0
      %3071 = vmatprep.subr.mxu0 0.0
      %3072 = vmatpush1.msra.mxu0 0.0
      %3073 = vmatprep.subr.mxu0 0.0
      %3074 = vmatpush1.msra.mxu0 0.0
      %3075 = vmatprep.subr.mxu0 0.0
      %3076 = vmatpush1.msra.mxu0 0.0
      %3077 = vmatprep.subr.mxu0 0.0
      %3078 = vmatpush1.msra.mxu0 0.0
      %3079 = vmatprep.subr.mxu0 0.0
      %3080 = vmatpush1.msra.mxu0 0.0
      %3081 = vmatprep.subr.mxu0 0.0
      %3082 = vmatpush1.msra.mxu0 0.0
      %3083 = vmatprep.subr.mxu0 0.0
      %3084 = vmatpush1.msra.mxu0 0.0
      %3085 = vmatprep.subr.mxu0 0.0
      %3086 = vmatpush1.msra.mxu0 0.0
      %3087 = vmatprep.subr.mxu0 0.0
      %3088 = vmatpush1.msra.mxu0 0.0
      %3089 = vmatprep.subr.mxu0 0.0
      %3090 = vmatpush1.msra.mxu0 0.0
      %3091 = vmatprep.mubr.f32.mxu0 0.0
      %3092 = vmatmul.mubr.f32.gmra.mrb[0].mxu0 %v3021
      %v3093 = vpop.f32.mrb[0].mxu0
      %v3094 = vadd.f32 0.0, %v3093
      %v3095 = vpop.f32.mrb[0].mxu0
      %v3096 = vadd.f32 0.0, %v3095
      %3097 = vdwg.mxu0
      %s3098 = scalar_lea.vmem %s4, 42
      %v3099 = vld [vmem:[%s3098] sm:$0x3]
      %v3101 = vlaneseq
      %v3102 = vshrl.u32 %v3101, 7
      %v3103 = vsub.s32 0, %v3102
      %v3104 = vrot.slane %v3099, %v3103
      %v3105 = vlaneseq
      %v3106 = vshrl.u32 %v3105, 7
      %v3107 = vsub.s32 1, %v3106
      %v3108 = vrot.slane %v3099, %v3107
      %v3111 = vmul.f32 %v3094, %v3104
      %v3112 = vmul.f32 %v3096, %v3108
      %v3113 = vadd.f32 %v3002, %v3111
      %v3114 = vadd.f32 %v3003, %v3112
      %v3115 = vld [vmem:[#allocation3 + $0x4] sm:$0xff]
      %v3116 = vld [vmem:[#allocation3 + $0xc] sm:$0xf]
      %s3117 = scalar_lea.vmem %s279, 200
      %v3118 = vld [vmem:[%s3117] sm:$0xff]
      %v3121 = vcombine.high %v3115, %v3115
      %3122 = vrot.lane.b32.xlu0 %v3115, 80
      %v3123 = vpop.permute.xlu0 %3122
      %3124 = vrot.lane.b32.xlu0 %v3121, 80
      %v3125 = vpop.permute.xlu0 %3124
      %3126 = vrot.lane.b32.xlu0 %v3116, 80
      %v3127 = vpop.permute.xlu0 %3126
      %vm3128 = vcmask 654336
      %v3129 = vsel %vm3128, %v3123, %v3125
      %v3130 = vsel %vm3128, %v3125, %v3127
      %v3132 = vsel %vm330, %v3118, 0
      %v3134 = vsel %vm334, %v3129, 0
      %v3136 = vsel %vm334, %v3130, 0
      %3138 = vmatprep.subr.mxu0 %v3136
      %3139 = vmatpush1.msra.mxu0 %v3134
      %3140 = vmatprep.subr.mxu0 0.0
      %3141 = vmatpush1.msra.mxu0 0.0
      %3142 = vmatprep.subr.mxu0 0.0
      %3143 = vmatpush1.msra.mxu0 0.0
      %3144 = vmatprep.subr.mxu0 0.0
      %3145 = vmatpush1.msra.mxu0 0.0
      %3146 = vmatprep.subr.mxu0 0.0
      %3147 = vmatpush1.msra.mxu0 0.0
      %3148 = vmatprep.subr.mxu0 0.0
      %3149 = vmatpush1.msra.mxu0 0.0
      %3150 = vmatprep.subr.mxu0 0.0
      %3151 = vmatpush1.msra.mxu0 0.0
      %3152 = vmatprep.subr.mxu0 0.0
      %3153 = vmatpush1.msra.mxu0 0.0
      %3154 = vmatprep.subr.mxu0 0.0
      %3155 = vmatpush1.msra.mxu0 0.0
      %3156 = vmatprep.subr.mxu0 0.0
      %3157 = vmatpush1.msra.mxu0 0.0
      %3158 = vmatprep.subr.mxu0 0.0
      %3159 = vmatpush1.msra.mxu0 0.0
      %3160 = vmatprep.subr.mxu0 0.0
      %3161 = vmatpush1.msra.mxu0 0.0
      %3162 = vmatprep.subr.mxu0 0.0
      %3163 = vmatpush1.msra.mxu0 0.0
      %3164 = vmatprep.subr.mxu0 0.0
      %3165 = vmatpush1.msra.mxu0 0.0
      %3166 = vmatprep.subr.mxu0 0.0
      %3167 = vmatpush1.msra.mxu0 0.0
      %3168 = vmatprep.subr.mxu0 0.0
      %3169 = vmatpush1.msra.mxu0 0.0
      %3170 = vmatprep.subr.mxu0 0.0
      %3171 = vmatpush1.msra.mxu0 0.0
      %3172 = vmatprep.subr.mxu0 0.0
      %3173 = vmatpush1.msra.mxu0 0.0
      %3174 = vmatprep.subr.mxu0 0.0
      %3175 = vmatpush1.msra.mxu0 0.0
      %3176 = vmatprep.subr.mxu0 0.0
      %3177 = vmatpush1.msra.mxu0 0.0
      %3178 = vmatprep.subr.mxu0 0.0
      %3179 = vmatpush1.msra.mxu0 0.0
      %3180 = vmatprep.subr.mxu0 0.0
      %3181 = vmatpush1.msra.mxu0 0.0
      %3182 = vmatprep.subr.mxu0 0.0
      %3183 = vmatpush1.msra.mxu0 0.0
      %3184 = vmatprep.subr.mxu0 0.0
      %3185 = vmatpush1.msra.mxu0 0.0
      %3186 = vmatprep.subr.mxu0 0.0
      %3187 = vmatpush1.msra.mxu0 0.0
      %3188 = vmatprep.subr.mxu0 0.0
      %3189 = vmatpush1.msra.mxu0 0.0
      %3190 = vmatprep.subr.mxu0 0.0
      %3191 = vmatpush1.msra.mxu0 0.0
      %3192 = vmatprep.subr.mxu0 0.0
      %3193 = vmatpush1.msra.mxu0 0.0
      %3194 = vmatprep.subr.mxu0 0.0
      %3195 = vmatpush1.msra.mxu0 0.0
      %3196 = vmatprep.subr.mxu0 0.0
      %3197 = vmatpush1.msra.mxu0 0.0
      %3198 = vmatprep.subr.mxu0 0.0
      %3199 = vmatpush1.msra.mxu0 0.0
      %3200 = vmatprep.subr.mxu0 0.0
      %3201 = vmatpush1.msra.mxu0 0.0
      %3202 = vmatprep.mubr.f32.mxu0 0.0
      %3203 = vmatmul.mubr.f32.gmra.mrb[0].mxu0 %v3132
      %v3204 = vpop.f32.mrb[0].mxu0
      %v3205 = vadd.f32 0.0, %v3204
      %v3206 = vpop.f32.mrb[0].mxu0
      %v3207 = vadd.f32 0.0, %v3206
      %3208 = vdwg.mxu0
      %s3209 = scalar_lea.vmem %s4, 44
      %v3210 = vld [vmem:[%s3209] sm:$0x3]
      %v3212 = vlaneseq
      %v3213 = vshrl.u32 %v3212, 7
      %v3214 = vsub.s32 0, %v3213
      %v3215 = vrot.slane %v3210, %v3214
      %v3216 = vlaneseq
      %v3217 = vshrl.u32 %v3216, 7
      %v3218 = vsub.s32 1, %v3217
      %v3219 = vrot.slane %v3210, %v3218
      %v3222 = vmul.f32 %v3205, %v3215
      %v3223 = vmul.f32 %v3207, %v3219
      %v3224 = vadd.f32 %v3113, %v3222
      %v3225 = vadd.f32 %v3114, %v3223
      %v3226 = vld [vmem:[#allocation3 + $0x4] sm:$0xff]
      %v3227 = vld [vmem:[#allocation3 + $0xc] sm:$0xf]
      %s3228 = scalar_lea.vmem %s279, 208
      %v3229 = vld [vmem:[%s3228] sm:$0xff]
      %v3232 = vcombine.high %v3226, %v3226
      %3233 = vrot.lane.b32.xlu0 %v3226, 77
      %v3234 = vpop.permute.xlu0 %3233
      %3235 = vrot.lane.b32.xlu0 %v3232, 77
      %v3236 = vpop.permute.xlu0 %3235
      %3237 = vrot.lane.b32.xlu0 %v3227, 77
      %v3238 = vpop.permute.xlu0 %3237
      %vm3239 = vcmask 629760
      %v3240 = vsel %vm3239, %v3234, %v3236
      %v3241 = vsel %vm3239, %v3236, %v3238
      %v3243 = vsel %vm330, %v3229, 0
      %v3245 = vsel %vm334, %v3240, 0
      %v3247 = vsel %vm334, %v3241, 0
      %3249 = vmatprep.subr.mxu0 %v3247
      %3250 = vmatpush1.msra.mxu0 %v3245
      %3251 = vmatprep.subr.mxu0 0.0
      %3252 = vmatpush1.msra.mxu0 0.0
      %3253 = vmatprep.subr.mxu0 0.0
      %3254 = vmatpush1.msra.mxu0 0.0
      %3255 = vmatprep.subr.mxu0 0.0
      %3256 = vmatpush1.msra.mxu0 0.0
      %3257 = vmatprep.subr.mxu0 0.0
      %3258 = vmatpush1.msra.mxu0 0.0
      %3259 = vmatprep.subr.mxu0 0.0
      %3260 = vmatpush1.msra.mxu0 0.0
      %3261 = vmatprep.subr.mxu0 0.0
      %3262 = vmatpush1.msra.mxu0 0.0
      %3263 = vmatprep.subr.mxu0 0.0
      %3264 = vmatpush1.msra.mxu0 0.0
      %3265 = vmatprep.subr.mxu0 0.0
      %3266 = vmatpush1.msra.mxu0 0.0
      %3267 = vmatprep.subr.mxu0 0.0
      %3268 = vmatpush1.msra.mxu0 0.0
      %3269 = vmatprep.subr.mxu0 0.0
      %3270 = vmatpush1.msra.mxu0 0.0
      %3271 = vmatprep.subr.mxu0 0.0
      %3272 = vmatpush1.msra.mxu0 0.0
      %3273 = vmatprep.subr.mxu0 0.0
      %3274 = vmatpush1.msra.mxu0 0.0
      %3275 = vmatprep.subr.mxu0 0.0
      %3276 = vmatpush1.msra.mxu0 0.0
      %3277 = vmatprep.subr.mxu0 0.0
      %3278 = vmatpush1.msra.mxu0 0.0
      %3279 = vmatprep.subr.mxu0 0.0
      %3280 = vmatpush1.msra.mxu0 0.0
      %3281 = vmatprep.subr.mxu0 0.0
      %3282 = vmatpush1.msra.mxu0 0.0
      %3283 = vmatprep.subr.mxu0 0.0
      %3284 = vmatpush1.msra.mxu0 0.0
      %3285 = vmatprep.subr.mxu0 0.0
      %3286 = vmatpush1.msra.mxu0 0.0
      %3287 = vmatprep.subr.mxu0 0.0
      %3288 = vmatpush1.msra.mxu0 0.0
      %3289 = vmatprep.subr.mxu0 0.0
      %3290 = vmatpush1.msra.mxu0 0.0
      %3291 = vmatprep.subr.mxu0 0.0
      %3292 = vmatpush1.msra.mxu0 0.0
      %3293 = vmatprep.subr.mxu0 0.0
      %3294 = vmatpush1.msra.mxu0 0.0
      %3295 = vmatprep.subr.mxu0 0.0
      %3296 = vmatpush1.msra.mxu0 0.0
      %3297 = vmatprep.subr.mxu0 0.0
      %3298 = vmatpush1.msra.mxu0 0.0
      %3299 = vmatprep.subr.mxu0 0.0
      %3300 = vmatpush1.msra.mxu0 0.0
      %3301 = vmatprep.subr.mxu0 0.0
      %3302 = vmatpush1.msra.mxu0 0.0
      %3303 = vmatprep.subr.mxu0 0.0
      %3304 = vmatpush1.msra.mxu0 0.0
      %3305 = vmatprep.subr.mxu0 0.0
      %3306 = vmatpush1.msra.mxu0 0.0
      %3307 = vmatprep.subr.mxu0 0.0
      %3308 = vmatpush1.msra.mxu0 0.0
      %3309 = vmatprep.subr.mxu0 0.0
      %3310 = vmatpush1.msra.mxu0 0.0
      %3311 = vmatprep.subr.mxu0 0.0
      %3312 = vmatpush1.msra.mxu0 0.0
      %3313 = vmatprep.mubr.f32.mxu0 0.0
      %3314 = vmatmul.mubr.f32.gmra.mrb[0].mxu0 %v3243
      %v3315 = vpop.f32.mrb[0].mxu0
      %v3316 = vadd.f32 0.0, %v3315
      %v3317 = vpop.f32.mrb[0].mxu0
      %v3318 = vadd.f32 0.0, %v3317
      %3319 = vdwg.mxu0
      %s3320 = scalar_lea.vmem %s4, 46
      %v3321 = vld [vmem:[%s3320] sm:$0x3]
      %v3323 = vlaneseq
      %v3324 = vshrl.u32 %v3323, 7
      %v3325 = vsub.s32 0, %v3324
      %v3326 = vrot.slane %v3321, %v3325
      %v3327 = vlaneseq
      %v3328 = vshrl.u32 %v3327, 7
      %v3329 = vsub.s32 1, %v3328
      %v3330 = vrot.slane %v3321, %v3329
      %v3333 = vmul.f32 %v3316, %v3326
      %v3334 = vmul.f32 %v3318, %v3330
      %v3335 = vadd.f32 %v3224, %v3333
      %v3336 = vadd.f32 %v3225, %v3334
      %v3337 = vld [vmem:[#allocation2 + $0x30] sm:$0xff]
      %v3338 = vld [vmem:[#allocation2 + $0x38] sm:$0xff]
      %v3339 = vadd.f32 %v3337, %v3335
      %v3340 = vadd.f32 %v3338, %v3336
      %3341 = vst [vmem:[#allocation2 + $0x30] sm:$0xff] %v3339
      %3342 = vst [vmem:[#allocation2 + $0x38] sm:$0xff] %v3340
      // Predicated region
      $region57: #{aspp_forward.1} parent=39 // pred_check
        %p3343 = pneg %p285
      $region58: #{aspp_forward.1} parent=39 // pred_check_branch
        %3345 = sbr.rel (%p3343) target = $region60
      $region59: #{aspp_forward.1} parent=39 // pred_region
        %v3346 = vld [vmem:[#allocation2 + $0x30] sm:$0xff]
        %v3347 = vld [vmem:[#allocation2 + $0x38] sm:$0xff]
        %v3348 = vmax.f32 %v3346, 0.0
        %v3349 = vmax.f32 %v3347, 0.0
        %3350 = vst [vmem:[%s284 + $0x30] sm:$0xff] %v3348
        %3351 = vst [vmem:[%s284 + $0x38] sm:$0xff] %v3349
      $region60: #{aspp_forward.1} parent=39 // pred_fallthru
        _
      %p3352 = scmp.lt.s32.totalorder %s20, 1
      %s3353 = scalar_select %p3352, %s20, 1
      %s3354 = smul.addr %s3353, 8
      %s3355 = smul.addr %s3354, 8
      %s3356 = scalar_lea.vmem %s5, %s3355
      // Predicated region
      $region61: #{aspp_forward.1} parent=39 // pred_check
        %p3357 = pneg %p168
      $region62: #{aspp_forward.1} parent=39 // pred_check_branch
        %3359 = sbr.rel (%p3357) target = $region64
      $region63: #{aspp_forward.1} parent=39 // pred_region
        _
      $region64: #{aspp_forward.1} parent=39 // pred_fallthru
        _
    $region40: #{aspp_forward.1} parent=5 // pred_fallthru
      _
    %p3360 = scmp.le.s32.totalorder 2, %s11
    // Predicated region
    $region65: #{aspp_forward.1} parent=5 // pred_check
      %p3361 = pneg %p3360
    $region66: #{aspp_forward.1} parent=5 // pred_check_branch
      %3363 = sbr.rel (%p3361) target = $region68
    $region67: #{aspp_forward.1} parent=5 // pred_region
      %s3364 = ssub.s32 %s11, 2
      // Predicated region
      $region69: #{aspp_forward.1} parent=67 // pred_check
        %p3365 = pneg %p174
      $region70: #{aspp_forward.1} parent=67 // pred_check_branch
        %3367 = sbr.rel (%p3365) target = $region72
      $region71: #{aspp_forward.1} parent=67 // pred_region
        %p3368 = scmp.lt.s32.totalorder %s22, 1
        %s3369 = scalar_select %p3368, %s22, 1
        %s3370 = smul.addr %s3369, 8
        %s3371 = smul.addr %s3370, 8
        %s3372 = scalar_lea.vmem %s5, %s3371
      $region72: #{aspp_forward.1} parent=67 // pred_fallthru
        _
    $region68: #{aspp_forward.1} parent=5 // pred_fallthru
      _
  $region6: #{aspp_forward.1} parent=0 // loop_footer
    %s15 = sadd.s32 1, %s11
  $region7: #{aspp_forward.1} parent=0 // loop_footer_branch
    %10 = sbr.rel target = $region3
  $region8: #{aspp_forward.1} parent=0 // loop_exit
    _

</llo_original>
